<compile_context>
chip_gen: v6e
topology: v6e:2x2x1
jax: 0.10.0
libtpu: 0.0.40
codegen_flags: <defaults>
</compile_context>

<pallas_src>
import functools

import jax
import jax.numpy as jnp
from jax.experimental import pallas as pl
from jax.experimental.pallas import tpu as pltpu


# ----------------------------- Pallas kernel -------------------------------- #
def _make_stgcn_kernel(f):
    """Fused forward kernel for feature width `f` (the module pads N == f)."""
    F = f

    def kernel(a_ref, x_ref, w_ref, b_ref, out_ref):
        GB, N, _ = a_ref.shape          # graphs per grid step, nodes per graph

        # --- GCNConv(improved=True) symmetric normalization, fused in-kernel ---
        # add_remaining_self_loops(fill_value=2): nodes without a self-loop get
        # weight 2, pre-existing self-loops keep their weight.  The edge set is
        # undirected/symmetric (GCNConv's intended use), so row/col degrees match.
        a = a_ref[...]                                               # (GB, N, N)
        row = jax.lax.broadcasted_iota(jnp.int32, (GB, N, N), 1)
        col = jax.lax.broadcasted_iota(jnp.int32, (GB, N, N), 2)
        a_hat = jnp.where(row == col, jnp.where(a > 0.0, a, 2.0), a)
        deg_r = jnp.sum(a_hat, axis=-1, keepdims=True)               # (GB, N, 1)
        deg_c = jnp.sum(a_hat, axis=-2, keepdims=True)               # (GB, 1, N)
        dr = jnp.where(deg_r > 0.0, jax.lax.rsqrt(deg_r), 0.0)
        dc = jnp.where(deg_c > 0.0, jax.lax.rsqrt(deg_c), 0.0)
        a_norm = dr * a_hat * dc                                     # (GB, N, N)

        def weight(blk, cols=F):        # (F, cols) RHS view, lane offset 0 (free)
            return w_ref[blk][0:F, 0:cols]

        def bias(r, cols=F):            # (1, cols) row, lane offset 0 (free)
            return b_ref[r:r + 1, 0:cols]

        x = x_ref[...].reshape(GB * N, F)        # GB*N sublanes per dense matmul

        # --- gcn1 / gcn2 + ReLU -------------------------------------------------
        for l in range(2):
            xw = jnp.dot(x, weight(l), preferred_element_type=jnp.float32)
            y = jnp.einsum("bij,bjf->bif", a_norm, xw.reshape(GB, N, F),
                           preferred_element_type=jnp.float32)
            x = jnp.maximum(y + bias(l), 0.0).reshape(GB * N, F)

        # --- three stacked GCLSTM cells (single step, H = C = None -> zeros) ---
        # Exact simplification for H = C = 0 and K = 1 (module default):
        # ChebConv(H) contributes only its bias (pre-summed into the packed
        # bias), the i/f peepholes (w_c_{i,f} * C) vanish, and the forget gate
        # is unused since f * C == 0.  Gate order per layer: i, c, o.
        # TODO(synk): restore the Theta/H-path matmuls, forget gate and i/f
        # peepholes if this kernel is ever reused with carried H/C state.
        for l in range(3):
            blk = 2 + 3 * l
            g_i = jnp.dot(x, weight(blk + 0),
                          preferred_element_type=jnp.float32) + bias(blk + 0)
            g_c = jnp.dot(x, weight(blk + 1),
                          preferred_element_type=jnp.float32) + bias(blk + 1)
            g_o = jnp.dot(x, weight(blk + 2),
                          preferred_element_type=jnp.float32) + bias(blk + 2)
            i_g = jax.nn.sigmoid(g_i)
            c = i_g * jnp.tanh(g_c)
            o_g = jax.nn.sigmoid(g_o + bias(11 + l) * c)   # w_c_o peephole (new C)
            x = o_g * jnp.tanh(c)

        # --- final ReLU, linear (F -> 3), per-node log-softmax over 3 classes ---
        x = jnp.maximum(x, 0.0)
        logits = jnp.dot(x, weight(11, cols=3),
                         preferred_element_type=jnp.float32) + bias(14, cols=3)
        m = jnp.max(logits, axis=-1, keepdims=True)
        lse = m + jnp.log(jnp.sum(jnp.exp(logits - m), axis=-1, keepdims=True))
        out_ref[...] = (logits - lse).reshape(GB, N, 3)

    return kernel


# ----------------------------- param packing -------------------------------- #
def pack_params(params, f):
    """Pack all parameters into two lane-aligned slabs.

    w_slab (12, 8, 128): one 128-lane tile per weight matrix, data at lane 0.
      blocks 0-1  : gcn1 / gcn2 weights (F, F)
      blocks 2-10 : per GCLSTM layer l, blocks 2+3l+{0,1,2} = W_i, W_c, W_o
      block 11    : linear weight (F, 3)
    b_slab (16, 128): one sublane row per bias / peephole vector, data at lane 0.
      rows 0-1  : gcn biases
      rows 2-10 : per layer l, rows 2+3l+{0,1,2} = (bx + btheta) for gates i, c, o
      rows 11-13: w_c_o peephole per layer
      row 14    : linear bias (3,)
    """
    F = f
    gcn_w, gcn_b = params["gcn_w"], params["gcn_b"]
    wx, bx, bth = params["lstm_wx"], params["lstm_bx"], params["lstm_btheta"]
    peep, lin_w = params["lstm_peep"], params["lin_w"]
    lin_b = params["lin_b"].reshape(-1)

    blocks = [gcn_w[0], gcn_w[1]]
    for l in range(3):                       # live gates only: i, c, o
        blocks += [wx[l, 0], wx[l, 2], wx[l, 3]]
    blocks.append(lin_w)

    sub = max(8, -(-F // 8) * 8)
    w_slab = jnp.zeros((len(blocks), sub, 128), jnp.float32)
    for i, blk in enumerate(blocks):
        w_slab = w_slab.at[i, :blk.shape[0], :blk.shape[1]].set(blk)

    b_slab = jnp.zeros((16, 128), jnp.float32)
    b_slab = b_slab.at[0, :F].set(gcn_b[0])
    b_slab = b_slab.at[1, :F].set(gcn_b[1])
    for l in range(3):
        b_slab = b_slab.at[2 + 3 * l + 0, :F].set(bx[l, 0] + bth[l, 0])   # i
        b_slab = b_slab.at[2 + 3 * l + 1, :F].set(bx[l, 2] + bth[l, 2])   # c
        b_slab = b_slab.at[2 + 3 * l + 2, :F].set(bx[l, 3] + bth[l, 3])   # o
        b_slab = b_slab.at[11 + l, :F].set(peep[l, 2])                    # w_c_o
    b_slab = b_slab.at[14, :3].set(lin_b)
    return w_slab, b_slab


# ------------------------------ wrapper / glue ------------------------------- #
def social_stgcn_forward(x, edge_index, w_slab, b_slab, no_pedestrians,
                         graphs_per_block=16):
    """x: (B, N, F) float32 node features (the module pads each graph to N == F);
    edge_index: (B, 2, E) int32 (padded slots use an out-of-range index >= N and
    are dropped).  Returns (B, no_pedestrians, 3, 1) per-node log-probabilities,
    matching the PyTorch forward applied to each graph independently."""
    bsz, n, f = x.shape
    gb = min(graphs_per_block, bsz)
    assert bsz % gb == 0, "batch must be divisible by graphs_per_block"

    # edge_index -> dense binary adjacency (the only XLA glue left; the
    # normalization lives inside the kernel).  mode="drop" discards padded /
    # out-of-range indices so no spurious edges are injected.
    bidx = jnp.arange(bsz)[:, None]
    a = jnp.zeros((bsz, n, n), jnp.float32).at[
        bidx, edge_index[:, 0, :], edge_index[:, 1, :]].set(1.0, mode="drop")

    n_dense = 11                                   # 2 gcn XW + 9 lstm gate matmuls
    cost = pl.CostEstimate(
        flops=int(bsz * (n_dense * 2 * n * f * f + 2 * (2 * n * n * f)
                         + 2 * n * f * 3)),
        transcendentals=int(bsz * (12 * n * f + 7 * n)),
        bytes_accessed=int(4 * (a.size + x.size + bsz * n * 3
                                + w_slab.size + b_slab.size)),
    )

    out = pl.pallas_call(
        _make_stgcn_kernel(f),
        out_shape=jax.ShapeDtypeStruct((bsz, n, 3), jnp.float32),
        grid=(bsz // gb,),
        in_specs=[
            pl.BlockSpec((gb, n, n), lambda i: (i, 0, 0)),       # adjacency
            pl.BlockSpec((gb, n, f), lambda i: (i, 0, 0)),       # node features
            pl.BlockSpec(w_slab.shape, lambda i: (0, 0, 0)),     # weight slab
            pl.BlockSpec(b_slab.shape, lambda i: (0, 0)),        # bias slab
        ],
        out_specs=pl.BlockSpec((gb, n, 3), lambda i: (i, 0, 0)),
        compiler_params=pltpu.CompilerParams(dimension_semantics=("parallel",)),
        cost_estimate=cost,
    )(a, x, w_slab, b_slab)

    # The PyTorch loop fills only the first no_pedestrians rows of each graph.
    return out[:, :no_pedestrians, :].reshape(bsz, no_pedestrians, 3, 1)


def init_params(key, input_feat=8, linear_output=3):
    # Note: the original module constructs nn.Linear(in_features=linear_input=0),
    # which cannot consume the F-wide features it is given; we implement the
    # intended (F -> 3) classifier.
    f = input_feat
    ks = jax.random.split(key, 11)
    scale = 0.1
    return {
        "gcn_w":       scale * jax.random.normal(ks[0], (2, f, f), jnp.float32),
        "gcn_b":       scale * jax.random.normal(ks[1], (2, f), jnp.float32),
        "lstm_wx":     scale * jax.random.normal(ks[2], (3, 4, f, f), jnp.float32),
        "lstm_bx":     scale * jax.random.normal(ks[3], (3, 4, f), jnp.float32),
        "lstm_theta":  scale * jax.random.normal(ks[4], (3, 4, f, f), jnp.float32),
        "lstm_btheta": scale * jax.random.normal(ks[5], (3, 4, f), jnp.float32),
        "lstm_peep":   scale * jax.random.normal(ks[6], (3, 3, f), jnp.float32),
        "lin_w":       scale * jax.random.normal(ks[7], (f, linear_output), jnp.float32),
        "lin_b":       scale * jax.random.normal(ks[8], (1, linear_output), jnp.float32),
    }


def _reference_forward(x, adj, params, no_pedestrians):
    """Pure-JAX reference of the same math (per-graph, vmapped over batch)."""
    f = x.shape[-1]

    def one(xg, ag):
        eye = jnp.eye(f, dtype=bool)
        a_hat = jnp.where(eye, jnp.where(ag > 0, ag, 2.0), ag)
        d = jnp.sum(a_hat, axis=1)
        dinv = jnp.where(d > 0, 1.0 / jnp.sqrt(d), 0.0)
        a_norm = dinv[:, None] * a_hat * dinv[None, :]
        h = xg
        for l in range(2):
            h = jnp.maximum(a_norm @ (h @ params["gcn_w"][l]) + params["gcn_b"][l], 0.0)
        for l in range(3):
            gi = h @ params["lstm_wx"][l, 0] + params["lstm_bx"][l, 0] + params["lstm_btheta"][l, 0]
            gc = h @ params["lstm_wx"][l, 2] + params["lstm_bx"][l, 2] + params["lstm_btheta"][l, 2]
            go = h @ params["lstm_wx"][l, 3] + params["lstm_bx"][l, 3] + params["lstm_btheta"][l, 3]
            i = jax.nn.sigmoid(gi)
            c = i * jnp.tanh(gc)
            o = jax.nn.sigmoid(go + params["lstm_peep"][l, 2] * c)
            h = o * jnp.tanh(c)
        h = jnp.maximum(h, 0.0)
        logits = h @ params["lin_w"] + params["lin_b"].reshape(-1)
        return jax.nn.log_softmax(logits, axis=-1)

    out = jax.vmap(one)(x, adj)
    return out[:, :no_pedestrians, :].reshape(x.shape[0], no_pedestrians, 3, 1)


if __name__ == "__main__":
    INPUT_FEAT = 8          # == nodes per graph, so the module's zero-pad cats are no-ops
    N = INPUT_FEAT
    B = 64                  # graphs batched into one pallas_call
    GB = 16                 # graphs per grid step -> 128-sublane dense matmuls
    NO_PEDESTRIANS = 5

    key = jax.random.PRNGKey(0)
    k_x, k_e, k_p = jax.random.split(key, 3)

    # Node features and a random symmetric edge set per graph (no self loops).
    x = jax.random.normal(k_x, (B, N, INPUT_FEAT), jnp.float32)
    upper = jnp.triu(jax.random.bernoulli(k_e, 0.4, (B, N, N)), k=1)
    adj = jnp.logical_or(upper, jnp.swapaxes(upper, -1, -2)).astype(jnp.float32)

    # Dense adjacency -> edge_index, padding unused slots with index N (out of
    # range) so the wrapper's scatter drops them.
    ii, jj = jnp.meshgrid(jnp.arange(N), jnp.arange(N), indexing="ij")
    ii, jj = ii.reshape(-1), jj.reshape(-1)

    def to_edge_index(m):
        keep = m.reshape(-1) > 0
        return jnp.stack([jnp.where(keep, ii, N),
                          jnp.where(keep, jj, N)]).astype(jnp.int32)

    edge_index = jax.vmap(to_edge_index)(adj)            # (B, 2, N*N)

    params = init_params(k_p, input_feat=INPUT_FEAT, linear_output=3)
    w_slab, b_slab = pack_params(params, INPUT_FEAT)     # one-time param packing

    fwd = jax.jit(functools.partial(social_stgcn_forward,
                                    no_pedestrians=NO_PEDESTRIANS,
                                    graphs_per_block=GB))
    out = fwd(x, edge_index, w_slab, b_slab)
    jax.block_until_ready(out)

    assert out.shape == (B, NO_PEDESTRIANS, 3, 1)
    # log-softmax sanity: each node's 3 class log-probs exponentiate-sum to 1.
    assert jnp.allclose(jnp.exp(out[..., 0]).sum(axis=-1), 1.0, atol=1e-5)
    # cross-check against a pure-JAX reference of the same forward math.
    ref = _reference_forward(x, adj, params, NO_PEDESTRIANS)
    assert jnp.allclose(out, ref, atol=1e-4, rtol=1e-4)
    print("KERNEL_OK")
</pallas_src>

<mosaic_0001>
module attributes {stable_mosaic.version = 11 : i64} {
  func.func @kernel(%arg0: i32, %arg1: memref<16x8x8xf32, #tpu.memory_space<vmem>>, %arg2: memref<16x8x8xf32, #tpu.memory_space<vmem>>, %arg3: memref<12x8x128xf32, #tpu.memory_space<vmem>>, %arg4: memref<16x128xf32, #tpu.memory_space<vmem>>, %arg5: memref<16x8x3xf32, #tpu.memory_space<vmem>>) attributes {dimension_semantics = [#tpu.dimension_semantics<parallel>], iteration_bounds = array<i64: 4>, scalar_prefetch = 0 : i64, scratch_operands = 0 : i64, tpu.core_type = #tpu.core_type<tc>, window_params = [{transform_indices = @transform_0, window_bounds = array<i64: 16, 8, 8>}, {transform_indices = @transform_1, window_bounds = array<i64: 16, 8, 8>}, {pipeline_mode = #tpu.pipeline_mode<synchronous>, transform_indices = @transform_2, window_bounds = array<i64: 12, 8, 128>}, {pipeline_mode = #tpu.pipeline_mode<synchronous>, transform_indices = @transform_3, window_bounds = array<i64: 16, 128>}, {transform_indices = @transform_4, window_bounds = array<i64: 16, 8, 3>}]} {
    %c0 = arith.constant 0 : index
    %c0_0 = arith.constant 0 : index
    %c0_1 = arith.constant 0 : index
    %0 = vector.load %arg1[%c0, %c0_0, %c0_1] : memref<16x8x8xf32, #tpu.memory_space<vmem>>, vector<16x8x8xf32>
    %1 = tpu.iota {dimensions = array<i32: 1>} : vector<16x8x8xi32>
    %2 = tpu.iota {dimensions = array<i32: 2>} : vector<16x8x8xi32>
    %3 = arith.cmpi eq, %1, %2 : vector<16x8x8xi32>
    %cst = arith.constant 0.000000e+00 : f32
    %4 = vector.broadcast %cst : f32 to vector<16x8x8xf32>
    %5 = arith.cmpf ogt, %0, %4 : vector<16x8x8xf32>
    %cst_2 = arith.constant 2.000000e+00 : f32
    %6 = vector.broadcast %cst_2 : f32 to vector<16x8x8xf32>
    %7 = arith.select %5, %0, %6 : vector<16x8x8xi1>, vector<16x8x8xf32>
    %8 = arith.select %3, %7, %0 : vector<16x8x8xi1>, vector<16x8x8xf32>
    %cst_3 = arith.constant dense<0.000000e+00> : vector<16x8xf32>
    %9 = vector.multi_reduction <add>, %8, %cst_3 [2] : vector<16x8x8xf32> to vector<16x8xf32>
    %10 = vector.shape_cast %9 : vector<16x8xf32> to vector<16x8x1xf32>
    %cst_4 = arith.constant dense<0.000000e+00> : vector<16x8xf32>
    %11 = vector.multi_reduction <add>, %8, %cst_4 [1] : vector<16x8x8xf32> to vector<16x8xf32>
    %12 = vector.shape_cast %11 : vector<16x8xf32> to vector<16x1x8xf32>
    %cst_5 = arith.constant 0.000000e+00 : f32
    %13 = vector.broadcast %cst_5 : f32 to vector<16x8x1xf32>
    %14 = arith.cmpf ogt, %10, %13 : vector<16x8x1xf32>
    %15 = math.rsqrt %10 : vector<16x8x1xf32>
    %cst_6 = arith.constant 0.000000e+00 : f32
    %16 = vector.broadcast %cst_6 : f32 to vector<16x8x1xf32>
    %17 = arith.select %14, %15, %16 : vector<16x8x1xi1>, vector<16x8x1xf32>
    %cst_7 = arith.constant 0.000000e+00 : f32
    %18 = vector.broadcast %cst_7 : f32 to vector<16x1x8xf32>
    %19 = arith.cmpf ogt, %12, %18 : vector<16x1x8xf32>
    %20 = math.rsqrt %12 : vector<16x1x8xf32>
    %cst_8 = arith.constant 0.000000e+00 : f32
    %21 = vector.broadcast %cst_8 : f32 to vector<16x1x8xf32>
    %22 = arith.select %19, %20, %21 : vector<16x1x8xi1>, vector<16x1x8xf32>
    %23 = vector.broadcast %17 : vector<16x8x1xf32> to vector<16x8x8xf32>
    %24 = arith.mulf %23, %8 : vector<16x8x8xf32>
    %25 = vector.broadcast %22 : vector<16x1x8xf32> to vector<16x8x8xf32>
    %26 = arith.mulf %24, %25 : vector<16x8x8xf32>
    %c0_9 = arith.constant 0 : index
    %c0_10 = arith.constant 0 : index
    %c0_11 = arith.constant 0 : index
    %27 = vector.load %arg2[%c0_9, %c0_10, %c0_11] : memref<16x8x8xf32, #tpu.memory_space<vmem>>, vector<16x8x8xf32>
    %28 = vector.shape_cast %27 : vector<16x8x8xf32> to vector<128x8xf32>
    %c0_12 = arith.constant 0 : index
    %c0_13 = arith.constant 0 : index
    %c0_14 = arith.constant 0 : index
    %29 = vector.load %arg3[%c0_12, %c0_13, %c0_14] : memref<12x8x128xf32, #tpu.memory_space<vmem>>, vector<1x8x128xf32>
    %30 = vector.shape_cast %29 : vector<1x8x128xf32> to vector<8x128xf32>
    %31 = vector.extract_strided_slice %30 {offsets = [0, 0], sizes = [8, 8], strides = [1, 1]} : vector<8x128xf32> to vector<8x8xf32>
    %cst_15 = arith.constant dense<0.000000e+00> : vector<128x8xf32>
    %32 = tpu.matmul %28, %31, %cst_15 {dimension_numbers = #tpu.dot_dimension_numbers<[1], [0], [0], [1], [0, 0, 1, 1], [], []>} : vector<128x8xf32>, vector<8x8xf32>, vector<128x8xf32> -> vector<128x8xf32>
    %33 = vector.shape_cast %32 : vector<128x8xf32> to vector<16x8x8xf32>
    "tpu.trace_start"() <{level = 10 : i32, message = "bij,bjf->bif"}> : () -> ()
    %cst_16 = arith.constant dense<0.000000e+00> : vector<16x8x8xf32>
    %34 = tpu.matmul %26, %33, %cst_16 {dimension_numbers = #tpu.dot_dimension_numbers<[2], [1], [1], [2], [0, 0, 0, 1, 1, 2], [0], [0]>} : vector<16x8x8xf32>, vector<16x8x8xf32>, vector<16x8x8xf32> -> vector<16x8x8xf32>
    "tpu.trace_stop"() : () -> ()
    %c0_17 = arith.constant 0 : index
    %c0_18 = arith.constant 0 : index
    %35 = vector.load %arg4[%c0_17, %c0_18] : memref<16x128xf32, #tpu.memory_space<vmem>>, vector<1x8xf32>
    %36 = vector.shape_cast %35 : vector<1x8xf32> to vector<1x1x8xf32>
    %37 = vector.broadcast %36 : vector<1x1x8xf32> to vector<16x8x8xf32>
    %38 = arith.addf %34, %37 : vector<16x8x8xf32>
    %cst_19 = arith.constant 0.000000e+00 : f32
    %39 = vector.broadcast %cst_19 : f32 to vector<16x8x8xf32>
    %40 = arith.maximumf %38, %39 : vector<16x8x8xf32>
    %41 = vector.shape_cast %40 : vector<16x8x8xf32> to vector<128x8xf32>
    %c1 = arith.constant 1 : index
    %c0_20 = arith.constant 0 : index
    %c0_21 = arith.constant 0 : index
    %42 = vector.load %arg3[%c1, %c0_20, %c0_21] : memref<12x8x128xf32, #tpu.memory_space<vmem>>, vector<1x8x128xf32>
    %43 = vector.shape_cast %42 : vector<1x8x128xf32> to vector<8x128xf32>
    %44 = vector.extract_strided_slice %43 {offsets = [0, 0], sizes = [8, 8], strides = [1, 1]} : vector<8x128xf32> to vector<8x8xf32>
    %cst_22 = arith.constant dense<0.000000e+00> : vector<128x8xf32>
    %45 = tpu.matmul %41, %44, %cst_22 {dimension_numbers = #tpu.dot_dimension_numbers<[1], [0], [0], [1], [0, 0, 1, 1], [], []>} : vector<128x8xf32>, vector<8x8xf32>, vector<128x8xf32> -> vector<128x8xf32>
    %46 = vector.shape_cast %45 : vector<128x8xf32> to vector<16x8x8xf32>
    "tpu.trace_start"() <{level = 10 : i32, message = "bij,bjf->bif"}> : () -> ()
    %cst_23 = arith.constant dense<0.000000e+00> : vector<16x8x8xf32>
    %47 = tpu.matmul %26, %46, %cst_23 {dimension_numbers = #tpu.dot_dimension_numbers<[2], [1], [1], [2], [0, 0, 0, 1, 1, 2], [0], [0]>} : vector<16x8x8xf32>, vector<16x8x8xf32>, vector<16x8x8xf32> -> vector<16x8x8xf32>
    "tpu.trace_stop"() : () -> ()
    %c1_24 = arith.constant 1 : index
    %c0_25 = arith.constant 0 : index
    %48 = vector.load %arg4[%c1_24, %c0_25] : memref<16x128xf32, #tpu.memory_space<vmem>>, vector<1x8xf32>
    %49 = vector.shape_cast %48 : vector<1x8xf32> to vector<1x1x8xf32>
    %50 = vector.broadcast %49 : vector<1x1x8xf32> to vector<16x8x8xf32>
    %51 = arith.addf %47, %50 : vector<16x8x8xf32>
    %cst_26 = arith.constant 0.000000e+00 : f32
    %52 = vector.broadcast %cst_26 : f32 to vector<16x8x8xf32>
    %53 = arith.maximumf %51, %52 : vector<16x8x8xf32>
    %54 = vector.shape_cast %53 : vector<16x8x8xf32> to vector<128x8xf32>
    %c2 = arith.constant 2 : index
    %c0_27 = arith.constant 0 : index
    %c0_28 = arith.constant 0 : index
    %55 = vector.load %arg3[%c2, %c0_27, %c0_28] : memref<12x8x128xf32, #tpu.memory_space<vmem>>, vector<1x8x128xf32>
    %56 = vector.shape_cast %55 : vector<1x8x128xf32> to vector<8x128xf32>
    %57 = vector.extract_strided_slice %56 {offsets = [0, 0], sizes = [8, 8], strides = [1, 1]} : vector<8x128xf32> to vector<8x8xf32>
    %cst_29 = arith.constant dense<0.000000e+00> : vector<128x8xf32>
    %58 = tpu.matmul %54, %57, %cst_29 {dimension_numbers = #tpu.dot_dimension_numbers<[1], [0], [0], [1], [0, 0, 1, 1], [], []>} : vector<128x8xf32>, vector<8x8xf32>, vector<128x8xf32> -> vector<128x8xf32>
    %c2_30 = arith.constant 2 : index
    %c0_31 = arith.constant 0 : index
    %59 = vector.load %arg4[%c2_30, %c0_31] : memref<16x128xf32, #tpu.memory_space<vmem>>, vector<1x8xf32>
    %60 = vector.broadcast %59 : vector<1x8xf32> to vector<128x8xf32>
    %61 = arith.addf %58, %60 : vector<128x8xf32>
    %c3 = arith.constant 3 : index
    %c0_32 = arith.constant 0 : index
    %c0_33 = arith.constant 0 : index
    %62 = vector.load %arg3[%c3, %c0_32, %c0_33] : memref<12x8x128xf32, #tpu.memory_space<vmem>>, vector<1x8x128xf32>
    %63 = vector.shape_cast %62 : vector<1x8x128xf32> to vector<8x128xf32>
    %64 = vector.extract_strided_slice %63 {offsets = [0, 0], sizes = [8, 8], strides = [1, 1]} : vector<8x128xf32> to vector<8x8xf32>
    %cst_34 = arith.constant dense<0.000000e+00> : vector<128x8xf32>
    %65 = tpu.matmul %54, %64, %cst_34 {dimension_numbers = #tpu.dot_dimension_numbers<[1], [0], [0], [1], [0, 0, 1, 1], [], []>} : vector<128x8xf32>, vector<8x8xf32>, vector<128x8xf32> -> vector<128x8xf32>
    %c3_35 = arith.constant 3 : index
    %c0_36 = arith.constant 0 : index
    %66 = vector.load %arg4[%c3_35, %c0_36] : memref<16x128xf32, #tpu.memory_space<vmem>>, vector<1x8xf32>
    %67 = vector.broadcast %66 : vector<1x8xf32> to vector<128x8xf32>
    %68 = arith.addf %65, %67 : vector<128x8xf32>
    %c4 = arith.constant 4 : index
    %c0_37 = arith.constant 0 : index
    %c0_38 = arith.constant 0 : index
    %69 = vector.load %arg3[%c4, %c0_37, %c0_38] : memref<12x8x128xf32, #tpu.memory_space<vmem>>, vector<1x8x128xf32>
    %70 = vector.shape_cast %69 : vector<1x8x128xf32> to vector<8x128xf32>
    %71 = vector.extract_strided_slice %70 {offsets = [0, 0], sizes = [8, 8], strides = [1, 1]} : vector<8x128xf32> to vector<8x8xf32>
    %cst_39 = arith.constant dense<0.000000e+00> : vector<128x8xf32>
    %72 = tpu.matmul %54, %71, %cst_39 {dimension_numbers = #tpu.dot_dimension_numbers<[1], [0], [0], [1], [0, 0, 1, 1], [], []>} : vector<128x8xf32>, vector<8x8xf32>, vector<128x8xf32> -> vector<128x8xf32>
    %c4_40 = arith.constant 4 : index
    %c0_41 = arith.constant 0 : index
    %73 = vector.load %arg4[%c4_40, %c0_41] : memref<16x128xf32, #tpu.memory_space<vmem>>, vector<1x8xf32>
    %74 = vector.broadcast %73 : vector<1x8xf32> to vector<128x8xf32>
    %75 = arith.addf %72, %74 : vector<128x8xf32>
    %76 = arith.negf %61 : vector<128x8xf32>
    %77 = math.exp %76 : vector<128x8xf32>
    %cst_42 = arith.constant 1.000000e+00 : f32
    %78 = vector.broadcast %cst_42 : f32 to vector<128x8xf32>
    %79 = arith.addf %78, %77 : vector<128x8xf32>
    %80 = arith.divf %78, %79 : vector<128x8xf32>
    %81 = math.tanh %68 : vector<128x8xf32>
    %82 = arith.mulf %80, %81 : vector<128x8xf32>
    %c11 = arith.constant 11 : index
    %c0_43 = arith.constant 0 : index
    %83 = vector.load %arg4[%c11, %c0_43] : memref<16x128xf32, #tpu.memory_space<vmem>>, vector<1x8xf32>
    %84 = vector.broadcast %83 : vector<1x8xf32> to vector<128x8xf32>
    %85 = arith.mulf %84, %82 : vector<128x8xf32>
    %86 = arith.addf %75, %85 : vector<128x8xf32>
    %87 = arith.negf %86 : vector<128x8xf32>
    %88 = math.exp %87 : vector<128x8xf32>
    %cst_44 = arith.constant 1.000000e+00 : f32
    %89 = vector.broadcast %cst_44 : f32 to vector<128x8xf32>
    %90 = arith.addf %89, %88 : vector<128x8xf32>
    %91 = arith.divf %89, %90 : vector<128x8xf32>
    %92 = math.tanh %82 : vector<128x8xf32>
    %93 = arith.mulf %91, %92 : vector<128x8xf32>
    %c5 = arith.constant 5 : index
    %c0_45 = arith.constant 0 : index
    %c0_46 = arith.constant 0 : index
    %94 = vector.load %arg3[%c5, %c0_45, %c0_46] : memref<12x8x128xf32, #tpu.memory_space<vmem>>, vector<1x8x128xf32>
    %95 = vector.shape_cast %94 : vector<1x8x128xf32> to vector<8x128xf32>
    %96 = vector.extract_strided_slice %95 {offsets = [0, 0], sizes = [8, 8], strides = [1, 1]} : vector<8x128xf32> to vector<8x8xf32>
    %cst_47 = arith.constant dense<0.000000e+00> : vector<128x8xf32>
    %97 = tpu.matmul %93, %96, %cst_47 {dimension_numbers = #tpu.dot_dimension_numbers<[1], [0], [0], [1], [0, 0, 1, 1], [], []>} : vector<128x8xf32>, vector<8x8xf32>, vector<128x8xf32> -> vector<128x8xf32>
    %c5_48 = arith.constant 5 : index
    %c0_49 = arith.constant 0 : index
    %98 = vector.load %arg4[%c5_48, %c0_49] : memref<16x128xf32, #tpu.memory_space<vmem>>, vector<1x8xf32>
    %99 = vector.broadcast %98 : vector<1x8xf32> to vector<128x8xf32>
    %100 = arith.addf %97, %99 : vector<128x8xf32>
    %c6 = arith.constant 6 : index
    %c0_50 = arith.constant 0 : index
    %c0_51 = arith.constant 0 : index
    %101 = vector.load %arg3[%c6, %c0_50, %c0_51] : memref<12x8x128xf32, #tpu.memory_space<vmem>>, vector<1x8x128xf32>
    %102 = vector.shape_cast %101 : vector<1x8x128xf32> to vector<8x128xf32>
    %103 = vector.extract_strided_slice %102 {offsets = [0, 0], sizes = [8, 8], strides = [1, 1]} : vector<8x128xf32> to vector<8x8xf32>
    %cst_52 = arith.constant dense<0.000000e+00> : vector<128x8xf32>
    %104 = tpu.matmul %93, %103, %cst_52 {dimension_numbers = #tpu.dot_dimension_numbers<[1], [0], [0], [1], [0, 0, 1, 1], [], []>} : vector<128x8xf32>, vector<8x8xf32>, vector<128x8xf32> -> vector<128x8xf32>
    %c6_53 = arith.constant 6 : index
    %c0_54 = arith.constant 0 : index
    %105 = vector.load %arg4[%c6_53, %c0_54] : memref<16x128xf32, #tpu.memory_space<vmem>>, vector<1x8xf32>
    %106 = vector.broadcast %105 : vector<1x8xf32> to vector<128x8xf32>
    %107 = arith.addf %104, %106 : vector<128x8xf32>
    %c7 = arith.constant 7 : index
    %c0_55 = arith.constant 0 : index
    %c0_56 = arith.constant 0 : index
    %108 = vector.load %arg3[%c7, %c0_55, %c0_56] : memref<12x8x128xf32, #tpu.memory_space<vmem>>, vector<1x8x128xf32>
    %109 = vector.shape_cast %108 : vector<1x8x128xf32> to vector<8x128xf32>
    %110 = vector.extract_strided_slice %109 {offsets = [0, 0], sizes = [8, 8], strides = [1, 1]} : vector<8x128xf32> to vector<8x8xf32>
    %cst_57 = arith.constant dense<0.000000e+00> : vector<128x8xf32>
    %111 = tpu.matmul %93, %110, %cst_57 {dimension_numbers = #tpu.dot_dimension_numbers<[1], [0], [0], [1], [0, 0, 1, 1], [], []>} : vector<128x8xf32>, vector<8x8xf32>, vector<128x8xf32> -> vector<128x8xf32>
    %c7_58 = arith.constant 7 : index
    %c0_59 = arith.constant 0 : index
    %112 = vector.load %arg4[%c7_58, %c0_59] : memref<16x128xf32, #tpu.memory_space<vmem>>, vector<1x8xf32>
    %113 = vector.broadcast %112 : vector<1x8xf32> to vector<128x8xf32>
    %114 = arith.addf %111, %113 : vector<128x8xf32>
    %115 = arith.negf %100 : vector<128x8xf32>
    %116 = math.exp %115 : vector<128x8xf32>
    %cst_60 = arith.constant 1.000000e+00 : f32
    %117 = vector.broadcast %cst_60 : f32 to vector<128x8xf32>
    %118 = arith.addf %117, %116 : vector<128x8xf32>
    %119 = arith.divf %117, %118 : vector<128x8xf32>
    %120 = math.tanh %107 : vector<128x8xf32>
    %121 = arith.mulf %119, %120 : vector<128x8xf32>
    %c12 = arith.constant 12 : index
    %c0_61 = arith.constant 0 : index
    %122 = vector.load %arg4[%c12, %c0_61] : memref<16x128xf32, #tpu.memory_space<vmem>>, vector<1x8xf32>
    %123 = vector.broadcast %122 : vector<1x8xf32> to vector<128x8xf32>
    %124 = arith.mulf %123, %121 : vector<128x8xf32>
    %125 = arith.addf %114, %124 : vector<128x8xf32>
    %126 = arith.negf %125 : vector<128x8xf32>
    %127 = math.exp %126 : vector<128x8xf32>
    %cst_62 = arith.constant 1.000000e+00 : f32
    %128 = vector.broadcast %cst_62 : f32 to vector<128x8xf32>
    %129 = arith.addf %128, %127 : vector<128x8xf32>
    %130 = arith.divf %128, %129 : vector<128x8xf32>
    %131 = math.tanh %121 : vector<128x8xf32>
    %132 = arith.mulf %130, %131 : vector<128x8xf32>
    %c8 = arith.constant 8 : index
    %c0_63 = arith.constant 0 : index
    %c0_64 = arith.constant 0 : index
    %133 = vector.load %arg3[%c8, %c0_63, %c0_64] : memref<12x8x128xf32, #tpu.memory_space<vmem>>, vector<1x8x128xf32>
    %134 = vector.shape_cast %133 : vector<1x8x128xf32> to vector<8x128xf32>
    %135 = vector.extract_strided_slice %134 {offsets = [0, 0], sizes = [8, 8], strides = [1, 1]} : vector<8x128xf32> to vector<8x8xf32>
    %cst_65 = arith.constant dense<0.000000e+00> : vector<128x8xf32>
    %136 = tpu.matmul %132, %135, %cst_65 {dimension_numbers = #tpu.dot_dimension_numbers<[1], [0], [0], [1], [0, 0, 1, 1], [], []>} : vector<128x8xf32>, vector<8x8xf32>, vector<128x8xf32> -> vector<128x8xf32>
    %c8_66 = arith.constant 8 : index
    %c0_67 = arith.constant 0 : index
    %137 = vector.load %arg4[%c8_66, %c0_67] : memref<16x128xf32, #tpu.memory_space<vmem>>, vector<1x8xf32>
    %138 = vector.broadcast %137 : vector<1x8xf32> to vector<128x8xf32>
    %139 = arith.addf %136, %138 : vector<128x8xf32>
    %c9 = arith.constant 9 : index
    %c0_68 = arith.constant 0 : index
    %c0_69 = arith.constant 0 : index
    %140 = vector.load %arg3[%c9, %c0_68, %c0_69] : memref<12x8x128xf32, #tpu.memory_space<vmem>>, vector<1x8x128xf32>
    %141 = vector.shape_cast %140 : vector<1x8x128xf32> to vector<8x128xf32>
    %142 = vector.extract_strided_slice %141 {offsets = [0, 0], sizes = [8, 8], strides = [1, 1]} : vector<8x128xf32> to vector<8x8xf32>
    %cst_70 = arith.constant dense<0.000000e+00> : vector<128x8xf32>
    %143 = tpu.matmul %132, %142, %cst_70 {dimension_numbers = #tpu.dot_dimension_numbers<[1], [0], [0], [1], [0, 0, 1, 1], [], []>} : vector<128x8xf32>, vector<8x8xf32>, vector<128x8xf32> -> vector<128x8xf32>
    %c9_71 = arith.constant 9 : index
    %c0_72 = arith.constant 0 : index
    %144 = vector.load %arg4[%c9_71, %c0_72] : memref<16x128xf32, #tpu.memory_space<vmem>>, vector<1x8xf32>
    %145 = vector.broadcast %144 : vector<1x8xf32> to vector<128x8xf32>
    %146 = arith.addf %143, %145 : vector<128x8xf32>
    %c10 = arith.constant 10 : index
    %c0_73 = arith.constant 0 : index
    %c0_74 = arith.constant 0 : index
    %147 = vector.load %arg3[%c10, %c0_73, %c0_74] : memref<12x8x128xf32, #tpu.memory_space<vmem>>, vector<1x8x128xf32>
    %148 = vector.shape_cast %147 : vector<1x8x128xf32> to vector<8x128xf32>
    %149 = vector.extract_strided_slice %148 {offsets = [0, 0], sizes = [8, 8], strides = [1, 1]} : vector<8x128xf32> to vector<8x8xf32>
    %cst_75 = arith.constant dense<0.000000e+00> : vector<128x8xf32>
    %150 = tpu.matmul %132, %149, %cst_75 {dimension_numbers = #tpu.dot_dimension_numbers<[1], [0], [0], [1], [0, 0, 1, 1], [], []>} : vector<128x8xf32>, vector<8x8xf32>, vector<128x8xf32> -> vector<128x8xf32>
    %c10_76 = arith.constant 10 : index
    %c0_77 = arith.constant 0 : index
    %151 = vector.load %arg4[%c10_76, %c0_77] : memref<16x128xf32, #tpu.memory_space<vmem>>, vector<1x8xf32>
    %152 = vector.broadcast %151 : vector<1x8xf32> to vector<128x8xf32>
    %153 = arith.addf %150, %152 : vector<128x8xf32>
    %154 = arith.negf %139 : vector<128x8xf32>
    %155 = math.exp %154 : vector<128x8xf32>
    %cst_78 = arith.constant 1.000000e+00 : f32
    %156 = vector.broadcast %cst_78 : f32 to vector<128x8xf32>
    %157 = arith.addf %156, %155 : vector<128x8xf32>
    %158 = arith.divf %156, %157 : vector<128x8xf32>
    %159 = math.tanh %146 : vector<128x8xf32>
    %160 = arith.mulf %158, %159 : vector<128x8xf32>
    %c13 = arith.constant 13 : index
    %c0_79 = arith.constant 0 : index
    %161 = vector.load %arg4[%c13, %c0_79] : memref<16x128xf32, #tpu.memory_space<vmem>>, vector<1x8xf32>
    %162 = vector.broadcast %161 : vector<1x8xf32> to vector<128x8xf32>
    %163 = arith.mulf %162, %160 : vector<128x8xf32>
    %164 = arith.addf %153, %163 : vector<128x8xf32>
    %165 = arith.negf %164 : vector<128x8xf32>
    %166 = math.exp %165 : vector<128x8xf32>
    %cst_80 = arith.constant 1.000000e+00 : f32
    %167 = vector.broadcast %cst_80 : f32 to vector<128x8xf32>
    %168 = arith.addf %167, %166 : vector<128x8xf32>
    %169 = arith.divf %167, %168 : vector<128x8xf32>
    %170 = math.tanh %160 : vector<128x8xf32>
    %171 = arith.mulf %169, %170 : vector<128x8xf32>
    %cst_81 = arith.constant 0.000000e+00 : f32
    %172 = vector.broadcast %cst_81 : f32 to vector<128x8xf32>
    %173 = arith.maximumf %171, %172 : vector<128x8xf32>
    %c11_82 = arith.constant 11 : index
    %c0_83 = arith.constant 0 : index
    %c0_84 = arith.constant 0 : index
    %174 = vector.load %arg3[%c11_82, %c0_83, %c0_84] : memref<12x8x128xf32, #tpu.memory_space<vmem>>, vector<1x8x128xf32>
    %175 = vector.shape_cast %174 : vector<1x8x128xf32> to vector<8x128xf32>
    %176 = vector.extract_strided_slice %175 {offsets = [0, 0], sizes = [8, 3], strides = [1, 1]} : vector<8x128xf32> to vector<8x3xf32>
    %cst_85 = arith.constant dense<0.000000e+00> : vector<128x3xf32>
    %177 = tpu.matmul %173, %176, %cst_85 {dimension_numbers = #tpu.dot_dimension_numbers<[1], [0], [0], [1], [0, 0, 1, 1], [], []>} : vector<128x8xf32>, vector<8x3xf32>, vector<128x3xf32> -> vector<128x3xf32>
    %c14 = arith.constant 14 : index
    %c0_86 = arith.constant 0 : index
    %178 = vector.load %arg4[%c14, %c0_86] : memref<16x128xf32, #tpu.memory_space<vmem>>, vector<1x3xf32>
    %179 = vector.broadcast %178 : vector<1x3xf32> to vector<128x3xf32>
    %180 = arith.addf %177, %179 : vector<128x3xf32>
    %cst_87 = arith.constant dense<0xFF800000> : vector<128xf32>
    %181 = vector.multi_reduction <maximumf>, %180, %cst_87 [1] : vector<128x3xf32> to vector<128xf32>
    %182 = vector.shape_cast %181 : vector<128xf32> to vector<128x1xf32>
    %183 = vector.broadcast %182 : vector<128x1xf32> to vector<128x3xf32>
    %184 = arith.subf %180, %183 : vector<128x3xf32>
    %185 = math.exp %184 : vector<128x3xf32>
    %cst_88 = arith.constant dense<0.000000e+00> : vector<128xf32>
    %186 = vector.multi_reduction <add>, %185, %cst_88 [1] : vector<128x3xf32> to vector<128xf32>
    %187 = vector.shape_cast %186 : vector<128xf32> to vector<128x1xf32>
    %188 = math.log %187 : vector<128x1xf32>
    %189 = arith.addf %182, %188 : vector<128x1xf32>
    %190 = vector.broadcast %189 : vector<128x1xf32> to vector<128x3xf32>
    %191 = arith.subf %180, %190 : vector<128x3xf32>
    %192 = vector.shape_cast %191 : vector<128x3xf32> to vector<16x8x3xf32>
    %c0_89 = arith.constant 0 : index
    %c0_90 = arith.constant 0 : index
    %c0_91 = arith.constant 0 : index
    %193 = vector.load %arg5[%c0_89, %c0_90, %c0_91] : memref<16x8x3xf32, #tpu.memory_space<vmem>>, vector<16x8x3xf32>
    tpu.vector_store %arg5[%c0_89, %c0_90, %c0_91], %192 {strides = array<i32>} : memref<16x8x3xf32, #tpu.memory_space<vmem>>, vector<16x8x3xf32>,
    return
  }
  func.func @transform_0(%arg0: i32) -> (i32, i32, i32) {
    %c0_i32 = arith.constant 0 : i32
    %c0_i32_0 = arith.constant 0 : i32
    %c0_i32_1 = arith.constant 0 : i32
    return %arg0, %c0_i32, %c0_i32_0 : i32, i32, i32
  }
  func.func @transform_1(%arg0: i32) -> (i32, i32, i32) {
    %c0_i32 = arith.constant 0 : i32
    %c0_i32_0 = arith.constant 0 : i32
    %c0_i32_1 = arith.constant 0 : i32
    return %arg0, %c0_i32, %c0_i32_0 : i32, i32, i32
  }
  func.func @transform_2(%arg0: i32) -> (i32, i32, i32) {
    %c0_i32 = arith.constant 0 : i32
    %c0_i32_0 = arith.constant 0 : i32
    %c0_i32_1 = arith.constant 0 : i32
    %c0_i32_2 = arith.constant 0 : i32
    return %c0_i32, %c0_i32_0, %c0_i32_1 : i32, i32, i32
  }
  func.func @transform_3(%arg0: i32) -> (i32, i32) {
    %c0_i32 = arith.constant 0 : i32
    %c0_i32_0 = arith.constant 0 : i32
    %c0_i32_1 = arith.constant 0 : i32
    return %c0_i32, %c0_i32_0 : i32, i32
  }
  func.func @transform_4(%arg0: i32) -> (i32, i32, i32) {
    %c0_i32 = arith.constant 0 : i32
    %c0_i32_0 = arith.constant 0 : i32
    %c0_i32_1 = arith.constant 0 : i32
    return %arg0, %c0_i32, %c0_i32_0 : i32, i32, i32
  }
}

</mosaic_0001>

<llo_original>
// kernel: social_stgcn_forward.1
$region0: #{social_stgcn_forward.1}
  #allocation0 [shape = 'u32[]', space=smem, size = 0x4, offset = 0x4, fixed_abs, tag = 'smem constant byte address 0x4 - core index']
  #allocation1 [shape = 'u32[144,128]{1,0:T(1,128)}', space=vmem, size = 0x12000, scoped, tag = 'internal scratch']
  %s0 = inlined_call_operand.vmem [shape: f32[64,8,8], index: 0, kind: input, shape index: {}]
  %s1 = inlined_call_operand.vmem [shape: f32[64,8,8], index: 1, kind: input, shape index: {}]
  %s2 = inlined_call_operand.vmem [shape: f32[12,8,128], index: 2, kind: input, shape index: {}]
  %s3 = inlined_call_operand.vmem [shape: f32[16,128], index: 3, kind: input, shape index: {}]
  %s4 = inlined_call_operand.vmem [shape: f32[64,8,3], index: 4, kind: output, shape index: {}]
  %s5 = sld [smem:[#allocation0]]
  $region49: #{social_stgcn_forward.1} parent=0
    _
  %s7 = ssub.s32 1, %s5
  %s8 = scalar_select 0, %s7, %s5
  loop: start=0, step=1, limit=6
  $region2: #{social_stgcn_forward.1} parent=0 // loop_pre_header
    _
  $region3: #{social_stgcn_forward.1} parent=0 // loop_header
    %s10 = sphi 0, %s14
    %p11 = scmp.ge.s32.totalorder %s10, 6
    %s20 = sphi 0, %s22
    %s23 = sphi 0, %s20
    %s24 = sphi 0, %s23
    %s40 = sphi 0, %s24
    %s46 = sphi 0, %s48
    %s49 = sphi 0, %s46
    %s50 = sphi 0, %s49
    %s66 = sphi 0, %s50
    %s70 = sphi 0, %s70
    %s72 = sphi 0, %s70
    %s73 = sphi 0, %s72
    %s87 = sphi 0, %s73
    %s91 = sphi 0, %s91
    %s93 = sphi 0, %s91
    %s94 = sphi 0, %s93
    %s108 = sphi 0, %s94
    %s114 = sphi 0, %s116
    %s117 = sphi 0, %s114
    %s118 = sphi 0, %s117
    %s134 = sphi 0, %s118
  $region4: #{social_stgcn_forward.1} parent=0 // loop_header_branch
    %13 = sbr.rel (%p11) target = $region8
  $region5: #{social_stgcn_forward.1} parent=0 // loop_body
    %s15 = ssub.s32 %s10, 1
    %s16 = ssub.s32 %s10, 2
    %s17 = sadd.s32 %s10, 1
    %s18 = ssub.s32 %s10, %s17
    %p19 = scmp.eq.s32.totalorder %s18, 0
    %s21 = sadd.s32 %s20, 1
    %s22 = scalar_select %p19, %s20, %s21
    %p25 = pneg %p19
    %p26 = scmp.eq.s32.totalorder %s10, 3
    %p27 = por %p25, %p26
    %p28 = scmp.ne.s32.totalorder %s20, %s23
    %p29 = scmp.eq.s32.totalorder %s10, 0
    %p30 = por %p28, %p29
    %p31 = scmp.ne.s32.totalorder %s20, %s23
    %p32 = scmp.eq.s32.totalorder %s15, 3
    %p33 = por %p31, %p32
    %p34 = scmp.ne.s32.totalorder %s23, %s24
    %p35 = scmp.eq.s32.totalorder %s15, 0
    %p36 = por %p34, %p35
    %p37 = scmp.ne.s32.totalorder %s23, %s24
    %p38 = scmp.eq.s32.totalorder %s16, 3
    %p39 = por %p37, %p38
    %p41 = scmp.ne.s32.totalorder %s24, %s40
    %p42 = scmp.eq.s32.totalorder %s16, 0
    %p43 = por %p41, %p42
    %s44 = ssub.s32 %s10, %s17
    %p45 = scmp.eq.s32.totalorder %s44, 0
    %s47 = sadd.s32 %s46, 1
    %s48 = scalar_select %p45, %s46, %s47
    %p51 = pneg %p45
    %p52 = scmp.eq.s32.totalorder %s10, 3
    %p53 = por %p51, %p52
    %p54 = scmp.ne.s32.totalorder %s46, %s49
    %p55 = scmp.eq.s32.totalorder %s10, 0
    %p56 = por %p54, %p55
    %p57 = scmp.ne.s32.totalorder %s46, %s49
    %p58 = scmp.eq.s32.totalorder %s15, 3
    %p59 = por %p57, %p58
    %p60 = scmp.ne.s32.totalorder %s49, %s50
    %p61 = scmp.eq.s32.totalorder %s15, 0
    %p62 = por %p60, %p61
    %p63 = scmp.ne.s32.totalorder %s49, %s50
    %p64 = scmp.eq.s32.totalorder %s16, 3
    %p65 = por %p63, %p64
    %p67 = scmp.ne.s32.totalorder %s50, %s66
    %p68 = scmp.eq.s32.totalorder %s16, 0
    %p69 = por %p67, %p68
    %s71 = sadd.s32 %s70, 1
    %p74 = scmp.eq.s32.totalorder %s10, 3
    %p75 = scmp.ne.s32.totalorder %s70, %s72
    %p76 = scmp.eq.s32.totalorder %s10, 0
    %p77 = por %p75, %p76
    %p78 = scmp.ne.s32.totalorder %s70, %s72
    %p79 = scmp.eq.s32.totalorder %s15, 3
    %p80 = por %p78, %p79
    %p81 = scmp.ne.s32.totalorder %s72, %s73
    %p82 = scmp.eq.s32.totalorder %s15, 0
    %p83 = por %p81, %p82
    %p84 = scmp.ne.s32.totalorder %s72, %s73
    %p85 = scmp.eq.s32.totalorder %s16, 3
    %p86 = por %p84, %p85
    %p88 = scmp.ne.s32.totalorder %s73, %s87
    %p89 = scmp.eq.s32.totalorder %s16, 0
    %p90 = por %p88, %p89
    %s92 = sadd.s32 %s91, 1
    %p95 = scmp.eq.s32.totalorder %s10, 3
    %p96 = scmp.ne.s32.totalorder %s91, %s93
    %p97 = scmp.eq.s32.totalorder %s10, 0
    %p98 = por %p96, %p97
    %p99 = scmp.ne.s32.totalorder %s91, %s93
    %p100 = scmp.eq.s32.totalorder %s15, 3
    %p101 = por %p99, %p100
    %p102 = scmp.ne.s32.totalorder %s93, %s94
    %p103 = scmp.eq.s32.totalorder %s15, 0
    %p104 = por %p102, %p103
    %p105 = scmp.ne.s32.totalorder %s93, %s94
    %p106 = scmp.eq.s32.totalorder %s16, 3
    %p107 = por %p105, %p106
    %p109 = scmp.ne.s32.totalorder %s94, %s108
    %p110 = scmp.eq.s32.totalorder %s16, 0
    %p111 = por %p109, %p110
    %s112 = ssub.s32 %s10, %s17
    %p113 = scmp.eq.s32.totalorder %s112, 0
    %s115 = sadd.s32 %s114, 1
    %s116 = scalar_select %p113, %s114, %s115
    %p119 = pneg %p113
    %p120 = scmp.eq.s32.totalorder %s10, 3
    %p121 = por %p119, %p120
    %p122 = scmp.ne.s32.totalorder %s114, %s117
    %p123 = scmp.eq.s32.totalorder %s10, 0
    %p124 = por %p122, %p123
    %p125 = scmp.ne.s32.totalorder %s114, %s117
    %p126 = scmp.eq.s32.totalorder %s15, 3
    %p127 = por %p125, %p126
    %p128 = scmp.ne.s32.totalorder %s117, %s118
    %p129 = scmp.eq.s32.totalorder %s15, 0
    %p130 = por %p128, %p129
    %p131 = scmp.ne.s32.totalorder %s117, %s118
    %p132 = scmp.eq.s32.totalorder %s16, 3
    %p133 = por %p131, %p132
    %p135 = scmp.ne.s32.totalorder %s118, %s134
    %p136 = scmp.eq.s32.totalorder %s16, 0
    %p137 = por %p135, %p136
    %p138 = scmp.le.s32.totalorder 1, %s10
    %p139 = scmp.lt.s32.totalorder %s10, 5
    %p140 = pnand %p138, %p139
    %p141 = pneg %p140
    // Predicated region
    $region9: #{social_stgcn_forward.1} parent=5 // pred_check
      _
    $region10: #{social_stgcn_forward.1} parent=5 // pred_check_branch
      %143 = sbr.rel (%p140) target = $region12
    $region11: #{social_stgcn_forward.1} parent=5 // pred_region
      %s144 = ssub.s32 %s10, 1
      // Predicated region
      $region13: #{social_stgcn_forward.1} parent=11 // pred_check
        %p145 = pneg %p83
      $region14: #{social_stgcn_forward.1} parent=11 // pred_check_branch
        %147 = sbr.rel (%p145) target = $region16
      $region15: #{social_stgcn_forward.1} parent=11 // pred_region
        _
      $region16: #{social_stgcn_forward.1} parent=11 // pred_fallthru
        _
      // Predicated region
      $region17: #{social_stgcn_forward.1} parent=11 // pred_check
        %p148 = pneg %p104
      $region18: #{social_stgcn_forward.1} parent=11 // pred_check_branch
        %150 = sbr.rel (%p148) target = $region20
      $region19: #{social_stgcn_forward.1} parent=11 // pred_region
        _
      $region20: #{social_stgcn_forward.1} parent=11 // pred_fallthru
        _
    $region12: #{social_stgcn_forward.1} parent=5 // pred_fallthru
      _
    %p151 = scmp.lt.s32.totalorder %s10, 4
    // Predicated region
    $region21: #{social_stgcn_forward.1} parent=5 // pred_check
      %p152 = pneg %p151
    $region22: #{social_stgcn_forward.1} parent=5 // pred_check_branch
      %154 = sbr.rel (%p152) target = $region24
    $region23: #{social_stgcn_forward.1} parent=5 // pred_region
      // Predicated region
      $region25: #{social_stgcn_forward.1} parent=23 // pred_check
        %p155 = pneg %p30
      $region26: #{social_stgcn_forward.1} parent=23 // pred_check_branch
        %157 = sbr.rel (%p155) target = $region28
      $region27: #{social_stgcn_forward.1} parent=23 // pred_region
        %s158 = smul.u32 16, %s10
        %p159 = scmp.lt.s32.totalorder %s158, 63
        %s160 = scalar_select %p159, %s158, 63
        %s161 = smul.addr %s160, 8
        %s162 = scalar_lea.vmem %s0, %s161
        %s163 = smul.u32 16, %s10
      $region28: #{social_stgcn_forward.1} parent=23 // pred_fallthru
        _
      // Predicated region
      $region29: #{social_stgcn_forward.1} parent=23 // pred_check
        %p164 = pneg %p56
      $region30: #{social_stgcn_forward.1} parent=23 // pred_check_branch
        %166 = sbr.rel (%p164) target = $region32
      $region31: #{social_stgcn_forward.1} parent=23 // pred_region
        %s167 = smul.u32 16, %s10
        %p168 = scmp.lt.s32.totalorder %s167, 63
        %s169 = scalar_select %p168, %s167, 63
        %s170 = smul.addr %s169, 8
        %s171 = scalar_lea.vmem %s1, %s170
        %s172 = smul.u32 16, %s10
      $region32: #{social_stgcn_forward.1} parent=23 // pred_fallthru
        _
    $region24: #{social_stgcn_forward.1} parent=5 // pred_fallthru
      _
    %p173 = scmp.le.s32.totalorder 1, %s10
    %p174 = scmp.lt.s32.totalorder %s10, 5
    %p175 = pnand %p173, %p174
    %p176 = pneg %p175
    // Predicated region
    $region33: #{social_stgcn_forward.1} parent=5 // pred_check
      _
    $region34: #{social_stgcn_forward.1} parent=5 // pred_check_branch
      %178 = sbr.rel (%p175) target = $region36
    $region35: #{social_stgcn_forward.1} parent=5 // pred_region
      %s179 = ssub.s32 %s10, 1
      %s180 = smul.u32 16, %s15
      %p181 = scmp.lt.s32.totalorder %s180, 63
      %s182 = scalar_select %p181, %s180, 63
      %s183 = smul.addr %s182, 8
      %s184 = scalar_lea.vmem %s0, %s183
      %p185 = pneg %p36
      %p186 = pneg %p33
      %s187 = smul.u32 16, %s15
      %p188 = scmp.lt.s32.totalorder %s187, 63
      %s189 = scalar_select %p188, %s187, 63
      %s190 = smul.addr %s189, 8
      %s191 = scalar_lea.vmem %s1, %s190
      %p192 = pneg %p62
      %p193 = pneg %p59
      %p194 = pneg %p83
      %p195 = pneg %p80
      %p196 = pneg %p104
      %p197 = pneg %p101
      %p198 = pneg %p130
      %p199 = pneg %p127
      %s200 = smul.u32 16, %s15
      %p201 = scmp.lt.s32.totalorder %s200, 63
      %s202 = scalar_select %p201, %s200, 63
      %s203 = smul.addr %s202, 8
      %s204 = scalar_lea.vmem %s4, %s203
      %s205 = smul.u32 16, %s15
      %p206 = scmp.lt.s32.totalorder %s205, 63
      %s207 = scalar_select %p206, %s205, 63
      %s208 = smul.addr %s207, 8
      %s209 = scalar_lea.vmem %s0, %s208
      %s210 = smul.u32 16, %s15
      %s211 = smul.u32 16, %s15
      %p212 = scmp.lt.s32.totalorder %s211, 63
      %s213 = scalar_select %p212, %s211, 63
      %s214 = smul.addr %s213, 8
      %s215 = scalar_lea.vmem %s1, %s214
      %s216 = smul.u32 16, %s15
      %s217 = smul.u32 16, %s15
      %p218 = scmp.lt.s32.totalorder %s217, 63
      %s219 = scalar_select %p218, %s217, 63
      %s220 = smul.addr %s219, 8
      %s221 = scalar_lea.vmem %s4, %s220
      %s222 = smul.u32 16, %s15
      %v223 = vld [vmem:[%s209] sm:$0xff]
      %v224 = vld [vmem:[%s209 + $0x8] sm:$0xff]
      %v225 = vld [vmem:[%s209 + $0x10] sm:$0xff]
      %v226 = vld [vmem:[%s209 + $0x18] sm:$0xff]
      %v227 = vld [vmem:[%s209 + $0x20] sm:$0xff]
      %v228 = vld [vmem:[%s209 + $0x28] sm:$0xff]
      %v229 = vld [vmem:[%s209 + $0x30] sm:$0xff]
      %v230 = vld [vmem:[%s209 + $0x38] sm:$0xff]
      %v231 = vld [vmem:[%s209 + $0x40] sm:$0xff]
      %v232 = vld [vmem:[%s209 + $0x48] sm:$0xff]
      %v233 = vld [vmem:[%s209 + $0x50] sm:$0xff]
      %v234 = vld [vmem:[%s209 + $0x58] sm:$0xff]
      %v235 = vld [vmem:[%s209 + $0x60] sm:$0xff]
      %v236 = vld [vmem:[%s209 + $0x68] sm:$0xff]
      %v237 = vld [vmem:[%s209 + $0x70] sm:$0xff]
      %v238 = vld [vmem:[%s209 + $0x78] sm:$0xff]
      %v239 = vlaneseq
      %v240 = vshrl.u32 %v239, 7
      %v241 = vlaneseq
      %v242 = vand.u32 %v241, 127
      %vm243 = vcmp.eq.s32.totalorder %v240, %v242
      %vm244 = vcmp.gt.f32.partialorder %v223, 0.0
      %vm245 = vcmp.gt.f32.partialorder %v224, 0.0
      %vm246 = vcmp.gt.f32.partialorder %v225, 0.0
      %vm247 = vcmp.gt.f32.partialorder %v226, 0.0
      %vm248 = vcmp.gt.f32.partialorder %v227, 0.0
      %vm249 = vcmp.gt.f32.partialorder %v228, 0.0
      %vm250 = vcmp.gt.f32.partialorder %v229, 0.0
      %vm251 = vcmp.gt.f32.partialorder %v230, 0.0
      %vm252 = vcmp.gt.f32.partialorder %v231, 0.0
      %vm253 = vcmp.gt.f32.partialorder %v232, 0.0
      %vm254 = vcmp.gt.f32.partialorder %v233, 0.0
      %vm255 = vcmp.gt.f32.partialorder %v234, 0.0
      %vm256 = vcmp.gt.f32.partialorder %v235, 0.0
      %vm257 = vcmp.gt.f32.partialorder %v236, 0.0
      %vm258 = vcmp.gt.f32.partialorder %v237, 0.0
      %vm259 = vcmp.gt.f32.partialorder %v238, 0.0
      %v260 = vsel %vm244, %v223, 2.0
      %v261 = vsel %vm245, %v224, 2.0
      %v262 = vsel %vm246, %v225, 2.0
      %v263 = vsel %vm247, %v226, 2.0
      %v264 = vsel %vm248, %v227, 2.0
      %v265 = vsel %vm249, %v228, 2.0
      %v266 = vsel %vm250, %v229, 2.0
      %v267 = vsel %vm251, %v230, 2.0
      %v268 = vsel %vm252, %v231, 2.0
      %v269 = vsel %vm253, %v232, 2.0
      %v270 = vsel %vm254, %v233, 2.0
      %v271 = vsel %vm255, %v234, 2.0
      %v272 = vsel %vm256, %v235, 2.0
      %v273 = vsel %vm257, %v236, 2.0
      %v274 = vsel %vm258, %v237, 2.0
      %v275 = vsel %vm259, %v238, 2.0
      %v276 = vsel %vm243, %v260, %v223
      %v277 = vsel %vm243, %v261, %v224
      %v278 = vsel %vm243, %v262, %v225
      %v279 = vsel %vm243, %v263, %v226
      %v280 = vsel %vm243, %v264, %v227
      %v281 = vsel %vm243, %v265, %v228
      %v282 = vsel %vm243, %v266, %v229
      %v283 = vsel %vm243, %v267, %v230
      %v284 = vsel %vm243, %v268, %v231
      %v285 = vsel %vm243, %v269, %v232
      %v286 = vsel %vm243, %v270, %v233
      %v287 = vsel %vm243, %v271, %v234
      %v288 = vsel %vm243, %v272, %v235
      %v289 = vsel %vm243, %v273, %v236
      %v290 = vsel %vm243, %v274, %v237
      %v291 = vsel %vm243, %v275, %v238
      %vm292 = vcmask 64512
      %v293 = vsel %vm292, %v276, 0.0
      %294 = vadd.xlane.f32.xlu0 %v293
      %v295 = vpop.xlane.xlu0 %294
      %v296 = vsel %vm292, %v277, 0.0
      %297 = vadd.xlane.f32.xlu0 %v296
      %v298 = vpop.xlane.xlu0 %297
      %v299 = vsel %vm292, %v278, 0.0
      %300 = vadd.xlane.f32.xlu0 %v299
      %v301 = vpop.xlane.xlu0 %300
      %v302 = vsel %vm292, %v279, 0.0
      %303 = vadd.xlane.f32.xlu0 %v302
      %v304 = vpop.xlane.xlu0 %303
      %v305 = vsel %vm292, %v280, 0.0
      %306 = vadd.xlane.f32.xlu0 %v305
      %v307 = vpop.xlane.xlu0 %306
      %v308 = vsel %vm292, %v281, 0.0
      %309 = vadd.xlane.f32.xlu0 %v308
      %v310 = vpop.xlane.xlu0 %309
      %v311 = vsel %vm292, %v282, 0.0
      %312 = vadd.xlane.f32.xlu0 %v311
      %v313 = vpop.xlane.xlu0 %312
      %v314 = vsel %vm292, %v283, 0.0
      %315 = vadd.xlane.f32.xlu0 %v314
      %v316 = vpop.xlane.xlu0 %315
      %v317 = vsel %vm292, %v284, 0.0
      %318 = vadd.xlane.f32.xlu0 %v317
      %v319 = vpop.xlane.xlu0 %318
      %v320 = vsel %vm292, %v285, 0.0
      %321 = vadd.xlane.f32.xlu0 %v320
      %v322 = vpop.xlane.xlu0 %321
      %v323 = vsel %vm292, %v286, 0.0
      %324 = vadd.xlane.f32.xlu0 %v323
      %v325 = vpop.xlane.xlu0 %324
      %v326 = vsel %vm292, %v287, 0.0
      %327 = vadd.xlane.f32.xlu0 %v326
      %v328 = vpop.xlane.xlu0 %327
      %v329 = vsel %vm292, %v288, 0.0
      %330 = vadd.xlane.f32.xlu0 %v329
      %v331 = vpop.xlane.xlu0 %330
      %v332 = vsel %vm292, %v289, 0.0
      %333 = vadd.xlane.f32.xlu0 %v332
      %v334 = vpop.xlane.xlu0 %333
      %v335 = vsel %vm292, %v290, 0.0
      %336 = vadd.xlane.f32.xlu0 %v335
      %v337 = vpop.xlane.xlu0 %336
      %v338 = vsel %vm292, %v291, 0.0
      %339 = vadd.xlane.f32.xlu0 %v338
      %v340 = vpop.xlane.xlu0 %339
      %v341 = vrot.slane %v293, 4
      %v342 = vadd.f32 %v293, %v341
      %v343 = vrot.slane %v342, 2
      %v344 = vadd.f32 %v342, %v343
      %v345 = vrot.slane %v344, 1
      %v346 = vadd.f32 %v344, %v345
      %v347 = vrot.slane %v296, 4
      %v348 = vadd.f32 %v296, %v347
      %v349 = vrot.slane %v348, 2
      %v350 = vadd.f32 %v348, %v349
      %v351 = vrot.slane %v350, 1
      %v352 = vadd.f32 %v350, %v351
      %v353 = vrot.slane %v299, 4
      %v354 = vadd.f32 %v299, %v353
      %v355 = vrot.slane %v354, 2
      %v356 = vadd.f32 %v354, %v355
      %v357 = vrot.slane %v356, 1
      %v358 = vadd.f32 %v356, %v357
      %v359 = vrot.slane %v302, 4
      %v360 = vadd.f32 %v302, %v359
      %v361 = vrot.slane %v360, 2
      %v362 = vadd.f32 %v360, %v361
      %v363 = vrot.slane %v362, 1
      %v364 = vadd.f32 %v362, %v363
      %v365 = vrot.slane %v305, 4
      %v366 = vadd.f32 %v305, %v365
      %v367 = vrot.slane %v366, 2
      %v368 = vadd.f32 %v366, %v367
      %v369 = vrot.slane %v368, 1
      %v370 = vadd.f32 %v368, %v369
      %v371 = vrot.slane %v308, 4
      %v372 = vadd.f32 %v308, %v371
      %v373 = vrot.slane %v372, 2
      %v374 = vadd.f32 %v372, %v373
      %v375 = vrot.slane %v374, 1
      %v376 = vadd.f32 %v374, %v375
      %v377 = vrot.slane %v311, 4
      %v378 = vadd.f32 %v311, %v377
      %v379 = vrot.slane %v378, 2
      %v380 = vadd.f32 %v378, %v379
      %v381 = vrot.slane %v380, 1
      %v382 = vadd.f32 %v380, %v381
      %v383 = vrot.slane %v314, 4
      %v384 = vadd.f32 %v314, %v383
      %v385 = vrot.slane %v384, 2
      %v386 = vadd.f32 %v384, %v385
      %v387 = vrot.slane %v386, 1
      %v388 = vadd.f32 %v386, %v387
      %v389 = vrot.slane %v317, 4
      %v390 = vadd.f32 %v317, %v389
      %v391 = vrot.slane %v390, 2
      %v392 = vadd.f32 %v390, %v391
      %v393 = vrot.slane %v392, 1
      %v394 = vadd.f32 %v392, %v393
      %v395 = vrot.slane %v320, 4
      %v396 = vadd.f32 %v320, %v395
      %v397 = vrot.slane %v396, 2
      %v398 = vadd.f32 %v396, %v397
      %v399 = vrot.slane %v398, 1
      %v400 = vadd.f32 %v398, %v399
      %v401 = vrot.slane %v323, 4
      %v402 = vadd.f32 %v323, %v401
      %v403 = vrot.slane %v402, 2
      %v404 = vadd.f32 %v402, %v403
      %v405 = vrot.slane %v404, 1
      %v406 = vadd.f32 %v404, %v405
      %v407 = vrot.slane %v326, 4
      %v408 = vadd.f32 %v326, %v407
      %v409 = vrot.slane %v408, 2
      %v410 = vadd.f32 %v408, %v409
      %v411 = vrot.slane %v410, 1
      %v412 = vadd.f32 %v410, %v411
      %v413 = vrot.slane %v329, 4
      %v414 = vadd.f32 %v329, %v413
      %v415 = vrot.slane %v414, 2
      %v416 = vadd.f32 %v414, %v415
      %v417 = vrot.slane %v416, 1
      %v418 = vadd.f32 %v416, %v417
      %v419 = vrot.slane %v332, 4
      %v420 = vadd.f32 %v332, %v419
      %v421 = vrot.slane %v420, 2
      %v422 = vadd.f32 %v420, %v421
      %v423 = vrot.slane %v422, 1
      %v424 = vadd.f32 %v422, %v423
      %v425 = vrot.slane %v335, 4
      %v426 = vadd.f32 %v335, %v425
      %v427 = vrot.slane %v426, 2
      %v428 = vadd.f32 %v426, %v427
      %v429 = vrot.slane %v428, 1
      %v430 = vadd.f32 %v428, %v429
      %v431 = vrot.slane %v338, 4
      %v432 = vadd.f32 %v338, %v431
      %v433 = vrot.slane %v432, 2
      %v434 = vadd.f32 %v432, %v433
      %v435 = vrot.slane %v434, 1
      %v436 = vadd.f32 %v434, %v435
      %vm437 = vcmp.gt.f32.partialorder %v295, 0.0
      %vm438 = vcmp.gt.f32.partialorder %v298, 0.0
      %vm439 = vcmp.gt.f32.partialorder %v301, 0.0
      %vm440 = vcmp.gt.f32.partialorder %v304, 0.0
      %vm441 = vcmp.gt.f32.partialorder %v307, 0.0
      %vm442 = vcmp.gt.f32.partialorder %v310, 0.0
      %vm443 = vcmp.gt.f32.partialorder %v313, 0.0
      %vm444 = vcmp.gt.f32.partialorder %v316, 0.0
      %vm445 = vcmp.gt.f32.partialorder %v319, 0.0
      %vm446 = vcmp.gt.f32.partialorder %v322, 0.0
      %vm447 = vcmp.gt.f32.partialorder %v325, 0.0
      %vm448 = vcmp.gt.f32.partialorder %v328, 0.0
      %vm449 = vcmp.gt.f32.partialorder %v331, 0.0
      %vm450 = vcmp.gt.f32.partialorder %v334, 0.0
      %vm451 = vcmp.gt.f32.partialorder %v337, 0.0
      %vm452 = vcmp.gt.f32.partialorder %v340, 0.0
      %v453 = vrsqrt.pop %v295
      %v454 = vrsqrt.pop %v298
      %v455 = vrsqrt.pop %v301
      %v456 = vrsqrt.pop %v304
      %v457 = vrsqrt.pop %v307
      %v458 = vrsqrt.pop %v310
      %v459 = vrsqrt.pop %v313
      %v460 = vrsqrt.pop %v316
      %v461 = vrsqrt.pop %v319
      %v462 = vrsqrt.pop %v322
      %v463 = vrsqrt.pop %v325
      %v464 = vrsqrt.pop %v328
      %v465 = vrsqrt.pop %v331
      %v466 = vrsqrt.pop %v334
      %v467 = vrsqrt.pop %v337
      %v468 = vrsqrt.pop %v340
      %v469 = vsel %vm437, %v453, 0.0
      %v470 = vsel %vm438, %v454, 0.0
      %v471 = vsel %vm439, %v455, 0.0
      %v472 = vsel %vm440, %v456, 0.0
      %v473 = vsel %vm441, %v457, 0.0
      %v474 = vsel %vm442, %v458, 0.0
      %v475 = vsel %vm443, %v459, 0.0
      %v476 = vsel %vm444, %v460, 0.0
      %v477 = vsel %vm445, %v461, 0.0
      %v478 = vsel %vm446, %v462, 0.0
      %v479 = vsel %vm447, %v463, 0.0
      %v480 = vsel %vm448, %v464, 0.0
      %v481 = vsel %vm449, %v465, 0.0
      %v482 = vsel %vm450, %v466, 0.0
      %v483 = vsel %vm451, %v467, 0.0
      %v484 = vsel %vm452, %v468, 0.0
      %vm485 = vcmp.gt.f32.partialorder %v346, 0.0
      %vm486 = vcmp.gt.f32.partialorder %v352, 0.0
      %vm487 = vcmp.gt.f32.partialorder %v358, 0.0
      %vm488 = vcmp.gt.f32.partialorder %v364, 0.0
      %vm489 = vcmp.gt.f32.partialorder %v370, 0.0
      %vm490 = vcmp.gt.f32.partialorder %v376, 0.0
      %vm491 = vcmp.gt.f32.partialorder %v382, 0.0
      %vm492 = vcmp.gt.f32.partialorder %v388, 0.0
      %vm493 = vcmp.gt.f32.partialorder %v394, 0.0
      %vm494 = vcmp.gt.f32.partialorder %v400, 0.0
      %vm495 = vcmp.gt.f32.partialorder %v406, 0.0
      %vm496 = vcmp.gt.f32.partialorder %v412, 0.0
      %vm497 = vcmp.gt.f32.partialorder %v418, 0.0
      %vm498 = vcmp.gt.f32.partialorder %v424, 0.0
      %vm499 = vcmp.gt.f32.partialorder %v430, 0.0
      %vm500 = vcmp.gt.f32.partialorder %v436, 0.0
      %v501 = vrsqrt.pop %v346
      %v502 = vrsqrt.pop %v352
      %v503 = vrsqrt.pop %v358
      %v504 = vrsqrt.pop %v364
      %v505 = vrsqrt.pop %v370
      %v506 = vrsqrt.pop %v376
      %v507 = vrsqrt.pop %v382
      %v508 = vrsqrt.pop %v388
      %v509 = vrsqrt.pop %v394
      %v510 = vrsqrt.pop %v400
      %v511 = vrsqrt.pop %v406
      %v512 = vrsqrt.pop %v412
      %v513 = vrsqrt.pop %v418
      %v514 = vrsqrt.pop %v424
      %v515 = vrsqrt.pop %v430
      %v516 = vrsqrt.pop %v436
      %v517 = vsel %vm485, %v501, 0.0
      %v518 = vsel %vm486, %v502, 0.0
      %v519 = vsel %vm487, %v503, 0.0
      %v520 = vsel %vm488, %v504, 0.0
      %v521 = vsel %vm489, %v505, 0.0
      %v522 = vsel %vm490, %v506, 0.0
      %v523 = vsel %vm491, %v507, 0.0
      %v524 = vsel %vm492, %v508, 0.0
      %v525 = vsel %vm493, %v509, 0.0
      %v526 = vsel %vm494, %v510, 0.0
      %v527 = vsel %vm495, %v511, 0.0
      %v528 = vsel %vm496, %v512, 0.0
      %v529 = vsel %vm497, %v513, 0.0
      %v530 = vsel %vm498, %v514, 0.0
      %v531 = vsel %vm499, %v515, 0.0
      %v532 = vsel %vm500, %v516, 0.0
      %v533 = vmul.f32 %v469, %v276
      %v534 = vmul.f32 %v470, %v277
      %v535 = vmul.f32 %v471, %v278
      %v536 = vmul.f32 %v472, %v279
      %v537 = vmul.f32 %v473, %v280
      %v538 = vmul.f32 %v474, %v281
      %v539 = vmul.f32 %v475, %v282
      %v540 = vmul.f32 %v476, %v283
      %v541 = vmul.f32 %v477, %v284
      %v542 = vmul.f32 %v478, %v285
      %v543 = vmul.f32 %v479, %v286
      %v544 = vmul.f32 %v480, %v287
      %v545 = vmul.f32 %v481, %v288
      %v546 = vmul.f32 %v482, %v289
      %v547 = vmul.f32 %v483, %v290
      %v548 = vmul.f32 %v484, %v291
      %v549 = vmul.f32 %v533, %v517
      %v550 = vmul.f32 %v534, %v518
      %v551 = vmul.f32 %v535, %v519
      %v552 = vmul.f32 %v536, %v520
      %v553 = vmul.f32 %v537, %v521
      %v554 = vmul.f32 %v538, %v522
      %v555 = vmul.f32 %v539, %v523
      %v556 = vmul.f32 %v540, %v524
      %v557 = vmul.f32 %v541, %v525
      %v558 = vmul.f32 %v542, %v526
      %v559 = vmul.f32 %v543, %v527
      %v560 = vmul.f32 %v544, %v528
      %v561 = vmul.f32 %v545, %v529
      %v562 = vmul.f32 %v546, %v530
      %v563 = vmul.f32 %v547, %v531
      %v564 = vmul.f32 %v548, %v532
      %v565 = vld [vmem:[%s215] sm:$0xff]
      %v566 = vld [vmem:[%s215 + $0x8] sm:$0xff]
      %v567 = vld [vmem:[%s215 + $0x10] sm:$0xff]
      %v568 = vld [vmem:[%s215 + $0x18] sm:$0xff]
      %v569 = vld [vmem:[%s215 + $0x20] sm:$0xff]
      %v570 = vld [vmem:[%s215 + $0x28] sm:$0xff]
      %v571 = vld [vmem:[%s215 + $0x30] sm:$0xff]
      %v572 = vld [vmem:[%s215 + $0x38] sm:$0xff]
      %v573 = vld [vmem:[%s215 + $0x40] sm:$0xff]
      %v574 = vld [vmem:[%s215 + $0x48] sm:$0xff]
      %v575 = vld [vmem:[%s215 + $0x50] sm:$0xff]
      %v576 = vld [vmem:[%s215 + $0x58] sm:$0xff]
      %v577 = vld [vmem:[%s215 + $0x60] sm:$0xff]
      %v578 = vld [vmem:[%s215 + $0x68] sm:$0xff]
      %v579 = vld [vmem:[%s215 + $0x70] sm:$0xff]
      %v580 = vld [vmem:[%s215 + $0x78] sm:$0xff]
      %v581 = vld [vmem:[%s2] sm:$0xff]
      %v583 = vsel %vm292, %v565, 0
      %v586 = vsel %vm292, %v566, 0
      %v589 = vsel %vm292, %v567, 0
      %v592 = vsel %vm292, %v568, 0
      %v595 = vsel %vm292, %v569, 0
      %v598 = vsel %vm292, %v570, 0
      %v601 = vsel %vm292, %v571, 0
      %v604 = vsel %vm292, %v572, 0
      %v607 = vsel %vm292, %v573, 0
      %v610 = vsel %vm292, %v574, 0
      %v613 = vsel %vm292, %v575, 0
      %v616 = vsel %vm292, %v576, 0
      %v619 = vsel %vm292, %v577, 0
      %v622 = vsel %vm292, %v578, 0
      %v625 = vsel %vm292, %v579, 0
      %v628 = vsel %vm292, %v580, 0
      %630 = vmatprep.subr.mxu0 0.0
      %631 = vmatpush1.msra.mxu0 0.0
      %632 = vmatprep.subr.mxu0 0.0
      %633 = vmatpush1.msra.mxu0 0.0
      %634 = vmatprep.subr.mxu0 0.0
      %635 = vmatpush1.msra.mxu0 0.0
      %636 = vmatprep.subr.mxu0 0.0
      %637 = vmatpush1.msra.mxu0 0.0
      %638 = vmatprep.subr.mxu0 0.0
      %639 = vmatpush1.msra.mxu0 0.0
      %640 = vmatprep.subr.mxu0 0.0
      %641 = vmatpush1.msra.mxu0 0.0
      %642 = vmatprep.subr.mxu0 0.0
      %643 = vmatpush1.msra.mxu0 0.0
      %644 = vmatprep.subr.mxu0 0.0
      %645 = vmatpush1.msra.mxu0 0.0
      %646 = vmatprep.subr.mxu0 0.0
      %647 = vmatpush1.msra.mxu0 0.0
      %648 = vmatprep.subr.mxu0 0.0
      %649 = vmatpush1.msra.mxu0 0.0
      %650 = vmatprep.subr.mxu0 0.0
      %651 = vmatpush1.msra.mxu0 0.0
      %652 = vmatprep.subr.mxu0 0.0
      %653 = vmatpush1.msra.mxu0 0.0
      %654 = vmatprep.subr.mxu0 0.0
      %655 = vmatpush1.msra.mxu0 0.0
      %656 = vmatprep.subr.mxu0 0.0
      %657 = vmatpush1.msra.mxu0 0.0
      %658 = vmatprep.subr.mxu0 0.0
      %659 = vmatpush1.msra.mxu0 0.0
      %660 = vmatprep.subr.mxu0 0.0
      %661 = vmatpush1.msra.mxu0 %v581
      %662 = vmatprep.subr.mxu0 0.0
      %663 = vmatpush2.msra.mxu0 0.0
      %664 = vmatprep.subr.mxu0 0.0
      %665 = vmatpush2.msra.mxu0 0.0
      %666 = vmatprep.subr.mxu0 0.0
      %667 = vmatpush2.msra.mxu0 0.0
      %668 = vmatprep.subr.mxu0 0.0
      %669 = vmatpush2.msra.mxu0 0.0
      %670 = vmatprep.subr.mxu0 0.0
      %671 = vmatpush2.msra.mxu0 0.0
      %672 = vmatprep.subr.mxu0 0.0
      %673 = vmatpush2.msra.mxu0 0.0
      %674 = vmatprep.subr.mxu0 0.0
      %675 = vmatpush2.msra.mxu0 0.0
      %676 = vmatprep.subr.mxu0 0.0
      %677 = vmatpush2.msra.mxu0 0.0
      %678 = vmatprep.subr.mxu0 0.0
      %679 = vmatpush2.msra.mxu0 0.0
      %680 = vmatprep.subr.mxu0 0.0
      %681 = vmatpush2.msra.mxu0 0.0
      %682 = vmatprep.subr.mxu0 0.0
      %683 = vmatpush2.msra.mxu0 0.0
      %684 = vmatprep.subr.mxu0 0.0
      %685 = vmatpush2.msra.mxu0 0.0
      %686 = vmatprep.subr.mxu0 0.0
      %687 = vmatpush2.msra.mxu0 0.0
      %688 = vmatprep.subr.mxu0 0.0
      %689 = vmatpush2.msra.mxu0 0.0
      %690 = vmatprep.subr.mxu0 0.0
      %691 = vmatpush2.msra.mxu0 0.0
      %692 = vmatprep.subr.mxu0 0.0
      %693 = vmatpush2.msra.mxu0 0.0
      %694 = vmatprep.mubr.f32.mxu0 0.0
      %695 = vmatmul.mubr.f32.gmra.mxu0 %v583
      %v696 = vpop.f32.mrf.mxu0
      %v697 = vadd.f32 0.0, %v696
      %v698 = vpop.f32.mrf.mxu0
      %699 = vmatprep.mubr.f32.mxu0 0.0
      %700 = vmatmul.mubr.f32.gmra.mxu0 %v586
      %v701 = vpop.f32.mrf.mxu0
      %v702 = vadd.f32 0.0, %v701
      %v703 = vpop.f32.mrf.mxu0
      %704 = vmatprep.mubr.f32.mxu0 0.0
      %705 = vmatmul.mubr.f32.gmra.mxu0 %v589
      %v706 = vpop.f32.mrf.mxu0
      %v707 = vadd.f32 0.0, %v706
      %v708 = vpop.f32.mrf.mxu0
      %709 = vmatprep.mubr.f32.mxu0 0.0
      %710 = vmatmul.mubr.f32.gmra.mxu0 %v592
      %v711 = vpop.f32.mrf.mxu0
      %v712 = vadd.f32 0.0, %v711
      %v713 = vpop.f32.mrf.mxu0
      %714 = vmatprep.mubr.f32.mxu0 0.0
      %715 = vmatmul.mubr.f32.gmra.mxu0 %v595
      %v716 = vpop.f32.mrf.mxu0
      %v717 = vadd.f32 0.0, %v716
      %v718 = vpop.f32.mrf.mxu0
      %719 = vmatprep.mubr.f32.mxu0 0.0
      %720 = vmatmul.mubr.f32.gmra.mxu0 %v598
      %v721 = vpop.f32.mrf.mxu0
      %v722 = vadd.f32 0.0, %v721
      %v723 = vpop.f32.mrf.mxu0
      %724 = vmatprep.mubr.f32.mxu0 0.0
      %725 = vmatmul.mubr.f32.gmra.mxu0 %v601
      %v726 = vpop.f32.mrf.mxu0
      %v727 = vadd.f32 0.0, %v726
      %v728 = vpop.f32.mrf.mxu0
      %729 = vmatprep.mubr.f32.mxu0 0.0
      %730 = vmatmul.mubr.f32.gmra.mxu0 %v604
      %v731 = vpop.f32.mrf.mxu0
      %v732 = vadd.f32 0.0, %v731
      %v733 = vpop.f32.mrf.mxu0
      %734 = vmatprep.mubr.f32.mxu0 0.0
      %735 = vmatmul.mubr.f32.gmra.mxu0 %v607
      %v736 = vpop.f32.mrf.mxu0
      %v737 = vadd.f32 0.0, %v736
      %v738 = vpop.f32.mrf.mxu0
      %739 = vmatprep.mubr.f32.mxu0 0.0
      %740 = vmatmul.mubr.f32.gmra.mxu0 %v610
      %v741 = vpop.f32.mrf.mxu0
      %v742 = vadd.f32 0.0, %v741
      %v743 = vpop.f32.mrf.mxu0
      %744 = vmatprep.mubr.f32.mxu0 0.0
      %745 = vmatmul.mubr.f32.gmra.mxu0 %v613
      %v746 = vpop.f32.mrf.mxu0
      %v747 = vadd.f32 0.0, %v746
      %v748 = vpop.f32.mrf.mxu0
      %749 = vmatprep.mubr.f32.mxu0 0.0
      %750 = vmatmul.mubr.f32.gmra.mxu0 %v616
      %v751 = vpop.f32.mrf.mxu0
      %v752 = vadd.f32 0.0, %v751
      %v753 = vpop.f32.mrf.mxu0
      %754 = vmatprep.mubr.f32.mxu0 0.0
      %755 = vmatmul.mubr.f32.gmra.mxu0 %v619
      %v756 = vpop.f32.mrf.mxu0
      %v757 = vadd.f32 0.0, %v756
      %v758 = vpop.f32.mrf.mxu0
      %759 = vmatprep.mubr.f32.mxu0 0.0
      %760 = vmatmul.mubr.f32.gmra.mxu0 %v622
      %v761 = vpop.f32.mrf.mxu0
      %v762 = vadd.f32 0.0, %v761
      %v763 = vpop.f32.mrf.mxu0
      %764 = vmatprep.mubr.f32.mxu0 0.0
      %765 = vmatmul.mubr.f32.gmra.mxu0 %v625
      %v766 = vpop.f32.mrf.mxu0
      %v767 = vadd.f32 0.0, %v766
      %v768 = vpop.f32.mrf.mxu0
      %769 = vmatprep.mubr.f32.mxu0 0.0
      %770 = vmatmul.mubr.f32.gmra.mxu0 %v628
      %v771 = vpop.f32.mrf.mxu0
      %v772 = vadd.f32 0.0, %v771
      %v773 = vpop.f32.mrf.mxu0
      %774 = vdwg.mxu0
      %v775 = vld [vmem:[%s3] sm:$0x1]
      %v776 = vlaneseq
      %v777 = vshrl.u32 %v776, 7
      %v778 = vsub.s32 0, %v777
      %v779 = vrot.slane %v775, %v778
      %v781 = vsel %vm292, %v549, 0
      %783 = vmatprep.subr.mxu0 0.0
      %784 = vmatpush1.msra.mxu0 0.0
      %785 = vmatprep.subr.mxu0 0.0
      %786 = vmatpush1.msra.mxu0 0.0
      %787 = vmatprep.subr.mxu0 0.0
      %788 = vmatpush1.msra.mxu0 0.0
      %789 = vmatprep.subr.mxu0 0.0
      %790 = vmatpush1.msra.mxu0 0.0
      %791 = vmatprep.subr.mxu0 0.0
      %792 = vmatpush1.msra.mxu0 0.0
      %793 = vmatprep.subr.mxu0 0.0
      %794 = vmatpush1.msra.mxu0 0.0
      %795 = vmatprep.subr.mxu0 0.0
      %796 = vmatpush1.msra.mxu0 0.0
      %797 = vmatprep.subr.mxu0 0.0
      %798 = vmatpush1.msra.mxu0 0.0
      %799 = vmatprep.subr.mxu0 0.0
      %800 = vmatpush1.msra.mxu0 0.0
      %801 = vmatprep.subr.mxu0 0.0
      %802 = vmatpush1.msra.mxu0 0.0
      %803 = vmatprep.subr.mxu0 0.0
      %804 = vmatpush1.msra.mxu0 0.0
      %805 = vmatprep.subr.mxu0 0.0
      %806 = vmatpush1.msra.mxu0 0.0
      %807 = vmatprep.subr.mxu0 0.0
      %808 = vmatpush1.msra.mxu0 0.0
      %809 = vmatprep.subr.mxu0 0.0
      %810 = vmatpush1.msra.mxu0 0.0
      %811 = vmatprep.subr.mxu0 0.0
      %812 = vmatpush1.msra.mxu0 0.0
      %813 = vmatprep.subr.mxu0 0.0
      %814 = vmatpush1.msra.mxu0 %v697
      %815 = vmatprep.subr.mxu0 0.0
      %816 = vmatpush2.msra.mxu0 0.0
      %817 = vmatprep.subr.mxu0 0.0
      %818 = vmatpush2.msra.mxu0 0.0
      %819 = vmatprep.subr.mxu0 0.0
      %820 = vmatpush2.msra.mxu0 0.0
      %821 = vmatprep.subr.mxu0 0.0
      %822 = vmatpush2.msra.mxu0 0.0
      %823 = vmatprep.subr.mxu0 0.0
      %824 = vmatpush2.msra.mxu0 0.0
      %825 = vmatprep.subr.mxu0 0.0
      %826 = vmatpush2.msra.mxu0 0.0
      %827 = vmatprep.subr.mxu0 0.0
      %828 = vmatpush2.msra.mxu0 0.0
      %829 = vmatprep.subr.mxu0 0.0
      %830 = vmatpush2.msra.mxu0 0.0
      %831 = vmatprep.subr.mxu0 0.0
      %832 = vmatpush2.msra.mxu0 0.0
      %833 = vmatprep.subr.mxu0 0.0
      %834 = vmatpush2.msra.mxu0 0.0
      %835 = vmatprep.subr.mxu0 0.0
      %836 = vmatpush2.msra.mxu0 0.0
      %837 = vmatprep.subr.mxu0 0.0
      %838 = vmatpush2.msra.mxu0 0.0
      %839 = vmatprep.subr.mxu0 0.0
      %840 = vmatpush2.msra.mxu0 0.0
      %841 = vmatprep.subr.mxu0 0.0
      %842 = vmatpush2.msra.mxu0 0.0
      %843 = vmatprep.subr.mxu0 0.0
      %844 = vmatpush2.msra.mxu0 0.0
      %845 = vmatprep.subr.mxu0 0.0
      %846 = vmatpush2.msra.mxu0 0.0
      %847 = vmatprep.mubr.f32.mxu0 0.0
      %848 = vmatmul.mubr.f32.gmra.mxu0 %v781
      %v849 = vpop.f32.mrf.mxu0
      %v850 = vadd.f32 %v779, %v849
      %v851 = vpop.f32.mrf.mxu0
      %852 = vdwg.mxu0
      %v854 = vsel %vm292, %v550, 0
      %856 = vmatprep.subr.mxu0 0.0
      %857 = vmatpush1.msra.mxu0 0.0
      %858 = vmatprep.subr.mxu0 0.0
      %859 = vmatpush1.msra.mxu0 0.0
      %860 = vmatprep.subr.mxu0 0.0
      %861 = vmatpush1.msra.mxu0 0.0
      %862 = vmatprep.subr.mxu0 0.0
      %863 = vmatpush1.msra.mxu0 0.0
      %864 = vmatprep.subr.mxu0 0.0
      %865 = vmatpush1.msra.mxu0 0.0
      %866 = vmatprep.subr.mxu0 0.0
      %867 = vmatpush1.msra.mxu0 0.0
      %868 = vmatprep.subr.mxu0 0.0
      %869 = vmatpush1.msra.mxu0 0.0
      %870 = vmatprep.subr.mxu0 0.0
      %871 = vmatpush1.msra.mxu0 0.0
      %872 = vmatprep.subr.mxu0 0.0
      %873 = vmatpush1.msra.mxu0 0.0
      %874 = vmatprep.subr.mxu0 0.0
      %875 = vmatpush1.msra.mxu0 0.0
      %876 = vmatprep.subr.mxu0 0.0
      %877 = vmatpush1.msra.mxu0 0.0
      %878 = vmatprep.subr.mxu0 0.0
      %879 = vmatpush1.msra.mxu0 0.0
      %880 = vmatprep.subr.mxu0 0.0
      %881 = vmatpush1.msra.mxu0 0.0
      %882 = vmatprep.subr.mxu0 0.0
      %883 = vmatpush1.msra.mxu0 0.0
      %884 = vmatprep.subr.mxu0 0.0
      %885 = vmatpush1.msra.mxu0 0.0
      %886 = vmatprep.subr.mxu0 0.0
      %887 = vmatpush1.msra.mxu0 %v702
      %888 = vmatprep.subr.mxu0 0.0
      %889 = vmatpush2.msra.mxu0 0.0
      %890 = vmatprep.subr.mxu0 0.0
      %891 = vmatpush2.msra.mxu0 0.0
      %892 = vmatprep.subr.mxu0 0.0
      %893 = vmatpush2.msra.mxu0 0.0
      %894 = vmatprep.subr.mxu0 0.0
      %895 = vmatpush2.msra.mxu0 0.0
      %896 = vmatprep.subr.mxu0 0.0
      %897 = vmatpush2.msra.mxu0 0.0
      %898 = vmatprep.subr.mxu0 0.0
      %899 = vmatpush2.msra.mxu0 0.0
      %900 = vmatprep.subr.mxu0 0.0
      %901 = vmatpush2.msra.mxu0 0.0
      %902 = vmatprep.subr.mxu0 0.0
      %903 = vmatpush2.msra.mxu0 0.0
      %904 = vmatprep.subr.mxu0 0.0
      %905 = vmatpush2.msra.mxu0 0.0
      %906 = vmatprep.subr.mxu0 0.0
      %907 = vmatpush2.msra.mxu0 0.0
      %908 = vmatprep.subr.mxu0 0.0
      %909 = vmatpush2.msra.mxu0 0.0
      %910 = vmatprep.subr.mxu0 0.0
      %911 = vmatpush2.msra.mxu0 0.0
      %912 = vmatprep.subr.mxu0 0.0
      %913 = vmatpush2.msra.mxu0 0.0
      %914 = vmatprep.subr.mxu0 0.0
      %915 = vmatpush2.msra.mxu0 0.0
      %916 = vmatprep.subr.mxu0 0.0
      %917 = vmatpush2.msra.mxu0 0.0
      %918 = vmatprep.subr.mxu0 0.0
      %919 = vmatpush2.msra.mxu0 0.0
      %920 = vmatprep.mubr.f32.mxu0 0.0
      %921 = vmatmul.mubr.f32.gmra.mxu0 %v854
      %v922 = vpop.f32.mrf.mxu0
      %v923 = vadd.f32 %v779, %v922
      %v924 = vpop.f32.mrf.mxu0
      %925 = vdwg.mxu0
      %v927 = vsel %vm292, %v551, 0
      %929 = vmatprep.subr.mxu0 0.0
      %930 = vmatpush1.msra.mxu0 0.0
      %931 = vmatprep.subr.mxu0 0.0
      %932 = vmatpush1.msra.mxu0 0.0
      %933 = vmatprep.subr.mxu0 0.0
      %934 = vmatpush1.msra.mxu0 0.0
      %935 = vmatprep.subr.mxu0 0.0
      %936 = vmatpush1.msra.mxu0 0.0
      %937 = vmatprep.subr.mxu0 0.0
      %938 = vmatpush1.msra.mxu0 0.0
      %939 = vmatprep.subr.mxu0 0.0
      %940 = vmatpush1.msra.mxu0 0.0
      %941 = vmatprep.subr.mxu0 0.0
      %942 = vmatpush1.msra.mxu0 0.0
      %943 = vmatprep.subr.mxu0 0.0
      %944 = vmatpush1.msra.mxu0 0.0
      %945 = vmatprep.subr.mxu0 0.0
      %946 = vmatpush1.msra.mxu0 0.0
      %947 = vmatprep.subr.mxu0 0.0
      %948 = vmatpush1.msra.mxu0 0.0
      %949 = vmatprep.subr.mxu0 0.0
      %950 = vmatpush1.msra.mxu0 0.0
      %951 = vmatprep.subr.mxu0 0.0
      %952 = vmatpush1.msra.mxu0 0.0
      %953 = vmatprep.subr.mxu0 0.0
      %954 = vmatpush1.msra.mxu0 0.0
      %955 = vmatprep.subr.mxu0 0.0
      %956 = vmatpush1.msra.mxu0 0.0
      %957 = vmatprep.subr.mxu0 0.0
      %958 = vmatpush1.msra.mxu0 0.0
      %959 = vmatprep.subr.mxu0 0.0
      %960 = vmatpush1.msra.mxu0 %v707
      %961 = vmatprep.subr.mxu0 0.0
      %962 = vmatpush2.msra.mxu0 0.0
      %963 = vmatprep.subr.mxu0 0.0
      %964 = vmatpush2.msra.mxu0 0.0
      %965 = vmatprep.subr.mxu0 0.0
      %966 = vmatpush2.msra.mxu0 0.0
      %967 = vmatprep.subr.mxu0 0.0
      %968 = vmatpush2.msra.mxu0 0.0
      %969 = vmatprep.subr.mxu0 0.0
      %970 = vmatpush2.msra.mxu0 0.0
      %971 = vmatprep.subr.mxu0 0.0
      %972 = vmatpush2.msra.mxu0 0.0
      %973 = vmatprep.subr.mxu0 0.0
      %974 = vmatpush2.msra.mxu0 0.0
      %975 = vmatprep.subr.mxu0 0.0
      %976 = vmatpush2.msra.mxu0 0.0
      %977 = vmatprep.subr.mxu0 0.0
      %978 = vmatpush2.msra.mxu0 0.0
      %979 = vmatprep.subr.mxu0 0.0
      %980 = vmatpush2.msra.mxu0 0.0
      %981 = vmatprep.subr.mxu0 0.0
      %982 = vmatpush2.msra.mxu0 0.0
      %983 = vmatprep.subr.mxu0 0.0
      %984 = vmatpush2.msra.mxu0 0.0
      %985 = vmatprep.subr.mxu0 0.0
      %986 = vmatpush2.msra.mxu0 0.0
      %987 = vmatprep.subr.mxu0 0.0
      %988 = vmatpush2.msra.mxu0 0.0
      %989 = vmatprep.subr.mxu0 0.0
      %990 = vmatpush2.msra.mxu0 0.0
      %991 = vmatprep.subr.mxu0 0.0
      %992 = vmatpush2.msra.mxu0 0.0
      %993 = vmatprep.mubr.f32.mxu0 0.0
      %994 = vmatmul.mubr.f32.gmra.mxu0 %v927
      %v995 = vpop.f32.mrf.mxu0
      %v996 = vadd.f32 %v779, %v995
      %v997 = vpop.f32.mrf.mxu0
      %998 = vdwg.mxu0
      %v1000 = vsel %vm292, %v552, 0
      %1002 = vmatprep.subr.mxu0 0.0
      %1003 = vmatpush1.msra.mxu0 0.0
      %1004 = vmatprep.subr.mxu0 0.0
      %1005 = vmatpush1.msra.mxu0 0.0
      %1006 = vmatprep.subr.mxu0 0.0
      %1007 = vmatpush1.msra.mxu0 0.0
      %1008 = vmatprep.subr.mxu0 0.0
      %1009 = vmatpush1.msra.mxu0 0.0
      %1010 = vmatprep.subr.mxu0 0.0
      %1011 = vmatpush1.msra.mxu0 0.0
      %1012 = vmatprep.subr.mxu0 0.0
      %1013 = vmatpush1.msra.mxu0 0.0
      %1014 = vmatprep.subr.mxu0 0.0
      %1015 = vmatpush1.msra.mxu0 0.0
      %1016 = vmatprep.subr.mxu0 0.0
      %1017 = vmatpush1.msra.mxu0 0.0
      %1018 = vmatprep.subr.mxu0 0.0
      %1019 = vmatpush1.msra.mxu0 0.0
      %1020 = vmatprep.subr.mxu0 0.0
      %1021 = vmatpush1.msra.mxu0 0.0
      %1022 = vmatprep.subr.mxu0 0.0
      %1023 = vmatpush1.msra.mxu0 0.0
      %1024 = vmatprep.subr.mxu0 0.0
      %1025 = vmatpush1.msra.mxu0 0.0
      %1026 = vmatprep.subr.mxu0 0.0
      %1027 = vmatpush1.msra.mxu0 0.0
      %1028 = vmatprep.subr.mxu0 0.0
      %1029 = vmatpush1.msra.mxu0 0.0
      %1030 = vmatprep.subr.mxu0 0.0
      %1031 = vmatpush1.msra.mxu0 0.0
      %1032 = vmatprep.subr.mxu0 0.0
      %1033 = vmatpush1.msra.mxu0 %v712
      %1034 = vmatprep.subr.mxu0 0.0
      %1035 = vmatpush2.msra.mxu0 0.0
      %1036 = vmatprep.subr.mxu0 0.0
      %1037 = vmatpush2.msra.mxu0 0.0
      %1038 = vmatprep.subr.mxu0 0.0
      %1039 = vmatpush2.msra.mxu0 0.0
      %1040 = vmatprep.subr.mxu0 0.0
      %1041 = vmatpush2.msra.mxu0 0.0
      %1042 = vmatprep.subr.mxu0 0.0
      %1043 = vmatpush2.msra.mxu0 0.0
      %1044 = vmatprep.subr.mxu0 0.0
      %1045 = vmatpush2.msra.mxu0 0.0
      %1046 = vmatprep.subr.mxu0 0.0
      %1047 = vmatpush2.msra.mxu0 0.0
      %1048 = vmatprep.subr.mxu0 0.0
      %1049 = vmatpush2.msra.mxu0 0.0
      %1050 = vmatprep.subr.mxu0 0.0
      %1051 = vmatpush2.msra.mxu0 0.0
      %1052 = vmatprep.subr.mxu0 0.0
      %1053 = vmatpush2.msra.mxu0 0.0
      %1054 = vmatprep.subr.mxu0 0.0
      %1055 = vmatpush2.msra.mxu0 0.0
      %1056 = vmatprep.subr.mxu0 0.0
      %1057 = vmatpush2.msra.mxu0 0.0
      %1058 = vmatprep.subr.mxu0 0.0
      %1059 = vmatpush2.msra.mxu0 0.0
      %1060 = vmatprep.subr.mxu0 0.0
      %1061 = vmatpush2.msra.mxu0 0.0
      %1062 = vmatprep.subr.mxu0 0.0
      %1063 = vmatpush2.msra.mxu0 0.0
      %1064 = vmatprep.subr.mxu0 0.0
      %1065 = vmatpush2.msra.mxu0 0.0
      %1066 = vmatprep.mubr.f32.mxu0 0.0
      %1067 = vmatmul.mubr.f32.gmra.mxu0 %v1000
      %v1068 = vpop.f32.mrf.mxu0
      %v1069 = vadd.f32 %v779, %v1068
      %v1070 = vpop.f32.mrf.mxu0
      %1071 = vdwg.mxu0
      %v1073 = vsel %vm292, %v553, 0
      %1075 = vmatprep.subr.mxu0 0.0
      %1076 = vmatpush1.msra.mxu0 0.0
      %1077 = vmatprep.subr.mxu0 0.0
      %1078 = vmatpush1.msra.mxu0 0.0
      %1079 = vmatprep.subr.mxu0 0.0
      %1080 = vmatpush1.msra.mxu0 0.0
      %1081 = vmatprep.subr.mxu0 0.0
      %1082 = vmatpush1.msra.mxu0 0.0
      %1083 = vmatprep.subr.mxu0 0.0
      %1084 = vmatpush1.msra.mxu0 0.0
      %1085 = vmatprep.subr.mxu0 0.0
      %1086 = vmatpush1.msra.mxu0 0.0
      %1087 = vmatprep.subr.mxu0 0.0
      %1088 = vmatpush1.msra.mxu0 0.0
      %1089 = vmatprep.subr.mxu0 0.0
      %1090 = vmatpush1.msra.mxu0 0.0
      %1091 = vmatprep.subr.mxu0 0.0
      %1092 = vmatpush1.msra.mxu0 0.0
      %1093 = vmatprep.subr.mxu0 0.0
      %1094 = vmatpush1.msra.mxu0 0.0
      %1095 = vmatprep.subr.mxu0 0.0
      %1096 = vmatpush1.msra.mxu0 0.0
      %1097 = vmatprep.subr.mxu0 0.0
      %1098 = vmatpush1.msra.mxu0 0.0
      %1099 = vmatprep.subr.mxu0 0.0
      %1100 = vmatpush1.msra.mxu0 0.0
      %1101 = vmatprep.subr.mxu0 0.0
      %1102 = vmatpush1.msra.mxu0 0.0
      %1103 = vmatprep.subr.mxu0 0.0
      %1104 = vmatpush1.msra.mxu0 0.0
      %1105 = vmatprep.subr.mxu0 0.0
      %1106 = vmatpush1.msra.mxu0 %v717
      %1107 = vmatprep.subr.mxu0 0.0
      %1108 = vmatpush2.msra.mxu0 0.0
      %1109 = vmatprep.subr.mxu0 0.0
      %1110 = vmatpush2.msra.mxu0 0.0
      %1111 = vmatprep.subr.mxu0 0.0
      %1112 = vmatpush2.msra.mxu0 0.0
      %1113 = vmatprep.subr.mxu0 0.0
      %1114 = vmatpush2.msra.mxu0 0.0
      %1115 = vmatprep.subr.mxu0 0.0
      %1116 = vmatpush2.msra.mxu0 0.0
      %1117 = vmatprep.subr.mxu0 0.0
      %1118 = vmatpush2.msra.mxu0 0.0
      %1119 = vmatprep.subr.mxu0 0.0
      %1120 = vmatpush2.msra.mxu0 0.0
      %1121 = vmatprep.subr.mxu0 0.0
      %1122 = vmatpush2.msra.mxu0 0.0
      %1123 = vmatprep.subr.mxu0 0.0
      %1124 = vmatpush2.msra.mxu0 0.0
      %1125 = vmatprep.subr.mxu0 0.0
      %1126 = vmatpush2.msra.mxu0 0.0
      %1127 = vmatprep.subr.mxu0 0.0
      %1128 = vmatpush2.msra.mxu0 0.0
      %1129 = vmatprep.subr.mxu0 0.0
      %1130 = vmatpush2.msra.mxu0 0.0
      %1131 = vmatprep.subr.mxu0 0.0
      %1132 = vmatpush2.msra.mxu0 0.0
      %1133 = vmatprep.subr.mxu0 0.0
      %1134 = vmatpush2.msra.mxu0 0.0
      %1135 = vmatprep.subr.mxu0 0.0
      %1136 = vmatpush2.msra.mxu0 0.0
      %1137 = vmatprep.subr.mxu0 0.0
      %1138 = vmatpush2.msra.mxu0 0.0
      %1139 = vmatprep.mubr.f32.mxu0 0.0
      %1140 = vmatmul.mubr.f32.gmra.mxu0 %v1073
      %v1141 = vpop.f32.mrf.mxu0
      %v1142 = vadd.f32 %v779, %v1141
      %v1143 = vpop.f32.mrf.mxu0
      %1144 = vdwg.mxu0
      %v1146 = vsel %vm292, %v554, 0
      %1148 = vmatprep.subr.mxu0 0.0
      %1149 = vmatpush1.msra.mxu0 0.0
      %1150 = vmatprep.subr.mxu0 0.0
      %1151 = vmatpush1.msra.mxu0 0.0
      %1152 = vmatprep.subr.mxu0 0.0
      %1153 = vmatpush1.msra.mxu0 0.0
      %1154 = vmatprep.subr.mxu0 0.0
      %1155 = vmatpush1.msra.mxu0 0.0
      %1156 = vmatprep.subr.mxu0 0.0
      %1157 = vmatpush1.msra.mxu0 0.0
      %1158 = vmatprep.subr.mxu0 0.0
      %1159 = vmatpush1.msra.mxu0 0.0
      %1160 = vmatprep.subr.mxu0 0.0
      %1161 = vmatpush1.msra.mxu0 0.0
      %1162 = vmatprep.subr.mxu0 0.0
      %1163 = vmatpush1.msra.mxu0 0.0
      %1164 = vmatprep.subr.mxu0 0.0
      %1165 = vmatpush1.msra.mxu0 0.0
      %1166 = vmatprep.subr.mxu0 0.0
      %1167 = vmatpush1.msra.mxu0 0.0
      %1168 = vmatprep.subr.mxu0 0.0
      %1169 = vmatpush1.msra.mxu0 0.0
      %1170 = vmatprep.subr.mxu0 0.0
      %1171 = vmatpush1.msra.mxu0 0.0
      %1172 = vmatprep.subr.mxu0 0.0
      %1173 = vmatpush1.msra.mxu0 0.0
      %1174 = vmatprep.subr.mxu0 0.0
      %1175 = vmatpush1.msra.mxu0 0.0
      %1176 = vmatprep.subr.mxu0 0.0
      %1177 = vmatpush1.msra.mxu0 0.0
      %1178 = vmatprep.subr.mxu0 0.0
      %1179 = vmatpush1.msra.mxu0 %v722
      %1180 = vmatprep.subr.mxu0 0.0
      %1181 = vmatpush2.msra.mxu0 0.0
      %1182 = vmatprep.subr.mxu0 0.0
      %1183 = vmatpush2.msra.mxu0 0.0
      %1184 = vmatprep.subr.mxu0 0.0
      %1185 = vmatpush2.msra.mxu0 0.0
      %1186 = vmatprep.subr.mxu0 0.0
      %1187 = vmatpush2.msra.mxu0 0.0
      %1188 = vmatprep.subr.mxu0 0.0
      %1189 = vmatpush2.msra.mxu0 0.0
      %1190 = vmatprep.subr.mxu0 0.0
      %1191 = vmatpush2.msra.mxu0 0.0
      %1192 = vmatprep.subr.mxu0 0.0
      %1193 = vmatpush2.msra.mxu0 0.0
      %1194 = vmatprep.subr.mxu0 0.0
      %1195 = vmatpush2.msra.mxu0 0.0
      %1196 = vmatprep.subr.mxu0 0.0
      %1197 = vmatpush2.msra.mxu0 0.0
      %1198 = vmatprep.subr.mxu0 0.0
      %1199 = vmatpush2.msra.mxu0 0.0
      %1200 = vmatprep.subr.mxu0 0.0
      %1201 = vmatpush2.msra.mxu0 0.0
      %1202 = vmatprep.subr.mxu0 0.0
      %1203 = vmatpush2.msra.mxu0 0.0
      %1204 = vmatprep.subr.mxu0 0.0
      %1205 = vmatpush2.msra.mxu0 0.0
      %1206 = vmatprep.subr.mxu0 0.0
      %1207 = vmatpush2.msra.mxu0 0.0
      %1208 = vmatprep.subr.mxu0 0.0
      %1209 = vmatpush2.msra.mxu0 0.0
      %1210 = vmatprep.subr.mxu0 0.0
      %1211 = vmatpush2.msra.mxu0 0.0
      %1212 = vmatprep.mubr.f32.mxu0 0.0
      %1213 = vmatmul.mubr.f32.gmra.mxu0 %v1146
      %v1214 = vpop.f32.mrf.mxu0
      %v1215 = vadd.f32 %v779, %v1214
      %v1216 = vpop.f32.mrf.mxu0
      %1217 = vdwg.mxu0
      %v1219 = vsel %vm292, %v555, 0
      %1221 = vmatprep.subr.mxu0 0.0
      %1222 = vmatpush1.msra.mxu0 0.0
      %1223 = vmatprep.subr.mxu0 0.0
      %1224 = vmatpush1.msra.mxu0 0.0
      %1225 = vmatprep.subr.mxu0 0.0
      %1226 = vmatpush1.msra.mxu0 0.0
      %1227 = vmatprep.subr.mxu0 0.0
      %1228 = vmatpush1.msra.mxu0 0.0
      %1229 = vmatprep.subr.mxu0 0.0
      %1230 = vmatpush1.msra.mxu0 0.0
      %1231 = vmatprep.subr.mxu0 0.0
      %1232 = vmatpush1.msra.mxu0 0.0
      %1233 = vmatprep.subr.mxu0 0.0
      %1234 = vmatpush1.msra.mxu0 0.0
      %1235 = vmatprep.subr.mxu0 0.0
      %1236 = vmatpush1.msra.mxu0 0.0
      %1237 = vmatprep.subr.mxu0 0.0
      %1238 = vmatpush1.msra.mxu0 0.0
      %1239 = vmatprep.subr.mxu0 0.0
      %1240 = vmatpush1.msra.mxu0 0.0
      %1241 = vmatprep.subr.mxu0 0.0
      %1242 = vmatpush1.msra.mxu0 0.0
      %1243 = vmatprep.subr.mxu0 0.0
      %1244 = vmatpush1.msra.mxu0 0.0
      %1245 = vmatprep.subr.mxu0 0.0
      %1246 = vmatpush1.msra.mxu0 0.0
      %1247 = vmatprep.subr.mxu0 0.0
      %1248 = vmatpush1.msra.mxu0 0.0
      %1249 = vmatprep.subr.mxu0 0.0
      %1250 = vmatpush1.msra.mxu0 0.0
      %1251 = vmatprep.subr.mxu0 0.0
      %1252 = vmatpush1.msra.mxu0 %v727
      %1253 = vmatprep.subr.mxu0 0.0
      %1254 = vmatpush2.msra.mxu0 0.0
      %1255 = vmatprep.subr.mxu0 0.0
      %1256 = vmatpush2.msra.mxu0 0.0
      %1257 = vmatprep.subr.mxu0 0.0
      %1258 = vmatpush2.msra.mxu0 0.0
      %1259 = vmatprep.subr.mxu0 0.0
      %1260 = vmatpush2.msra.mxu0 0.0
      %1261 = vmatprep.subr.mxu0 0.0
      %1262 = vmatpush2.msra.mxu0 0.0
      %1263 = vmatprep.subr.mxu0 0.0
      %1264 = vmatpush2.msra.mxu0 0.0
      %1265 = vmatprep.subr.mxu0 0.0
      %1266 = vmatpush2.msra.mxu0 0.0
      %1267 = vmatprep.subr.mxu0 0.0
      %1268 = vmatpush2.msra.mxu0 0.0
      %1269 = vmatprep.subr.mxu0 0.0
      %1270 = vmatpush2.msra.mxu0 0.0
      %1271 = vmatprep.subr.mxu0 0.0
      %1272 = vmatpush2.msra.mxu0 0.0
      %1273 = vmatprep.subr.mxu0 0.0
      %1274 = vmatpush2.msra.mxu0 0.0
      %1275 = vmatprep.subr.mxu0 0.0
      %1276 = vmatpush2.msra.mxu0 0.0
      %1277 = vmatprep.subr.mxu0 0.0
      %1278 = vmatpush2.msra.mxu0 0.0
      %1279 = vmatprep.subr.mxu0 0.0
      %1280 = vmatpush2.msra.mxu0 0.0
      %1281 = vmatprep.subr.mxu0 0.0
      %1282 = vmatpush2.msra.mxu0 0.0
      %1283 = vmatprep.subr.mxu0 0.0
      %1284 = vmatpush2.msra.mxu0 0.0
      %1285 = vmatprep.mubr.f32.mxu0 0.0
      %1286 = vmatmul.mubr.f32.gmra.mxu0 %v1219
      %v1287 = vpop.f32.mrf.mxu0
      %v1288 = vadd.f32 %v779, %v1287
      %v1289 = vpop.f32.mrf.mxu0
      %1290 = vdwg.mxu0
      %v1292 = vsel %vm292, %v556, 0
      %1294 = vmatprep.subr.mxu0 0.0
      %1295 = vmatpush1.msra.mxu0 0.0
      %1296 = vmatprep.subr.mxu0 0.0
      %1297 = vmatpush1.msra.mxu0 0.0
      %1298 = vmatprep.subr.mxu0 0.0
      %1299 = vmatpush1.msra.mxu0 0.0
      %1300 = vmatprep.subr.mxu0 0.0
      %1301 = vmatpush1.msra.mxu0 0.0
      %1302 = vmatprep.subr.mxu0 0.0
      %1303 = vmatpush1.msra.mxu0 0.0
      %1304 = vmatprep.subr.mxu0 0.0
      %1305 = vmatpush1.msra.mxu0 0.0
      %1306 = vmatprep.subr.mxu0 0.0
      %1307 = vmatpush1.msra.mxu0 0.0
      %1308 = vmatprep.subr.mxu0 0.0
      %1309 = vmatpush1.msra.mxu0 0.0
      %1310 = vmatprep.subr.mxu0 0.0
      %1311 = vmatpush1.msra.mxu0 0.0
      %1312 = vmatprep.subr.mxu0 0.0
      %1313 = vmatpush1.msra.mxu0 0.0
      %1314 = vmatprep.subr.mxu0 0.0
      %1315 = vmatpush1.msra.mxu0 0.0
      %1316 = vmatprep.subr.mxu0 0.0
      %1317 = vmatpush1.msra.mxu0 0.0
      %1318 = vmatprep.subr.mxu0 0.0
      %1319 = vmatpush1.msra.mxu0 0.0
      %1320 = vmatprep.subr.mxu0 0.0
      %1321 = vmatpush1.msra.mxu0 0.0
      %1322 = vmatprep.subr.mxu0 0.0
      %1323 = vmatpush1.msra.mxu0 0.0
      %1324 = vmatprep.subr.mxu0 0.0
      %1325 = vmatpush1.msra.mxu0 %v732
      %1326 = vmatprep.subr.mxu0 0.0
      %1327 = vmatpush2.msra.mxu0 0.0
      %1328 = vmatprep.subr.mxu0 0.0
      %1329 = vmatpush2.msra.mxu0 0.0
      %1330 = vmatprep.subr.mxu0 0.0
      %1331 = vmatpush2.msra.mxu0 0.0
      %1332 = vmatprep.subr.mxu0 0.0
      %1333 = vmatpush2.msra.mxu0 0.0
      %1334 = vmatprep.subr.mxu0 0.0
      %1335 = vmatpush2.msra.mxu0 0.0
      %1336 = vmatprep.subr.mxu0 0.0
      %1337 = vmatpush2.msra.mxu0 0.0
      %1338 = vmatprep.subr.mxu0 0.0
      %1339 = vmatpush2.msra.mxu0 0.0
      %1340 = vmatprep.subr.mxu0 0.0
      %1341 = vmatpush2.msra.mxu0 0.0
      %1342 = vmatprep.subr.mxu0 0.0
      %1343 = vmatpush2.msra.mxu0 0.0
      %1344 = vmatprep.subr.mxu0 0.0
      %1345 = vmatpush2.msra.mxu0 0.0
      %1346 = vmatprep.subr.mxu0 0.0
      %1347 = vmatpush2.msra.mxu0 0.0
      %1348 = vmatprep.subr.mxu0 0.0
      %1349 = vmatpush2.msra.mxu0 0.0
      %1350 = vmatprep.subr.mxu0 0.0
      %1351 = vmatpush2.msra.mxu0 0.0
      %1352 = vmatprep.subr.mxu0 0.0
      %1353 = vmatpush2.msra.mxu0 0.0
      %1354 = vmatprep.subr.mxu0 0.0
      %1355 = vmatpush2.msra.mxu0 0.0
      %1356 = vmatprep.subr.mxu0 0.0
      %1357 = vmatpush2.msra.mxu0 0.0
      %1358 = vmatprep.mubr.f32.mxu0 0.0
      %1359 = vmatmul.mubr.f32.gmra.mxu0 %v1292
      %v1360 = vpop.f32.mrf.mxu0
      %v1361 = vadd.f32 %v779, %v1360
      %v1362 = vpop.f32.mrf.mxu0
      %1363 = vdwg.mxu0
      %v1365 = vsel %vm292, %v557, 0
      %1367 = vmatprep.subr.mxu0 0.0
      %1368 = vmatpush1.msra.mxu0 0.0
      %1369 = vmatprep.subr.mxu0 0.0
      %1370 = vmatpush1.msra.mxu0 0.0
      %1371 = vmatprep.subr.mxu0 0.0
      %1372 = vmatpush1.msra.mxu0 0.0
      %1373 = vmatprep.subr.mxu0 0.0
      %1374 = vmatpush1.msra.mxu0 0.0
      %1375 = vmatprep.subr.mxu0 0.0
      %1376 = vmatpush1.msra.mxu0 0.0
      %1377 = vmatprep.subr.mxu0 0.0
      %1378 = vmatpush1.msra.mxu0 0.0
      %1379 = vmatprep.subr.mxu0 0.0
      %1380 = vmatpush1.msra.mxu0 0.0
      %1381 = vmatprep.subr.mxu0 0.0
      %1382 = vmatpush1.msra.mxu0 0.0
      %1383 = vmatprep.subr.mxu0 0.0
      %1384 = vmatpush1.msra.mxu0 0.0
      %1385 = vmatprep.subr.mxu0 0.0
      %1386 = vmatpush1.msra.mxu0 0.0
      %1387 = vmatprep.subr.mxu0 0.0
      %1388 = vmatpush1.msra.mxu0 0.0
      %1389 = vmatprep.subr.mxu0 0.0
      %1390 = vmatpush1.msra.mxu0 0.0
      %1391 = vmatprep.subr.mxu0 0.0
      %1392 = vmatpush1.msra.mxu0 0.0
      %1393 = vmatprep.subr.mxu0 0.0
      %1394 = vmatpush1.msra.mxu0 0.0
      %1395 = vmatprep.subr.mxu0 0.0
      %1396 = vmatpush1.msra.mxu0 0.0
      %1397 = vmatprep.subr.mxu0 0.0
      %1398 = vmatpush1.msra.mxu0 %v737
      %1399 = vmatprep.subr.mxu0 0.0
      %1400 = vmatpush2.msra.mxu0 0.0
      %1401 = vmatprep.subr.mxu0 0.0
      %1402 = vmatpush2.msra.mxu0 0.0
      %1403 = vmatprep.subr.mxu0 0.0
      %1404 = vmatpush2.msra.mxu0 0.0
      %1405 = vmatprep.subr.mxu0 0.0
      %1406 = vmatpush2.msra.mxu0 0.0
      %1407 = vmatprep.subr.mxu0 0.0
      %1408 = vmatpush2.msra.mxu0 0.0
      %1409 = vmatprep.subr.mxu0 0.0
      %1410 = vmatpush2.msra.mxu0 0.0
      %1411 = vmatprep.subr.mxu0 0.0
      %1412 = vmatpush2.msra.mxu0 0.0
      %1413 = vmatprep.subr.mxu0 0.0
      %1414 = vmatpush2.msra.mxu0 0.0
      %1415 = vmatprep.subr.mxu0 0.0
      %1416 = vmatpush2.msra.mxu0 0.0
      %1417 = vmatprep.subr.mxu0 0.0
      %1418 = vmatpush2.msra.mxu0 0.0
      %1419 = vmatprep.subr.mxu0 0.0
      %1420 = vmatpush2.msra.mxu0 0.0
      %1421 = vmatprep.subr.mxu0 0.0
      %1422 = vmatpush2.msra.mxu0 0.0
      %1423 = vmatprep.subr.mxu0 0.0
      %1424 = vmatpush2.msra.mxu0 0.0
      %1425 = vmatprep.subr.mxu0 0.0
      %1426 = vmatpush2.msra.mxu0 0.0
      %1427 = vmatprep.subr.mxu0 0.0
      %1428 = vmatpush2.msra.mxu0 0.0
      %1429 = vmatprep.subr.mxu0 0.0
      %1430 = vmatpush2.msra.mxu0 0.0
      %1431 = vmatprep.mubr.f32.mxu0 0.0
      %1432 = vmatmul.mubr.f32.gmra.mxu0 %v1365
      %v1433 = vpop.f32.mrf.mxu0
      %v1434 = vadd.f32 %v779, %v1433
      %v1435 = vpop.f32.mrf.mxu0
      %1436 = vdwg.mxu0
      %v1438 = vsel %vm292, %v558, 0
      %1440 = vmatprep.subr.mxu0 0.0
      %1441 = vmatpush1.msra.mxu0 0.0
      %1442 = vmatprep.subr.mxu0 0.0
      %1443 = vmatpush1.msra.mxu0 0.0
      %1444 = vmatprep.subr.mxu0 0.0
      %1445 = vmatpush1.msra.mxu0 0.0
      %1446 = vmatprep.subr.mxu0 0.0
      %1447 = vmatpush1.msra.mxu0 0.0
      %1448 = vmatprep.subr.mxu0 0.0
      %1449 = vmatpush1.msra.mxu0 0.0
      %1450 = vmatprep.subr.mxu0 0.0
      %1451 = vmatpush1.msra.mxu0 0.0
      %1452 = vmatprep.subr.mxu0 0.0
      %1453 = vmatpush1.msra.mxu0 0.0
      %1454 = vmatprep.subr.mxu0 0.0
      %1455 = vmatpush1.msra.mxu0 0.0
      %1456 = vmatprep.subr.mxu0 0.0
      %1457 = vmatpush1.msra.mxu0 0.0
      %1458 = vmatprep.subr.mxu0 0.0
      %1459 = vmatpush1.msra.mxu0 0.0
      %1460 = vmatprep.subr.mxu0 0.0
      %1461 = vmatpush1.msra.mxu0 0.0
      %1462 = vmatprep.subr.mxu0 0.0
      %1463 = vmatpush1.msra.mxu0 0.0
      %1464 = vmatprep.subr.mxu0 0.0
      %1465 = vmatpush1.msra.mxu0 0.0
      %1466 = vmatprep.subr.mxu0 0.0
      %1467 = vmatpush1.msra.mxu0 0.0
      %1468 = vmatprep.subr.mxu0 0.0
      %1469 = vmatpush1.msra.mxu0 0.0
      %1470 = vmatprep.subr.mxu0 0.0
      %1471 = vmatpush1.msra.mxu0 %v742
      %1472 = vmatprep.subr.mxu0 0.0
      %1473 = vmatpush2.msra.mxu0 0.0
      %1474 = vmatprep.subr.mxu0 0.0
      %1475 = vmatpush2.msra.mxu0 0.0
      %1476 = vmatprep.subr.mxu0 0.0
      %1477 = vmatpush2.msra.mxu0 0.0
      %1478 = vmatprep.subr.mxu0 0.0
      %1479 = vmatpush2.msra.mxu0 0.0
      %1480 = vmatprep.subr.mxu0 0.0
      %1481 = vmatpush2.msra.mxu0 0.0
      %1482 = vmatprep.subr.mxu0 0.0
      %1483 = vmatpush2.msra.mxu0 0.0
      %1484 = vmatprep.subr.mxu0 0.0
      %1485 = vmatpush2.msra.mxu0 0.0
      %1486 = vmatprep.subr.mxu0 0.0
      %1487 = vmatpush2.msra.mxu0 0.0
      %1488 = vmatprep.subr.mxu0 0.0
      %1489 = vmatpush2.msra.mxu0 0.0
      %1490 = vmatprep.subr.mxu0 0.0
      %1491 = vmatpush2.msra.mxu0 0.0
      %1492 = vmatprep.subr.mxu0 0.0
      %1493 = vmatpush2.msra.mxu0 0.0
      %1494 = vmatprep.subr.mxu0 0.0
      %1495 = vmatpush2.msra.mxu0 0.0
      %1496 = vmatprep.subr.mxu0 0.0
      %1497 = vmatpush2.msra.mxu0 0.0
      %1498 = vmatprep.subr.mxu0 0.0
      %1499 = vmatpush2.msra.mxu0 0.0
      %1500 = vmatprep.subr.mxu0 0.0
      %1501 = vmatpush2.msra.mxu0 0.0
      %1502 = vmatprep.subr.mxu0 0.0
      %1503 = vmatpush2.msra.mxu0 0.0
      %1504 = vmatprep.mubr.f32.mxu0 0.0
      %1505 = vmatmul.mubr.f32.gmra.mxu0 %v1438
      %v1506 = vpop.f32.mrf.mxu0
      %v1507 = vadd.f32 %v779, %v1506
      %v1508 = vpop.f32.mrf.mxu0
      %1509 = vdwg.mxu0
      %v1511 = vsel %vm292, %v559, 0
      %1513 = vmatprep.subr.mxu0 0.0
      %1514 = vmatpush1.msra.mxu0 0.0
      %1515 = vmatprep.subr.mxu0 0.0
      %1516 = vmatpush1.msra.mxu0 0.0
      %1517 = vmatprep.subr.mxu0 0.0
      %1518 = vmatpush1.msra.mxu0 0.0
      %1519 = vmatprep.subr.mxu0 0.0
      %1520 = vmatpush1.msra.mxu0 0.0
      %1521 = vmatprep.subr.mxu0 0.0
      %1522 = vmatpush1.msra.mxu0 0.0
      %1523 = vmatprep.subr.mxu0 0.0
      %1524 = vmatpush1.msra.mxu0 0.0
      %1525 = vmatprep.subr.mxu0 0.0
      %1526 = vmatpush1.msra.mxu0 0.0
      %1527 = vmatprep.subr.mxu0 0.0
      %1528 = vmatpush1.msra.mxu0 0.0
      %1529 = vmatprep.subr.mxu0 0.0
      %1530 = vmatpush1.msra.mxu0 0.0
      %1531 = vmatprep.subr.mxu0 0.0
      %1532 = vmatpush1.msra.mxu0 0.0
      %1533 = vmatprep.subr.mxu0 0.0
      %1534 = vmatpush1.msra.mxu0 0.0
      %1535 = vmatprep.subr.mxu0 0.0
      %1536 = vmatpush1.msra.mxu0 0.0
      %1537 = vmatprep.subr.mxu0 0.0
      %1538 = vmatpush1.msra.mxu0 0.0
      %1539 = vmatprep.subr.mxu0 0.0
      %1540 = vmatpush1.msra.mxu0 0.0
      %1541 = vmatprep.subr.mxu0 0.0
      %1542 = vmatpush1.msra.mxu0 0.0
      %1543 = vmatprep.subr.mxu0 0.0
      %1544 = vmatpush1.msra.mxu0 %v747
      %1545 = vmatprep.subr.mxu0 0.0
      %1546 = vmatpush2.msra.mxu0 0.0
      %1547 = vmatprep.subr.mxu0 0.0
      %1548 = vmatpush2.msra.mxu0 0.0
      %1549 = vmatprep.subr.mxu0 0.0
      %1550 = vmatpush2.msra.mxu0 0.0
      %1551 = vmatprep.subr.mxu0 0.0
      %1552 = vmatpush2.msra.mxu0 0.0
      %1553 = vmatprep.subr.mxu0 0.0
      %1554 = vmatpush2.msra.mxu0 0.0
      %1555 = vmatprep.subr.mxu0 0.0
      %1556 = vmatpush2.msra.mxu0 0.0
      %1557 = vmatprep.subr.mxu0 0.0
      %1558 = vmatpush2.msra.mxu0 0.0
      %1559 = vmatprep.subr.mxu0 0.0
      %1560 = vmatpush2.msra.mxu0 0.0
      %1561 = vmatprep.subr.mxu0 0.0
      %1562 = vmatpush2.msra.mxu0 0.0
      %1563 = vmatprep.subr.mxu0 0.0
      %1564 = vmatpush2.msra.mxu0 0.0
      %1565 = vmatprep.subr.mxu0 0.0
      %1566 = vmatpush2.msra.mxu0 0.0
      %1567 = vmatprep.subr.mxu0 0.0
      %1568 = vmatpush2.msra.mxu0 0.0
      %1569 = vmatprep.subr.mxu0 0.0
      %1570 = vmatpush2.msra.mxu0 0.0
      %1571 = vmatprep.subr.mxu0 0.0
      %1572 = vmatpush2.msra.mxu0 0.0
      %1573 = vmatprep.subr.mxu0 0.0
      %1574 = vmatpush2.msra.mxu0 0.0
      %1575 = vmatprep.subr.mxu0 0.0
      %1576 = vmatpush2.msra.mxu0 0.0
      %1577 = vmatprep.mubr.f32.mxu0 0.0
      %1578 = vmatmul.mubr.f32.gmra.mxu0 %v1511
      %v1579 = vpop.f32.mrf.mxu0
      %v1580 = vadd.f32 %v779, %v1579
      %v1581 = vpop.f32.mrf.mxu0
      %1582 = vdwg.mxu0
      %v1584 = vsel %vm292, %v560, 0
      %1586 = vmatprep.subr.mxu0 0.0
      %1587 = vmatpush1.msra.mxu0 0.0
      %1588 = vmatprep.subr.mxu0 0.0
      %1589 = vmatpush1.msra.mxu0 0.0
      %1590 = vmatprep.subr.mxu0 0.0
      %1591 = vmatpush1.msra.mxu0 0.0
      %1592 = vmatprep.subr.mxu0 0.0
      %1593 = vmatpush1.msra.mxu0 0.0
      %1594 = vmatprep.subr.mxu0 0.0
      %1595 = vmatpush1.msra.mxu0 0.0
      %1596 = vmatprep.subr.mxu0 0.0
      %1597 = vmatpush1.msra.mxu0 0.0
      %1598 = vmatprep.subr.mxu0 0.0
      %1599 = vmatpush1.msra.mxu0 0.0
      %1600 = vmatprep.subr.mxu0 0.0
      %1601 = vmatpush1.msra.mxu0 0.0
      %1602 = vmatprep.subr.mxu0 0.0
      %1603 = vmatpush1.msra.mxu0 0.0
      %1604 = vmatprep.subr.mxu0 0.0
      %1605 = vmatpush1.msra.mxu0 0.0
      %1606 = vmatprep.subr.mxu0 0.0
      %1607 = vmatpush1.msra.mxu0 0.0
      %1608 = vmatprep.subr.mxu0 0.0
      %1609 = vmatpush1.msra.mxu0 0.0
      %1610 = vmatprep.subr.mxu0 0.0
      %1611 = vmatpush1.msra.mxu0 0.0
      %1612 = vmatprep.subr.mxu0 0.0
      %1613 = vmatpush1.msra.mxu0 0.0
      %1614 = vmatprep.subr.mxu0 0.0
      %1615 = vmatpush1.msra.mxu0 0.0
      %1616 = vmatprep.subr.mxu0 0.0
      %1617 = vmatpush1.msra.mxu0 %v752
      %1618 = vmatprep.subr.mxu0 0.0
      %1619 = vmatpush2.msra.mxu0 0.0
      %1620 = vmatprep.subr.mxu0 0.0
      %1621 = vmatpush2.msra.mxu0 0.0
      %1622 = vmatprep.subr.mxu0 0.0
      %1623 = vmatpush2.msra.mxu0 0.0
      %1624 = vmatprep.subr.mxu0 0.0
      %1625 = vmatpush2.msra.mxu0 0.0
      %1626 = vmatprep.subr.mxu0 0.0
      %1627 = vmatpush2.msra.mxu0 0.0
      %1628 = vmatprep.subr.mxu0 0.0
      %1629 = vmatpush2.msra.mxu0 0.0
      %1630 = vmatprep.subr.mxu0 0.0
      %1631 = vmatpush2.msra.mxu0 0.0
      %1632 = vmatprep.subr.mxu0 0.0
      %1633 = vmatpush2.msra.mxu0 0.0
      %1634 = vmatprep.subr.mxu0 0.0
      %1635 = vmatpush2.msra.mxu0 0.0
      %1636 = vmatprep.subr.mxu0 0.0
      %1637 = vmatpush2.msra.mxu0 0.0
      %1638 = vmatprep.subr.mxu0 0.0
      %1639 = vmatpush2.msra.mxu0 0.0
      %1640 = vmatprep.subr.mxu0 0.0
      %1641 = vmatpush2.msra.mxu0 0.0
      %1642 = vmatprep.subr.mxu0 0.0
      %1643 = vmatpush2.msra.mxu0 0.0
      %1644 = vmatprep.subr.mxu0 0.0
      %1645 = vmatpush2.msra.mxu0 0.0
      %1646 = vmatprep.subr.mxu0 0.0
      %1647 = vmatpush2.msra.mxu0 0.0
      %1648 = vmatprep.subr.mxu0 0.0
      %1649 = vmatpush2.msra.mxu0 0.0
      %1650 = vmatprep.mubr.f32.mxu0 0.0
      %1651 = vmatmul.mubr.f32.gmra.mxu0 %v1584
      %v1652 = vpop.f32.mrf.mxu0
      %v1653 = vadd.f32 %v779, %v1652
      %v1654 = vpop.f32.mrf.mxu0
      %1655 = vdwg.mxu0
      %v1657 = vsel %vm292, %v561, 0
      %1659 = vmatprep.subr.mxu0 0.0
      %1660 = vmatpush1.msra.mxu0 0.0
      %1661 = vmatprep.subr.mxu0 0.0
      %1662 = vmatpush1.msra.mxu0 0.0
      %1663 = vmatprep.subr.mxu0 0.0
      %1664 = vmatpush1.msra.mxu0 0.0
      %1665 = vmatprep.subr.mxu0 0.0
      %1666 = vmatpush1.msra.mxu0 0.0
      %1667 = vmatprep.subr.mxu0 0.0
      %1668 = vmatpush1.msra.mxu0 0.0
      %1669 = vmatprep.subr.mxu0 0.0
      %1670 = vmatpush1.msra.mxu0 0.0
      %1671 = vmatprep.subr.mxu0 0.0
      %1672 = vmatpush1.msra.mxu0 0.0
      %1673 = vmatprep.subr.mxu0 0.0
      %1674 = vmatpush1.msra.mxu0 0.0
      %1675 = vmatprep.subr.mxu0 0.0
      %1676 = vmatpush1.msra.mxu0 0.0
      %1677 = vmatprep.subr.mxu0 0.0
      %1678 = vmatpush1.msra.mxu0 0.0
      %1679 = vmatprep.subr.mxu0 0.0
      %1680 = vmatpush1.msra.mxu0 0.0
      %1681 = vmatprep.subr.mxu0 0.0
      %1682 = vmatpush1.msra.mxu0 0.0
      %1683 = vmatprep.subr.mxu0 0.0
      %1684 = vmatpush1.msra.mxu0 0.0
      %1685 = vmatprep.subr.mxu0 0.0
      %1686 = vmatpush1.msra.mxu0 0.0
      %1687 = vmatprep.subr.mxu0 0.0
      %1688 = vmatpush1.msra.mxu0 0.0
      %1689 = vmatprep.subr.mxu0 0.0
      %1690 = vmatpush1.msra.mxu0 %v757
      %1691 = vmatprep.subr.mxu0 0.0
      %1692 = vmatpush2.msra.mxu0 0.0
      %1693 = vmatprep.subr.mxu0 0.0
      %1694 = vmatpush2.msra.mxu0 0.0
      %1695 = vmatprep.subr.mxu0 0.0
      %1696 = vmatpush2.msra.mxu0 0.0
      %1697 = vmatprep.subr.mxu0 0.0
      %1698 = vmatpush2.msra.mxu0 0.0
      %1699 = vmatprep.subr.mxu0 0.0
      %1700 = vmatpush2.msra.mxu0 0.0
      %1701 = vmatprep.subr.mxu0 0.0
      %1702 = vmatpush2.msra.mxu0 0.0
      %1703 = vmatprep.subr.mxu0 0.0
      %1704 = vmatpush2.msra.mxu0 0.0
      %1705 = vmatprep.subr.mxu0 0.0
      %1706 = vmatpush2.msra.mxu0 0.0
      %1707 = vmatprep.subr.mxu0 0.0
      %1708 = vmatpush2.msra.mxu0 0.0
      %1709 = vmatprep.subr.mxu0 0.0
      %1710 = vmatpush2.msra.mxu0 0.0
      %1711 = vmatprep.subr.mxu0 0.0
      %1712 = vmatpush2.msra.mxu0 0.0
      %1713 = vmatprep.subr.mxu0 0.0
      %1714 = vmatpush2.msra.mxu0 0.0
      %1715 = vmatprep.subr.mxu0 0.0
      %1716 = vmatpush2.msra.mxu0 0.0
      %1717 = vmatprep.subr.mxu0 0.0
      %1718 = vmatpush2.msra.mxu0 0.0
      %1719 = vmatprep.subr.mxu0 0.0
      %1720 = vmatpush2.msra.mxu0 0.0
      %1721 = vmatprep.subr.mxu0 0.0
      %1722 = vmatpush2.msra.mxu0 0.0
      %1723 = vmatprep.mubr.f32.mxu0 0.0
      %1724 = vmatmul.mubr.f32.gmra.mxu0 %v1657
      %v1725 = vpop.f32.mrf.mxu0
      %v1726 = vadd.f32 %v779, %v1725
      %v1727 = vpop.f32.mrf.mxu0
      %1728 = vdwg.mxu0
      %v1730 = vsel %vm292, %v562, 0
      %1732 = vmatprep.subr.mxu0 0.0
      %1733 = vmatpush1.msra.mxu0 0.0
      %1734 = vmatprep.subr.mxu0 0.0
      %1735 = vmatpush1.msra.mxu0 0.0
      %1736 = vmatprep.subr.mxu0 0.0
      %1737 = vmatpush1.msra.mxu0 0.0
      %1738 = vmatprep.subr.mxu0 0.0
      %1739 = vmatpush1.msra.mxu0 0.0
      %1740 = vmatprep.subr.mxu0 0.0
      %1741 = vmatpush1.msra.mxu0 0.0
      %1742 = vmatprep.subr.mxu0 0.0
      %1743 = vmatpush1.msra.mxu0 0.0
      %1744 = vmatprep.subr.mxu0 0.0
      %1745 = vmatpush1.msra.mxu0 0.0
      %1746 = vmatprep.subr.mxu0 0.0
      %1747 = vmatpush1.msra.mxu0 0.0
      %1748 = vmatprep.subr.mxu0 0.0
      %1749 = vmatpush1.msra.mxu0 0.0
      %1750 = vmatprep.subr.mxu0 0.0
      %1751 = vmatpush1.msra.mxu0 0.0
      %1752 = vmatprep.subr.mxu0 0.0
      %1753 = vmatpush1.msra.mxu0 0.0
      %1754 = vmatprep.subr.mxu0 0.0
      %1755 = vmatpush1.msra.mxu0 0.0
      %1756 = vmatprep.subr.mxu0 0.0
      %1757 = vmatpush1.msra.mxu0 0.0
      %1758 = vmatprep.subr.mxu0 0.0
      %1759 = vmatpush1.msra.mxu0 0.0
      %1760 = vmatprep.subr.mxu0 0.0
      %1761 = vmatpush1.msra.mxu0 0.0
      %1762 = vmatprep.subr.mxu0 0.0
      %1763 = vmatpush1.msra.mxu0 %v762
      %1764 = vmatprep.subr.mxu0 0.0
      %1765 = vmatpush2.msra.mxu0 0.0
      %1766 = vmatprep.subr.mxu0 0.0
      %1767 = vmatpush2.msra.mxu0 0.0
      %1768 = vmatprep.subr.mxu0 0.0
      %1769 = vmatpush2.msra.mxu0 0.0
      %1770 = vmatprep.subr.mxu0 0.0
      %1771 = vmatpush2.msra.mxu0 0.0
      %1772 = vmatprep.subr.mxu0 0.0
      %1773 = vmatpush2.msra.mxu0 0.0
      %1774 = vmatprep.subr.mxu0 0.0
      %1775 = vmatpush2.msra.mxu0 0.0
      %1776 = vmatprep.subr.mxu0 0.0
      %1777 = vmatpush2.msra.mxu0 0.0
      %1778 = vmatprep.subr.mxu0 0.0
      %1779 = vmatpush2.msra.mxu0 0.0
      %1780 = vmatprep.subr.mxu0 0.0
      %1781 = vmatpush2.msra.mxu0 0.0
      %1782 = vmatprep.subr.mxu0 0.0
      %1783 = vmatpush2.msra.mxu0 0.0
      %1784 = vmatprep.subr.mxu0 0.0
      %1785 = vmatpush2.msra.mxu0 0.0
      %1786 = vmatprep.subr.mxu0 0.0
      %1787 = vmatpush2.msra.mxu0 0.0
      %1788 = vmatprep.subr.mxu0 0.0
      %1789 = vmatpush2.msra.mxu0 0.0
      %1790 = vmatprep.subr.mxu0 0.0
      %1791 = vmatpush2.msra.mxu0 0.0
      %1792 = vmatprep.subr.mxu0 0.0
      %1793 = vmatpush2.msra.mxu0 0.0
      %1794 = vmatprep.subr.mxu0 0.0
      %1795 = vmatpush2.msra.mxu0 0.0
      %1796 = vmatprep.mubr.f32.mxu0 0.0
      %1797 = vmatmul.mubr.f32.gmra.mxu0 %v1730
      %v1798 = vpop.f32.mrf.mxu0
      %v1799 = vadd.f32 %v779, %v1798
      %v1800 = vpop.f32.mrf.mxu0
      %1801 = vdwg.mxu0
      %v1803 = vsel %vm292, %v563, 0
      %1805 = vmatprep.subr.mxu0 0.0
      %1806 = vmatpush1.msra.mxu0 0.0
      %1807 = vmatprep.subr.mxu0 0.0
      %1808 = vmatpush1.msra.mxu0 0.0
      %1809 = vmatprep.subr.mxu0 0.0
      %1810 = vmatpush1.msra.mxu0 0.0
      %1811 = vmatprep.subr.mxu0 0.0
      %1812 = vmatpush1.msra.mxu0 0.0
      %1813 = vmatprep.subr.mxu0 0.0
      %1814 = vmatpush1.msra.mxu0 0.0
      %1815 = vmatprep.subr.mxu0 0.0
      %1816 = vmatpush1.msra.mxu0 0.0
      %1817 = vmatprep.subr.mxu0 0.0
      %1818 = vmatpush1.msra.mxu0 0.0
      %1819 = vmatprep.subr.mxu0 0.0
      %1820 = vmatpush1.msra.mxu0 0.0
      %1821 = vmatprep.subr.mxu0 0.0
      %1822 = vmatpush1.msra.mxu0 0.0
      %1823 = vmatprep.subr.mxu0 0.0
      %1824 = vmatpush1.msra.mxu0 0.0
      %1825 = vmatprep.subr.mxu0 0.0
      %1826 = vmatpush1.msra.mxu0 0.0
      %1827 = vmatprep.subr.mxu0 0.0
      %1828 = vmatpush1.msra.mxu0 0.0
      %1829 = vmatprep.subr.mxu0 0.0
      %1830 = vmatpush1.msra.mxu0 0.0
      %1831 = vmatprep.subr.mxu0 0.0
      %1832 = vmatpush1.msra.mxu0 0.0
      %1833 = vmatprep.subr.mxu0 0.0
      %1834 = vmatpush1.msra.mxu0 0.0
      %1835 = vmatprep.subr.mxu0 0.0
      %1836 = vmatpush1.msra.mxu0 %v767
      %1837 = vmatprep.subr.mxu0 0.0
      %1838 = vmatpush2.msra.mxu0 0.0
      %1839 = vmatprep.subr.mxu0 0.0
      %1840 = vmatpush2.msra.mxu0 0.0
      %1841 = vmatprep.subr.mxu0 0.0
      %1842 = vmatpush2.msra.mxu0 0.0
      %1843 = vmatprep.subr.mxu0 0.0
      %1844 = vmatpush2.msra.mxu0 0.0
      %1845 = vmatprep.subr.mxu0 0.0
      %1846 = vmatpush2.msra.mxu0 0.0
      %1847 = vmatprep.subr.mxu0 0.0
      %1848 = vmatpush2.msra.mxu0 0.0
      %1849 = vmatprep.subr.mxu0 0.0
      %1850 = vmatpush2.msra.mxu0 0.0
      %1851 = vmatprep.subr.mxu0 0.0
      %1852 = vmatpush2.msra.mxu0 0.0
      %1853 = vmatprep.subr.mxu0 0.0
      %1854 = vmatpush2.msra.mxu0 0.0
      %1855 = vmatprep.subr.mxu0 0.0
      %1856 = vmatpush2.msra.mxu0 0.0
      %1857 = vmatprep.subr.mxu0 0.0
      %1858 = vmatpush2.msra.mxu0 0.0
      %1859 = vmatprep.subr.mxu0 0.0
      %1860 = vmatpush2.msra.mxu0 0.0
      %1861 = vmatprep.subr.mxu0 0.0
      %1862 = vmatpush2.msra.mxu0 0.0
      %1863 = vmatprep.subr.mxu0 0.0
      %1864 = vmatpush2.msra.mxu0 0.0
      %1865 = vmatprep.subr.mxu0 0.0
      %1866 = vmatpush2.msra.mxu0 0.0
      %1867 = vmatprep.subr.mxu0 0.0
      %1868 = vmatpush2.msra.mxu0 0.0
      %1869 = vmatprep.mubr.f32.mxu0 0.0
      %1870 = vmatmul.mubr.f32.gmra.mxu0 %v1803
      %v1871 = vpop.f32.mrf.mxu0
      %v1872 = vadd.f32 %v779, %v1871
      %v1873 = vpop.f32.mrf.mxu0
      %1874 = vdwg.mxu0
      %v1876 = vsel %vm292, %v564, 0
      %1878 = vmatprep.subr.mxu0 0.0
      %1879 = vmatpush1.msra.mxu0 0.0
      %1880 = vmatprep.subr.mxu0 0.0
      %1881 = vmatpush1.msra.mxu0 0.0
      %1882 = vmatprep.subr.mxu0 0.0
      %1883 = vmatpush1.msra.mxu0 0.0
      %1884 = vmatprep.subr.mxu0 0.0
      %1885 = vmatpush1.msra.mxu0 0.0
      %1886 = vmatprep.subr.mxu0 0.0
      %1887 = vmatpush1.msra.mxu0 0.0
      %1888 = vmatprep.subr.mxu0 0.0
      %1889 = vmatpush1.msra.mxu0 0.0
      %1890 = vmatprep.subr.mxu0 0.0
      %1891 = vmatpush1.msra.mxu0 0.0
      %1892 = vmatprep.subr.mxu0 0.0
      %1893 = vmatpush1.msra.mxu0 0.0
      %1894 = vmatprep.subr.mxu0 0.0
      %1895 = vmatpush1.msra.mxu0 0.0
      %1896 = vmatprep.subr.mxu0 0.0
      %1897 = vmatpush1.msra.mxu0 0.0
      %1898 = vmatprep.subr.mxu0 0.0
      %1899 = vmatpush1.msra.mxu0 0.0
      %1900 = vmatprep.subr.mxu0 0.0
      %1901 = vmatpush1.msra.mxu0 0.0
      %1902 = vmatprep.subr.mxu0 0.0
      %1903 = vmatpush1.msra.mxu0 0.0
      %1904 = vmatprep.subr.mxu0 0.0
      %1905 = vmatpush1.msra.mxu0 0.0
      %1906 = vmatprep.subr.mxu0 0.0
      %1907 = vmatpush1.msra.mxu0 0.0
      %1908 = vmatprep.subr.mxu0 0.0
      %1909 = vmatpush1.msra.mxu0 %v772
      %1910 = vmatprep.subr.mxu0 0.0
      %1911 = vmatpush2.msra.mxu0 0.0
      %1912 = vmatprep.subr.mxu0 0.0
      %1913 = vmatpush2.msra.mxu0 0.0
      %1914 = vmatprep.subr.mxu0 0.0
      %1915 = vmatpush2.msra.mxu0 0.0
      %1916 = vmatprep.subr.mxu0 0.0
      %1917 = vmatpush2.msra.mxu0 0.0
      %1918 = vmatprep.subr.mxu0 0.0
      %1919 = vmatpush2.msra.mxu0 0.0
      %1920 = vmatprep.subr.mxu0 0.0
      %1921 = vmatpush2.msra.mxu0 0.0
      %1922 = vmatprep.subr.mxu0 0.0
      %1923 = vmatpush2.msra.mxu0 0.0
      %1924 = vmatprep.subr.mxu0 0.0
      %1925 = vmatpush2.msra.mxu0 0.0
      %1926 = vmatprep.subr.mxu0 0.0
      %1927 = vmatpush2.msra.mxu0 0.0
      %1928 = vmatprep.subr.mxu0 0.0
      %1929 = vmatpush2.msra.mxu0 0.0
      %1930 = vmatprep.subr.mxu0 0.0
      %1931 = vmatpush2.msra.mxu0 0.0
      %1932 = vmatprep.subr.mxu0 0.0
      %1933 = vmatpush2.msra.mxu0 0.0
      %1934 = vmatprep.subr.mxu0 0.0
      %1935 = vmatpush2.msra.mxu0 0.0
      %1936 = vmatprep.subr.mxu0 0.0
      %1937 = vmatpush2.msra.mxu0 0.0
      %1938 = vmatprep.subr.mxu0 0.0
      %1939 = vmatpush2.msra.mxu0 0.0
      %1940 = vmatprep.subr.mxu0 0.0
      %1941 = vmatpush2.msra.mxu0 0.0
      %1942 = vmatprep.mubr.f32.mxu0 0.0
      %1943 = vmatmul.mubr.f32.gmra.mxu0 %v1876
      %v1944 = vpop.f32.mrf.mxu0
      %v1945 = vadd.f32 %v779, %v1944
      %v1946 = vpop.f32.mrf.mxu0
      %1947 = vdwg.mxu0
      %v1948 = vmax.f32 %v850, 0.0
      %v1949 = vmax.f32 %v923, 0.0
      %v1950 = vmax.f32 %v996, 0.0
      %v1951 = vmax.f32 %v1069, 0.0
      %v1952 = vmax.f32 %v1142, 0.0
      %v1953 = vmax.f32 %v1215, 0.0
      %v1954 = vmax.f32 %v1288, 0.0
      %v1955 = vmax.f32 %v1361, 0.0
      %v1956 = vmax.f32 %v1434, 0.0
      %v1957 = vmax.f32 %v1507, 0.0
      %v1958 = vmax.f32 %v1580, 0.0
      %v1959 = vmax.f32 %v1653, 0.0
      %v1960 = vmax.f32 %v1726, 0.0
      %v1961 = vmax.f32 %v1799, 0.0
      %v1962 = vmax.f32 %v1872, 0.0
      %v1963 = vmax.f32 %v1945, 0.0
      %s1964 = scalar_lea.vmem %s2, 8
      %v1965 = vld [vmem:[%s1964] sm:$0xff]
      %v1967 = vsel %vm292, %v1948, 0
      %v1970 = vsel %vm292, %v1949, 0
      %v1973 = vsel %vm292, %v1950, 0
      %v1976 = vsel %vm292, %v1951, 0
      %v1979 = vsel %vm292, %v1952, 0
      %v1982 = vsel %vm292, %v1953, 0
      %v1985 = vsel %vm292, %v1954, 0
      %v1988 = vsel %vm292, %v1955, 0
      %v1991 = vsel %vm292, %v1956, 0
      %v1994 = vsel %vm292, %v1957, 0
      %v1997 = vsel %vm292, %v1958, 0
      %v2000 = vsel %vm292, %v1959, 0
      %v2003 = vsel %vm292, %v1960, 0
      %v2006 = vsel %vm292, %v1961, 0
      %v2009 = vsel %vm292, %v1962, 0
      %v2012 = vsel %vm292, %v1963, 0
      %2014 = vmatprep.subr.mxu0 0.0
      %2015 = vmatpush1.msra.mxu0 0.0
      %2016 = vmatprep.subr.mxu0 0.0
      %2017 = vmatpush1.msra.mxu0 0.0
      %2018 = vmatprep.subr.mxu0 0.0
      %2019 = vmatpush1.msra.mxu0 0.0
      %2020 = vmatprep.subr.mxu0 0.0
      %2021 = vmatpush1.msra.mxu0 0.0
      %2022 = vmatprep.subr.mxu0 0.0
      %2023 = vmatpush1.msra.mxu0 0.0
      %2024 = vmatprep.subr.mxu0 0.0
      %2025 = vmatpush1.msra.mxu0 0.0
      %2026 = vmatprep.subr.mxu0 0.0
      %2027 = vmatpush1.msra.mxu0 0.0
      %2028 = vmatprep.subr.mxu0 0.0
      %2029 = vmatpush1.msra.mxu0 0.0
      %2030 = vmatprep.subr.mxu0 0.0
      %2031 = vmatpush1.msra.mxu0 0.0
      %2032 = vmatprep.subr.mxu0 0.0
      %2033 = vmatpush1.msra.mxu0 0.0
      %2034 = vmatprep.subr.mxu0 0.0
      %2035 = vmatpush1.msra.mxu0 0.0
      %2036 = vmatprep.subr.mxu0 0.0
      %2037 = vmatpush1.msra.mxu0 0.0
      %2038 = vmatprep.subr.mxu0 0.0
      %2039 = vmatpush1.msra.mxu0 0.0
      %2040 = vmatprep.subr.mxu0 0.0
      %2041 = vmatpush1.msra.mxu0 0.0
      %2042 = vmatprep.subr.mxu0 0.0
      %2043 = vmatpush1.msra.mxu0 0.0
      %2044 = vmatprep.subr.mxu0 0.0
      %2045 = vmatpush1.msra.mxu0 %v1965
      %2046 = vmatprep.subr.mxu0 0.0
      %2047 = vmatpush2.msra.mxu0 0.0
      %2048 = vmatprep.subr.mxu0 0.0
      %2049 = vmatpush2.msra.mxu0 0.0
      %2050 = vmatprep.subr.mxu0 0.0
      %2051 = vmatpush2.msra.mxu0 0.0
      %2052 = vmatprep.subr.mxu0 0.0
      %2053 = vmatpush2.msra.mxu0 0.0
      %2054 = vmatprep.subr.mxu0 0.0
      %2055 = vmatpush2.msra.mxu0 0.0
      %2056 = vmatprep.subr.mxu0 0.0
      %2057 = vmatpush2.msra.mxu0 0.0
      %2058 = vmatprep.subr.mxu0 0.0
      %2059 = vmatpush2.msra.mxu0 0.0
      %2060 = vmatprep.subr.mxu0 0.0
      %2061 = vmatpush2.msra.mxu0 0.0
      %2062 = vmatprep.subr.mxu0 0.0
      %2063 = vmatpush2.msra.mxu0 0.0
      %2064 = vmatprep.subr.mxu0 0.0
      %2065 = vmatpush2.msra.mxu0 0.0
      %2066 = vmatprep.subr.mxu0 0.0
      %2067 = vmatpush2.msra.mxu0 0.0
      %2068 = vmatprep.subr.mxu0 0.0
      %2069 = vmatpush2.msra.mxu0 0.0
      %2070 = vmatprep.subr.mxu0 0.0
      %2071 = vmatpush2.msra.mxu0 0.0
      %2072 = vmatprep.subr.mxu0 0.0
      %2073 = vmatpush2.msra.mxu0 0.0
      %2074 = vmatprep.subr.mxu0 0.0
      %2075 = vmatpush2.msra.mxu0 0.0
      %2076 = vmatprep.subr.mxu0 0.0
      %2077 = vmatpush2.msra.mxu0 0.0
      %2078 = vmatprep.mubr.f32.mxu0 0.0
      %2079 = vmatmul.mubr.f32.gmra.mxu0 %v1967
      %v2080 = vpop.f32.mrf.mxu0
      %v2081 = vadd.f32 0.0, %v2080
      %v2082 = vpop.f32.mrf.mxu0
      %2083 = vmatprep.mubr.f32.mxu0 0.0
      %2084 = vmatmul.mubr.f32.gmra.mxu0 %v1970
      %v2085 = vpop.f32.mrf.mxu0
      %v2086 = vadd.f32 0.0, %v2085
      %v2087 = vpop.f32.mrf.mxu0
      %2088 = vmatprep.mubr.f32.mxu0 0.0
      %2089 = vmatmul.mubr.f32.gmra.mxu0 %v1973
      %v2090 = vpop.f32.mrf.mxu0
      %v2091 = vadd.f32 0.0, %v2090
      %v2092 = vpop.f32.mrf.mxu0
      %2093 = vmatprep.mubr.f32.mxu0 0.0
      %2094 = vmatmul.mubr.f32.gmra.mxu0 %v1976
      %v2095 = vpop.f32.mrf.mxu0
      %v2096 = vadd.f32 0.0, %v2095
      %v2097 = vpop.f32.mrf.mxu0
      %2098 = vmatprep.mubr.f32.mxu0 0.0
      %2099 = vmatmul.mubr.f32.gmra.mxu0 %v1979
      %v2100 = vpop.f32.mrf.mxu0
      %v2101 = vadd.f32 0.0, %v2100
      %v2102 = vpop.f32.mrf.mxu0
      %2103 = vmatprep.mubr.f32.mxu0 0.0
      %2104 = vmatmul.mubr.f32.gmra.mxu0 %v1982
      %v2105 = vpop.f32.mrf.mxu0
      %v2106 = vadd.f32 0.0, %v2105
      %v2107 = vpop.f32.mrf.mxu0
      %2108 = vmatprep.mubr.f32.mxu0 0.0
      %2109 = vmatmul.mubr.f32.gmra.mxu0 %v1985
      %v2110 = vpop.f32.mrf.mxu0
      %v2111 = vadd.f32 0.0, %v2110
      %v2112 = vpop.f32.mrf.mxu0
      %2113 = vmatprep.mubr.f32.mxu0 0.0
      %2114 = vmatmul.mubr.f32.gmra.mxu0 %v1988
      %v2115 = vpop.f32.mrf.mxu0
      %v2116 = vadd.f32 0.0, %v2115
      %v2117 = vpop.f32.mrf.mxu0
      %2118 = vmatprep.mubr.f32.mxu0 0.0
      %2119 = vmatmul.mubr.f32.gmra.mxu0 %v1991
      %v2120 = vpop.f32.mrf.mxu0
      %v2121 = vadd.f32 0.0, %v2120
      %v2122 = vpop.f32.mrf.mxu0
      %2123 = vmatprep.mubr.f32.mxu0 0.0
      %2124 = vmatmul.mubr.f32.gmra.mxu0 %v1994
      %v2125 = vpop.f32.mrf.mxu0
      %v2126 = vadd.f32 0.0, %v2125
      %v2127 = vpop.f32.mrf.mxu0
      %2128 = vmatprep.mubr.f32.mxu0 0.0
      %2129 = vmatmul.mubr.f32.gmra.mxu0 %v1997
      %v2130 = vpop.f32.mrf.mxu0
      %v2131 = vadd.f32 0.0, %v2130
      %v2132 = vpop.f32.mrf.mxu0
      %2133 = vmatprep.mubr.f32.mxu0 0.0
      %2134 = vmatmul.mubr.f32.gmra.mxu0 %v2000
      %v2135 = vpop.f32.mrf.mxu0
      %v2136 = vadd.f32 0.0, %v2135
      %v2137 = vpop.f32.mrf.mxu0
      %2138 = vmatprep.mubr.f32.mxu0 0.0
      %2139 = vmatmul.mubr.f32.gmra.mxu0 %v2003
      %v2140 = vpop.f32.mrf.mxu0
      %v2141 = vadd.f32 0.0, %v2140
      %v2142 = vpop.f32.mrf.mxu0
      %2143 = vmatprep.mubr.f32.mxu0 0.0
      %2144 = vmatmul.mubr.f32.gmra.mxu0 %v2006
      %v2145 = vpop.f32.mrf.mxu0
      %v2146 = vadd.f32 0.0, %v2145
      %v2147 = vpop.f32.mrf.mxu0
      %2148 = vmatprep.mubr.f32.mxu0 0.0
      %2149 = vmatmul.mubr.f32.gmra.mxu0 %v2009
      %v2150 = vpop.f32.mrf.mxu0
      %v2151 = vadd.f32 0.0, %v2150
      %v2152 = vpop.f32.mrf.mxu0
      %2153 = vmatprep.mubr.f32.mxu0 0.0
      %2154 = vmatmul.mubr.f32.gmra.mxu0 %v2012
      %v2155 = vpop.f32.mrf.mxu0
      %v2156 = vadd.f32 0.0, %v2155
      %v2157 = vpop.f32.mrf.mxu0
      %2158 = vdwg.mxu0
      %v2159 = vld [vmem:[%s3 + $0x1] sm:$0x1]
      %v2160 = vlaneseq
      %v2161 = vshrl.u32 %v2160, 7
      %v2162 = vsub.s32 0, %v2161
      %v2163 = vrot.slane %v2159, %v2162
      %2164 = vmatprep.subr.mxu0 0.0
      %2165 = vmatpush1.msra.mxu0 0.0
      %2166 = vmatprep.subr.mxu0 0.0
      %2167 = vmatpush1.msra.mxu0 0.0
      %2168 = vmatprep.subr.mxu0 0.0
      %2169 = vmatpush1.msra.mxu0 0.0
      %2170 = vmatprep.subr.mxu0 0.0
      %2171 = vmatpush1.msra.mxu0 0.0
      %2172 = vmatprep.subr.mxu0 0.0
      %2173 = vmatpush1.msra.mxu0 0.0
      %2174 = vmatprep.subr.mxu0 0.0
      %2175 = vmatpush1.msra.mxu0 0.0
      %2176 = vmatprep.subr.mxu0 0.0
      %2177 = vmatpush1.msra.mxu0 0.0
      %2178 = vmatprep.subr.mxu0 0.0
      %2179 = vmatpush1.msra.mxu0 0.0
      %2180 = vmatprep.subr.mxu0 0.0
      %2181 = vmatpush1.msra.mxu0 0.0
      %2182 = vmatprep.subr.mxu0 0.0
      %2183 = vmatpush1.msra.mxu0 0.0
      %2184 = vmatprep.subr.mxu0 0.0
      %2185 = vmatpush1.msra.mxu0 0.0
      %2186 = vmatprep.subr.mxu0 0.0
      %2187 = vmatpush1.msra.mxu0 0.0
      %2188 = vmatprep.subr.mxu0 0.0
      %2189 = vmatpush1.msra.mxu0 0.0
      %2190 = vmatprep.subr.mxu0 0.0
      %2191 = vmatpush1.msra.mxu0 0.0
      %2192 = vmatprep.subr.mxu0 0.0
      %2193 = vmatpush1.msra.mxu0 0.0
      %2194 = vmatprep.subr.mxu0 0.0
      %2195 = vmatpush1.msra.mxu0 %v2081
      %2196 = vmatprep.subr.mxu0 0.0
      %2197 = vmatpush2.msra.mxu0 0.0
      %2198 = vmatprep.subr.mxu0 0.0
      %2199 = vmatpush2.msra.mxu0 0.0
      %2200 = vmatprep.subr.mxu0 0.0
      %2201 = vmatpush2.msra.mxu0 0.0
      %2202 = vmatprep.subr.mxu0 0.0
      %2203 = vmatpush2.msra.mxu0 0.0
      %2204 = vmatprep.subr.mxu0 0.0
      %2205 = vmatpush2.msra.mxu0 0.0
      %2206 = vmatprep.subr.mxu0 0.0
      %2207 = vmatpush2.msra.mxu0 0.0
      %2208 = vmatprep.subr.mxu0 0.0
      %2209 = vmatpush2.msra.mxu0 0.0
      %2210 = vmatprep.subr.mxu0 0.0
      %2211 = vmatpush2.msra.mxu0 0.0
      %2212 = vmatprep.subr.mxu0 0.0
      %2213 = vmatpush2.msra.mxu0 0.0
      %2214 = vmatprep.subr.mxu0 0.0
      %2215 = vmatpush2.msra.mxu0 0.0
      %2216 = vmatprep.subr.mxu0 0.0
      %2217 = vmatpush2.msra.mxu0 0.0
      %2218 = vmatprep.subr.mxu0 0.0
      %2219 = vmatpush2.msra.mxu0 0.0
      %2220 = vmatprep.subr.mxu0 0.0
      %2221 = vmatpush2.msra.mxu0 0.0
      %2222 = vmatprep.subr.mxu0 0.0
      %2223 = vmatpush2.msra.mxu0 0.0
      %2224 = vmatprep.subr.mxu0 0.0
      %2225 = vmatpush2.msra.mxu0 0.0
      %2226 = vmatprep.subr.mxu0 0.0
      %2227 = vmatpush2.msra.mxu0 0.0
      %2228 = vmatprep.mubr.f32.mxu0 0.0
      %2229 = vmatmul.mubr.f32.gmra.mxu0 %v781
      %v2230 = vpop.f32.mrf.mxu0
      %v2231 = vadd.f32 %v2163, %v2230
      %v2232 = vpop.f32.mrf.mxu0
      %2233 = vdwg.mxu0
      %2234 = vmatprep.subr.mxu0 0.0
      %2235 = vmatpush1.msra.mxu0 0.0
      %2236 = vmatprep.subr.mxu0 0.0
      %2237 = vmatpush1.msra.mxu0 0.0
      %2238 = vmatprep.subr.mxu0 0.0
      %2239 = vmatpush1.msra.mxu0 0.0
      %2240 = vmatprep.subr.mxu0 0.0
      %2241 = vmatpush1.msra.mxu0 0.0
      %2242 = vmatprep.subr.mxu0 0.0
      %2243 = vmatpush1.msra.mxu0 0.0
      %2244 = vmatprep.subr.mxu0 0.0
      %2245 = vmatpush1.msra.mxu0 0.0
      %2246 = vmatprep.subr.mxu0 0.0
      %2247 = vmatpush1.msra.mxu0 0.0
      %2248 = vmatprep.subr.mxu0 0.0
      %2249 = vmatpush1.msra.mxu0 0.0
      %2250 = vmatprep.subr.mxu0 0.0
      %2251 = vmatpush1.msra.mxu0 0.0
      %2252 = vmatprep.subr.mxu0 0.0
      %2253 = vmatpush1.msra.mxu0 0.0
      %2254 = vmatprep.subr.mxu0 0.0
      %2255 = vmatpush1.msra.mxu0 0.0
      %2256 = vmatprep.subr.mxu0 0.0
      %2257 = vmatpush1.msra.mxu0 0.0
      %2258 = vmatprep.subr.mxu0 0.0
      %2259 = vmatpush1.msra.mxu0 0.0
      %2260 = vmatprep.subr.mxu0 0.0
      %2261 = vmatpush1.msra.mxu0 0.0
      %2262 = vmatprep.subr.mxu0 0.0
      %2263 = vmatpush1.msra.mxu0 0.0
      %2264 = vmatprep.subr.mxu0 0.0
      %2265 = vmatpush1.msra.mxu0 %v2086
      %2266 = vmatprep.subr.mxu0 0.0
      %2267 = vmatpush2.msra.mxu0 0.0
      %2268 = vmatprep.subr.mxu0 0.0
      %2269 = vmatpush2.msra.mxu0 0.0
      %2270 = vmatprep.subr.mxu0 0.0
      %2271 = vmatpush2.msra.mxu0 0.0
      %2272 = vmatprep.subr.mxu0 0.0
      %2273 = vmatpush2.msra.mxu0 0.0
      %2274 = vmatprep.subr.mxu0 0.0
      %2275 = vmatpush2.msra.mxu0 0.0
      %2276 = vmatprep.subr.mxu0 0.0
      %2277 = vmatpush2.msra.mxu0 0.0
      %2278 = vmatprep.subr.mxu0 0.0
      %2279 = vmatpush2.msra.mxu0 0.0
      %2280 = vmatprep.subr.mxu0 0.0
      %2281 = vmatpush2.msra.mxu0 0.0
      %2282 = vmatprep.subr.mxu0 0.0
      %2283 = vmatpush2.msra.mxu0 0.0
      %2284 = vmatprep.subr.mxu0 0.0
      %2285 = vmatpush2.msra.mxu0 0.0
      %2286 = vmatprep.subr.mxu0 0.0
      %2287 = vmatpush2.msra.mxu0 0.0
      %2288 = vmatprep.subr.mxu0 0.0
      %2289 = vmatpush2.msra.mxu0 0.0
      %2290 = vmatprep.subr.mxu0 0.0
      %2291 = vmatpush2.msra.mxu0 0.0
      %2292 = vmatprep.subr.mxu0 0.0
      %2293 = vmatpush2.msra.mxu0 0.0
      %2294 = vmatprep.subr.mxu0 0.0
      %2295 = vmatpush2.msra.mxu0 0.0
      %2296 = vmatprep.subr.mxu0 0.0
      %2297 = vmatpush2.msra.mxu0 0.0
      %2298 = vmatprep.mubr.f32.mxu0 0.0
      %2299 = vmatmul.mubr.f32.gmra.mxu0 %v854
      %v2300 = vpop.f32.mrf.mxu0
      %v2301 = vadd.f32 %v2163, %v2300
      %v2302 = vpop.f32.mrf.mxu0
      %2303 = vdwg.mxu0
      %2304 = vmatprep.subr.mxu0 0.0
      %2305 = vmatpush1.msra.mxu0 0.0
      %2306 = vmatprep.subr.mxu0 0.0
      %2307 = vmatpush1.msra.mxu0 0.0
      %2308 = vmatprep.subr.mxu0 0.0
      %2309 = vmatpush1.msra.mxu0 0.0
      %2310 = vmatprep.subr.mxu0 0.0
      %2311 = vmatpush1.msra.mxu0 0.0
      %2312 = vmatprep.subr.mxu0 0.0
      %2313 = vmatpush1.msra.mxu0 0.0
      %2314 = vmatprep.subr.mxu0 0.0
      %2315 = vmatpush1.msra.mxu0 0.0
      %2316 = vmatprep.subr.mxu0 0.0
      %2317 = vmatpush1.msra.mxu0 0.0
      %2318 = vmatprep.subr.mxu0 0.0
      %2319 = vmatpush1.msra.mxu0 0.0
      %2320 = vmatprep.subr.mxu0 0.0
      %2321 = vmatpush1.msra.mxu0 0.0
      %2322 = vmatprep.subr.mxu0 0.0
      %2323 = vmatpush1.msra.mxu0 0.0
      %2324 = vmatprep.subr.mxu0 0.0
      %2325 = vmatpush1.msra.mxu0 0.0
      %2326 = vmatprep.subr.mxu0 0.0
      %2327 = vmatpush1.msra.mxu0 0.0
      %2328 = vmatprep.subr.mxu0 0.0
      %2329 = vmatpush1.msra.mxu0 0.0
      %2330 = vmatprep.subr.mxu0 0.0
      %2331 = vmatpush1.msra.mxu0 0.0
      %2332 = vmatprep.subr.mxu0 0.0
      %2333 = vmatpush1.msra.mxu0 0.0
      %2334 = vmatprep.subr.mxu0 0.0
      %2335 = vmatpush1.msra.mxu0 %v2091
      %2336 = vmatprep.subr.mxu0 0.0
      %2337 = vmatpush2.msra.mxu0 0.0
      %2338 = vmatprep.subr.mxu0 0.0
      %2339 = vmatpush2.msra.mxu0 0.0
      %2340 = vmatprep.subr.mxu0 0.0
      %2341 = vmatpush2.msra.mxu0 0.0
      %2342 = vmatprep.subr.mxu0 0.0
      %2343 = vmatpush2.msra.mxu0 0.0
      %2344 = vmatprep.subr.mxu0 0.0
      %2345 = vmatpush2.msra.mxu0 0.0
      %2346 = vmatprep.subr.mxu0 0.0
      %2347 = vmatpush2.msra.mxu0 0.0
      %2348 = vmatprep.subr.mxu0 0.0
      %2349 = vmatpush2.msra.mxu0 0.0
      %2350 = vmatprep.subr.mxu0 0.0
      %2351 = vmatpush2.msra.mxu0 0.0
      %2352 = vmatprep.subr.mxu0 0.0
      %2353 = vmatpush2.msra.mxu0 0.0
      %2354 = vmatprep.subr.mxu0 0.0
      %2355 = vmatpush2.msra.mxu0 0.0
      %2356 = vmatprep.subr.mxu0 0.0
      %2357 = vmatpush2.msra.mxu0 0.0
      %2358 = vmatprep.subr.mxu0 0.0
      %2359 = vmatpush2.msra.mxu0 0.0
      %2360 = vmatprep.subr.mxu0 0.0
      %2361 = vmatpush2.msra.mxu0 0.0
      %2362 = vmatprep.subr.mxu0 0.0
      %2363 = vmatpush2.msra.mxu0 0.0
      %2364 = vmatprep.subr.mxu0 0.0
      %2365 = vmatpush2.msra.mxu0 0.0
      %2366 = vmatprep.subr.mxu0 0.0
      %2367 = vmatpush2.msra.mxu0 0.0
      %2368 = vmatprep.mubr.f32.mxu0 0.0
      %2369 = vmatmul.mubr.f32.gmra.mxu0 %v927
      %v2370 = vpop.f32.mrf.mxu0
      %v2371 = vadd.f32 %v2163, %v2370
      %v2372 = vpop.f32.mrf.mxu0
      %2373 = vdwg.mxu0
      %2374 = vmatprep.subr.mxu0 0.0
      %2375 = vmatpush1.msra.mxu0 0.0
      %2376 = vmatprep.subr.mxu0 0.0
      %2377 = vmatpush1.msra.mxu0 0.0
      %2378 = vmatprep.subr.mxu0 0.0
      %2379 = vmatpush1.msra.mxu0 0.0
      %2380 = vmatprep.subr.mxu0 0.0
      %2381 = vmatpush1.msra.mxu0 0.0
      %2382 = vmatprep.subr.mxu0 0.0
      %2383 = vmatpush1.msra.mxu0 0.0
      %2384 = vmatprep.subr.mxu0 0.0
      %2385 = vmatpush1.msra.mxu0 0.0
      %2386 = vmatprep.subr.mxu0 0.0
      %2387 = vmatpush1.msra.mxu0 0.0
      %2388 = vmatprep.subr.mxu0 0.0
      %2389 = vmatpush1.msra.mxu0 0.0
      %2390 = vmatprep.subr.mxu0 0.0
      %2391 = vmatpush1.msra.mxu0 0.0
      %2392 = vmatprep.subr.mxu0 0.0
      %2393 = vmatpush1.msra.mxu0 0.0
      %2394 = vmatprep.subr.mxu0 0.0
      %2395 = vmatpush1.msra.mxu0 0.0
      %2396 = vmatprep.subr.mxu0 0.0
      %2397 = vmatpush1.msra.mxu0 0.0
      %2398 = vmatprep.subr.mxu0 0.0
      %2399 = vmatpush1.msra.mxu0 0.0
      %2400 = vmatprep.subr.mxu0 0.0
      %2401 = vmatpush1.msra.mxu0 0.0
      %2402 = vmatprep.subr.mxu0 0.0
      %2403 = vmatpush1.msra.mxu0 0.0
      %2404 = vmatprep.subr.mxu0 0.0
      %2405 = vmatpush1.msra.mxu0 %v2096
      %2406 = vmatprep.subr.mxu0 0.0
      %2407 = vmatpush2.msra.mxu0 0.0
      %2408 = vmatprep.subr.mxu0 0.0
      %2409 = vmatpush2.msra.mxu0 0.0
      %2410 = vmatprep.subr.mxu0 0.0
      %2411 = vmatpush2.msra.mxu0 0.0
      %2412 = vmatprep.subr.mxu0 0.0
      %2413 = vmatpush2.msra.mxu0 0.0
      %2414 = vmatprep.subr.mxu0 0.0
      %2415 = vmatpush2.msra.mxu0 0.0
      %2416 = vmatprep.subr.mxu0 0.0
      %2417 = vmatpush2.msra.mxu0 0.0
      %2418 = vmatprep.subr.mxu0 0.0
      %2419 = vmatpush2.msra.mxu0 0.0
      %2420 = vmatprep.subr.mxu0 0.0
      %2421 = vmatpush2.msra.mxu0 0.0
      %2422 = vmatprep.subr.mxu0 0.0
      %2423 = vmatpush2.msra.mxu0 0.0
      %2424 = vmatprep.subr.mxu0 0.0
      %2425 = vmatpush2.msra.mxu0 0.0
      %2426 = vmatprep.subr.mxu0 0.0
      %2427 = vmatpush2.msra.mxu0 0.0
      %2428 = vmatprep.subr.mxu0 0.0
      %2429 = vmatpush2.msra.mxu0 0.0
      %2430 = vmatprep.subr.mxu0 0.0
      %2431 = vmatpush2.msra.mxu0 0.0
      %2432 = vmatprep.subr.mxu0 0.0
      %2433 = vmatpush2.msra.mxu0 0.0
      %2434 = vmatprep.subr.mxu0 0.0
      %2435 = vmatpush2.msra.mxu0 0.0
      %2436 = vmatprep.subr.mxu0 0.0
      %2437 = vmatpush2.msra.mxu0 0.0
      %2438 = vmatprep.mubr.f32.mxu0 0.0
      %2439 = vmatmul.mubr.f32.gmra.mxu0 %v1000
      %v2440 = vpop.f32.mrf.mxu0
      %v2441 = vadd.f32 %v2163, %v2440
      %v2442 = vpop.f32.mrf.mxu0
      %2443 = vdwg.mxu0
      %2444 = vmatprep.subr.mxu0 0.0
      %2445 = vmatpush1.msra.mxu0 0.0
      %2446 = vmatprep.subr.mxu0 0.0
      %2447 = vmatpush1.msra.mxu0 0.0
      %2448 = vmatprep.subr.mxu0 0.0
      %2449 = vmatpush1.msra.mxu0 0.0
      %2450 = vmatprep.subr.mxu0 0.0
      %2451 = vmatpush1.msra.mxu0 0.0
      %2452 = vmatprep.subr.mxu0 0.0
      %2453 = vmatpush1.msra.mxu0 0.0
      %2454 = vmatprep.subr.mxu0 0.0
      %2455 = vmatpush1.msra.mxu0 0.0
      %2456 = vmatprep.subr.mxu0 0.0
      %2457 = vmatpush1.msra.mxu0 0.0
      %2458 = vmatprep.subr.mxu0 0.0
      %2459 = vmatpush1.msra.mxu0 0.0
      %2460 = vmatprep.subr.mxu0 0.0
      %2461 = vmatpush1.msra.mxu0 0.0
      %2462 = vmatprep.subr.mxu0 0.0
      %2463 = vmatpush1.msra.mxu0 0.0
      %2464 = vmatprep.subr.mxu0 0.0
      %2465 = vmatpush1.msra.mxu0 0.0
      %2466 = vmatprep.subr.mxu0 0.0
      %2467 = vmatpush1.msra.mxu0 0.0
      %2468 = vmatprep.subr.mxu0 0.0
      %2469 = vmatpush1.msra.mxu0 0.0
      %2470 = vmatprep.subr.mxu0 0.0
      %2471 = vmatpush1.msra.mxu0 0.0
      %2472 = vmatprep.subr.mxu0 0.0
      %2473 = vmatpush1.msra.mxu0 0.0
      %2474 = vmatprep.subr.mxu0 0.0
      %2475 = vmatpush1.msra.mxu0 %v2101
      %2476 = vmatprep.subr.mxu0 0.0
      %2477 = vmatpush2.msra.mxu0 0.0
      %2478 = vmatprep.subr.mxu0 0.0
      %2479 = vmatpush2.msra.mxu0 0.0
      %2480 = vmatprep.subr.mxu0 0.0
      %2481 = vmatpush2.msra.mxu0 0.0
      %2482 = vmatprep.subr.mxu0 0.0
      %2483 = vmatpush2.msra.mxu0 0.0
      %2484 = vmatprep.subr.mxu0 0.0
      %2485 = vmatpush2.msra.mxu0 0.0
      %2486 = vmatprep.subr.mxu0 0.0
      %2487 = vmatpush2.msra.mxu0 0.0
      %2488 = vmatprep.subr.mxu0 0.0
      %2489 = vmatpush2.msra.mxu0 0.0
      %2490 = vmatprep.subr.mxu0 0.0
      %2491 = vmatpush2.msra.mxu0 0.0
      %2492 = vmatprep.subr.mxu0 0.0
      %2493 = vmatpush2.msra.mxu0 0.0
      %2494 = vmatprep.subr.mxu0 0.0
      %2495 = vmatpush2.msra.mxu0 0.0
      %2496 = vmatprep.subr.mxu0 0.0
      %2497 = vmatpush2.msra.mxu0 0.0
      %2498 = vmatprep.subr.mxu0 0.0
      %2499 = vmatpush2.msra.mxu0 0.0
      %2500 = vmatprep.subr.mxu0 0.0
      %2501 = vmatpush2.msra.mxu0 0.0
      %2502 = vmatprep.subr.mxu0 0.0
      %2503 = vmatpush2.msra.mxu0 0.0
      %2504 = vmatprep.subr.mxu0 0.0
      %2505 = vmatpush2.msra.mxu0 0.0
      %2506 = vmatprep.subr.mxu0 0.0
      %2507 = vmatpush2.msra.mxu0 0.0
      %2508 = vmatprep.mubr.f32.mxu0 0.0
      %2509 = vmatmul.mubr.f32.gmra.mxu0 %v1073
      %v2510 = vpop.f32.mrf.mxu0
      %v2511 = vadd.f32 %v2163, %v2510
      %v2512 = vpop.f32.mrf.mxu0
      %2513 = vdwg.mxu0
      %2514 = vmatprep.subr.mxu0 0.0
      %2515 = vmatpush1.msra.mxu0 0.0
      %2516 = vmatprep.subr.mxu0 0.0
      %2517 = vmatpush1.msra.mxu0 0.0
      %2518 = vmatprep.subr.mxu0 0.0
      %2519 = vmatpush1.msra.mxu0 0.0
      %2520 = vmatprep.subr.mxu0 0.0
      %2521 = vmatpush1.msra.mxu0 0.0
      %2522 = vmatprep.subr.mxu0 0.0
      %2523 = vmatpush1.msra.mxu0 0.0
      %2524 = vmatprep.subr.mxu0 0.0
      %2525 = vmatpush1.msra.mxu0 0.0
      %2526 = vmatprep.subr.mxu0 0.0
      %2527 = vmatpush1.msra.mxu0 0.0
      %2528 = vmatprep.subr.mxu0 0.0
      %2529 = vmatpush1.msra.mxu0 0.0
      %2530 = vmatprep.subr.mxu0 0.0
      %2531 = vmatpush1.msra.mxu0 0.0
      %2532 = vmatprep.subr.mxu0 0.0
      %2533 = vmatpush1.msra.mxu0 0.0
      %2534 = vmatprep.subr.mxu0 0.0
      %2535 = vmatpush1.msra.mxu0 0.0
      %2536 = vmatprep.subr.mxu0 0.0
      %2537 = vmatpush1.msra.mxu0 0.0
      %2538 = vmatprep.subr.mxu0 0.0
      %2539 = vmatpush1.msra.mxu0 0.0
      %2540 = vmatprep.subr.mxu0 0.0
      %2541 = vmatpush1.msra.mxu0 0.0
      %2542 = vmatprep.subr.mxu0 0.0
      %2543 = vmatpush1.msra.mxu0 0.0
      %2544 = vmatprep.subr.mxu0 0.0
      %2545 = vmatpush1.msra.mxu0 %v2106
      %2546 = vmatprep.subr.mxu0 0.0
      %2547 = vmatpush2.msra.mxu0 0.0
      %2548 = vmatprep.subr.mxu0 0.0
      %2549 = vmatpush2.msra.mxu0 0.0
      %2550 = vmatprep.subr.mxu0 0.0
      %2551 = vmatpush2.msra.mxu0 0.0
      %2552 = vmatprep.subr.mxu0 0.0
      %2553 = vmatpush2.msra.mxu0 0.0
      %2554 = vmatprep.subr.mxu0 0.0
      %2555 = vmatpush2.msra.mxu0 0.0
      %2556 = vmatprep.subr.mxu0 0.0
      %2557 = vmatpush2.msra.mxu0 0.0
      %2558 = vmatprep.subr.mxu0 0.0
      %2559 = vmatpush2.msra.mxu0 0.0
      %2560 = vmatprep.subr.mxu0 0.0
      %2561 = vmatpush2.msra.mxu0 0.0
      %2562 = vmatprep.subr.mxu0 0.0
      %2563 = vmatpush2.msra.mxu0 0.0
      %2564 = vmatprep.subr.mxu0 0.0
      %2565 = vmatpush2.msra.mxu0 0.0
      %2566 = vmatprep.subr.mxu0 0.0
      %2567 = vmatpush2.msra.mxu0 0.0
      %2568 = vmatprep.subr.mxu0 0.0
      %2569 = vmatpush2.msra.mxu0 0.0
      %2570 = vmatprep.subr.mxu0 0.0
      %2571 = vmatpush2.msra.mxu0 0.0
      %2572 = vmatprep.subr.mxu0 0.0
      %2573 = vmatpush2.msra.mxu0 0.0
      %2574 = vmatprep.subr.mxu0 0.0
      %2575 = vmatpush2.msra.mxu0 0.0
      %2576 = vmatprep.subr.mxu0 0.0
      %2577 = vmatpush2.msra.mxu0 0.0
      %2578 = vmatprep.mubr.f32.mxu0 0.0
      %2579 = vmatmul.mubr.f32.gmra.mxu0 %v1146
      %v2580 = vpop.f32.mrf.mxu0
      %v2581 = vadd.f32 %v2163, %v2580
      %v2582 = vpop.f32.mrf.mxu0
      %2583 = vdwg.mxu0
      %2584 = vmatprep.subr.mxu0 0.0
      %2585 = vmatpush1.msra.mxu0 0.0
      %2586 = vmatprep.subr.mxu0 0.0
      %2587 = vmatpush1.msra.mxu0 0.0
      %2588 = vmatprep.subr.mxu0 0.0
      %2589 = vmatpush1.msra.mxu0 0.0
      %2590 = vmatprep.subr.mxu0 0.0
      %2591 = vmatpush1.msra.mxu0 0.0
      %2592 = vmatprep.subr.mxu0 0.0
      %2593 = vmatpush1.msra.mxu0 0.0
      %2594 = vmatprep.subr.mxu0 0.0
      %2595 = vmatpush1.msra.mxu0 0.0
      %2596 = vmatprep.subr.mxu0 0.0
      %2597 = vmatpush1.msra.mxu0 0.0
      %2598 = vmatprep.subr.mxu0 0.0
      %2599 = vmatpush1.msra.mxu0 0.0
      %2600 = vmatprep.subr.mxu0 0.0
      %2601 = vmatpush1.msra.mxu0 0.0
      %2602 = vmatprep.subr.mxu0 0.0
      %2603 = vmatpush1.msra.mxu0 0.0
      %2604 = vmatprep.subr.mxu0 0.0
      %2605 = vmatpush1.msra.mxu0 0.0
      %2606 = vmatprep.subr.mxu0 0.0
      %2607 = vmatpush1.msra.mxu0 0.0
      %2608 = vmatprep.subr.mxu0 0.0
      %2609 = vmatpush1.msra.mxu0 0.0
      %2610 = vmatprep.subr.mxu0 0.0
      %2611 = vmatpush1.msra.mxu0 0.0
      %2612 = vmatprep.subr.mxu0 0.0
      %2613 = vmatpush1.msra.mxu0 0.0
      %2614 = vmatprep.subr.mxu0 0.0
      %2615 = vmatpush1.msra.mxu0 %v2111
      %2616 = vmatprep.subr.mxu0 0.0
      %2617 = vmatpush2.msra.mxu0 0.0
      %2618 = vmatprep.subr.mxu0 0.0
      %2619 = vmatpush2.msra.mxu0 0.0
      %2620 = vmatprep.subr.mxu0 0.0
      %2621 = vmatpush2.msra.mxu0 0.0
      %2622 = vmatprep.subr.mxu0 0.0
      %2623 = vmatpush2.msra.mxu0 0.0
      %2624 = vmatprep.subr.mxu0 0.0
      %2625 = vmatpush2.msra.mxu0 0.0
      %2626 = vmatprep.subr.mxu0 0.0
      %2627 = vmatpush2.msra.mxu0 0.0
      %2628 = vmatprep.subr.mxu0 0.0
      %2629 = vmatpush2.msra.mxu0 0.0
      %2630 = vmatprep.subr.mxu0 0.0
      %2631 = vmatpush2.msra.mxu0 0.0
      %2632 = vmatprep.subr.mxu0 0.0
      %2633 = vmatpush2.msra.mxu0 0.0
      %2634 = vmatprep.subr.mxu0 0.0
      %2635 = vmatpush2.msra.mxu0 0.0
      %2636 = vmatprep.subr.mxu0 0.0
      %2637 = vmatpush2.msra.mxu0 0.0
      %2638 = vmatprep.subr.mxu0 0.0
      %2639 = vmatpush2.msra.mxu0 0.0
      %2640 = vmatprep.subr.mxu0 0.0
      %2641 = vmatpush2.msra.mxu0 0.0
      %2642 = vmatprep.subr.mxu0 0.0
      %2643 = vmatpush2.msra.mxu0 0.0
      %2644 = vmatprep.subr.mxu0 0.0
      %2645 = vmatpush2.msra.mxu0 0.0
      %2646 = vmatprep.subr.mxu0 0.0
      %2647 = vmatpush2.msra.mxu0 0.0
      %2648 = vmatprep.mubr.f32.mxu0 0.0
      %2649 = vmatmul.mubr.f32.gmra.mxu0 %v1219
      %v2650 = vpop.f32.mrf.mxu0
      %v2651 = vadd.f32 %v2163, %v2650
      %v2652 = vpop.f32.mrf.mxu0
      %2653 = vdwg.mxu0
      %2654 = vmatprep.subr.mxu0 0.0
      %2655 = vmatpush1.msra.mxu0 0.0
      %2656 = vmatprep.subr.mxu0 0.0
      %2657 = vmatpush1.msra.mxu0 0.0
      %2658 = vmatprep.subr.mxu0 0.0
      %2659 = vmatpush1.msra.mxu0 0.0
      %2660 = vmatprep.subr.mxu0 0.0
      %2661 = vmatpush1.msra.mxu0 0.0
      %2662 = vmatprep.subr.mxu0 0.0
      %2663 = vmatpush1.msra.mxu0 0.0
      %2664 = vmatprep.subr.mxu0 0.0
      %2665 = vmatpush1.msra.mxu0 0.0
      %2666 = vmatprep.subr.mxu0 0.0
      %2667 = vmatpush1.msra.mxu0 0.0
      %2668 = vmatprep.subr.mxu0 0.0
      %2669 = vmatpush1.msra.mxu0 0.0
      %2670 = vmatprep.subr.mxu0 0.0
      %2671 = vmatpush1.msra.mxu0 0.0
      %2672 = vmatprep.subr.mxu0 0.0
      %2673 = vmatpush1.msra.mxu0 0.0
      %2674 = vmatprep.subr.mxu0 0.0
      %2675 = vmatpush1.msra.mxu0 0.0
      %2676 = vmatprep.subr.mxu0 0.0
      %2677 = vmatpush1.msra.mxu0 0.0
      %2678 = vmatprep.subr.mxu0 0.0
      %2679 = vmatpush1.msra.mxu0 0.0
      %2680 = vmatprep.subr.mxu0 0.0
      %2681 = vmatpush1.msra.mxu0 0.0
      %2682 = vmatprep.subr.mxu0 0.0
      %2683 = vmatpush1.msra.mxu0 0.0
      %2684 = vmatprep.subr.mxu0 0.0
      %2685 = vmatpush1.msra.mxu0 %v2116
      %2686 = vmatprep.subr.mxu0 0.0
      %2687 = vmatpush2.msra.mxu0 0.0
      %2688 = vmatprep.subr.mxu0 0.0
      %2689 = vmatpush2.msra.mxu0 0.0
      %2690 = vmatprep.subr.mxu0 0.0
      %2691 = vmatpush2.msra.mxu0 0.0
      %2692 = vmatprep.subr.mxu0 0.0
      %2693 = vmatpush2.msra.mxu0 0.0
      %2694 = vmatprep.subr.mxu0 0.0
      %2695 = vmatpush2.msra.mxu0 0.0
      %2696 = vmatprep.subr.mxu0 0.0
      %2697 = vmatpush2.msra.mxu0 0.0
      %2698 = vmatprep.subr.mxu0 0.0
      %2699 = vmatpush2.msra.mxu0 0.0
      %2700 = vmatprep.subr.mxu0 0.0
      %2701 = vmatpush2.msra.mxu0 0.0
      %2702 = vmatprep.subr.mxu0 0.0
      %2703 = vmatpush2.msra.mxu0 0.0
      %2704 = vmatprep.subr.mxu0 0.0
      %2705 = vmatpush2.msra.mxu0 0.0
      %2706 = vmatprep.subr.mxu0 0.0
      %2707 = vmatpush2.msra.mxu0 0.0
      %2708 = vmatprep.subr.mxu0 0.0
      %2709 = vmatpush2.msra.mxu0 0.0
      %2710 = vmatprep.subr.mxu0 0.0
      %2711 = vmatpush2.msra.mxu0 0.0
      %2712 = vmatprep.subr.mxu0 0.0
      %2713 = vmatpush2.msra.mxu0 0.0
      %2714 = vmatprep.subr.mxu0 0.0
      %2715 = vmatpush2.msra.mxu0 0.0
      %2716 = vmatprep.subr.mxu0 0.0
      %2717 = vmatpush2.msra.mxu0 0.0
      %2718 = vmatprep.mubr.f32.mxu0 0.0
      %2719 = vmatmul.mubr.f32.gmra.mxu0 %v1292
      %v2720 = vpop.f32.mrf.mxu0
      %v2721 = vadd.f32 %v2163, %v2720
      %v2722 = vpop.f32.mrf.mxu0
      %2723 = vdwg.mxu0
      %2724 = vmatprep.subr.mxu0 0.0
      %2725 = vmatpush1.msra.mxu0 0.0
      %2726 = vmatprep.subr.mxu0 0.0
      %2727 = vmatpush1.msra.mxu0 0.0
      %2728 = vmatprep.subr.mxu0 0.0
      %2729 = vmatpush1.msra.mxu0 0.0
      %2730 = vmatprep.subr.mxu0 0.0
      %2731 = vmatpush1.msra.mxu0 0.0
      %2732 = vmatprep.subr.mxu0 0.0
      %2733 = vmatpush1.msra.mxu0 0.0
      %2734 = vmatprep.subr.mxu0 0.0
      %2735 = vmatpush1.msra.mxu0 0.0
      %2736 = vmatprep.subr.mxu0 0.0
      %2737 = vmatpush1.msra.mxu0 0.0
      %2738 = vmatprep.subr.mxu0 0.0
      %2739 = vmatpush1.msra.mxu0 0.0
      %2740 = vmatprep.subr.mxu0 0.0
      %2741 = vmatpush1.msra.mxu0 0.0
      %2742 = vmatprep.subr.mxu0 0.0
      %2743 = vmatpush1.msra.mxu0 0.0
      %2744 = vmatprep.subr.mxu0 0.0
      %2745 = vmatpush1.msra.mxu0 0.0
      %2746 = vmatprep.subr.mxu0 0.0
      %2747 = vmatpush1.msra.mxu0 0.0
      %2748 = vmatprep.subr.mxu0 0.0
      %2749 = vmatpush1.msra.mxu0 0.0
      %2750 = vmatprep.subr.mxu0 0.0
      %2751 = vmatpush1.msra.mxu0 0.0
      %2752 = vmatprep.subr.mxu0 0.0
      %2753 = vmatpush1.msra.mxu0 0.0
      %2754 = vmatprep.subr.mxu0 0.0
      %2755 = vmatpush1.msra.mxu0 %v2121
      %2756 = vmatprep.subr.mxu0 0.0
      %2757 = vmatpush2.msra.mxu0 0.0
      %2758 = vmatprep.subr.mxu0 0.0
      %2759 = vmatpush2.msra.mxu0 0.0
      %2760 = vmatprep.subr.mxu0 0.0
      %2761 = vmatpush2.msra.mxu0 0.0
      %2762 = vmatprep.subr.mxu0 0.0
      %2763 = vmatpush2.msra.mxu0 0.0
      %2764 = vmatprep.subr.mxu0 0.0
      %2765 = vmatpush2.msra.mxu0 0.0
      %2766 = vmatprep.subr.mxu0 0.0
      %2767 = vmatpush2.msra.mxu0 0.0
      %2768 = vmatprep.subr.mxu0 0.0
      %2769 = vmatpush2.msra.mxu0 0.0
      %2770 = vmatprep.subr.mxu0 0.0
      %2771 = vmatpush2.msra.mxu0 0.0
      %2772 = vmatprep.subr.mxu0 0.0
      %2773 = vmatpush2.msra.mxu0 0.0
      %2774 = vmatprep.subr.mxu0 0.0
      %2775 = vmatpush2.msra.mxu0 0.0
      %2776 = vmatprep.subr.mxu0 0.0
      %2777 = vmatpush2.msra.mxu0 0.0
      %2778 = vmatprep.subr.mxu0 0.0
      %2779 = vmatpush2.msra.mxu0 0.0
      %2780 = vmatprep.subr.mxu0 0.0
      %2781 = vmatpush2.msra.mxu0 0.0
      %2782 = vmatprep.subr.mxu0 0.0
      %2783 = vmatpush2.msra.mxu0 0.0
      %2784 = vmatprep.subr.mxu0 0.0
      %2785 = vmatpush2.msra.mxu0 0.0
      %2786 = vmatprep.subr.mxu0 0.0
      %2787 = vmatpush2.msra.mxu0 0.0
      %2788 = vmatprep.mubr.f32.mxu0 0.0
      %2789 = vmatmul.mubr.f32.gmra.mxu0 %v1365
      %v2790 = vpop.f32.mrf.mxu0
      %v2791 = vadd.f32 %v2163, %v2790
      %v2792 = vpop.f32.mrf.mxu0
      %2793 = vdwg.mxu0
      %2794 = vmatprep.subr.mxu0 0.0
      %2795 = vmatpush1.msra.mxu0 0.0
      %2796 = vmatprep.subr.mxu0 0.0
      %2797 = vmatpush1.msra.mxu0 0.0
      %2798 = vmatprep.subr.mxu0 0.0
      %2799 = vmatpush1.msra.mxu0 0.0
      %2800 = vmatprep.subr.mxu0 0.0
      %2801 = vmatpush1.msra.mxu0 0.0
      %2802 = vmatprep.subr.mxu0 0.0
      %2803 = vmatpush1.msra.mxu0 0.0
      %2804 = vmatprep.subr.mxu0 0.0
      %2805 = vmatpush1.msra.mxu0 0.0
      %2806 = vmatprep.subr.mxu0 0.0
      %2807 = vmatpush1.msra.mxu0 0.0
      %2808 = vmatprep.subr.mxu0 0.0
      %2809 = vmatpush1.msra.mxu0 0.0
      %2810 = vmatprep.subr.mxu0 0.0
      %2811 = vmatpush1.msra.mxu0 0.0
      %2812 = vmatprep.subr.mxu0 0.0
      %2813 = vmatpush1.msra.mxu0 0.0
      %2814 = vmatprep.subr.mxu0 0.0
      %2815 = vmatpush1.msra.mxu0 0.0
      %2816 = vmatprep.subr.mxu0 0.0
      %2817 = vmatpush1.msra.mxu0 0.0
      %2818 = vmatprep.subr.mxu0 0.0
      %2819 = vmatpush1.msra.mxu0 0.0
      %2820 = vmatprep.subr.mxu0 0.0
      %2821 = vmatpush1.msra.mxu0 0.0
      %2822 = vmatprep.subr.mxu0 0.0
      %2823 = vmatpush1.msra.mxu0 0.0
      %2824 = vmatprep.subr.mxu0 0.0
      %2825 = vmatpush1.msra.mxu0 %v2126
      %2826 = vmatprep.subr.mxu0 0.0
      %2827 = vmatpush2.msra.mxu0 0.0
      %2828 = vmatprep.subr.mxu0 0.0
      %2829 = vmatpush2.msra.mxu0 0.0
      %2830 = vmatprep.subr.mxu0 0.0
      %2831 = vmatpush2.msra.mxu0 0.0
      %2832 = vmatprep.subr.mxu0 0.0
      %2833 = vmatpush2.msra.mxu0 0.0
      %2834 = vmatprep.subr.mxu0 0.0
      %2835 = vmatpush2.msra.mxu0 0.0
      %2836 = vmatprep.subr.mxu0 0.0
      %2837 = vmatpush2.msra.mxu0 0.0
      %2838 = vmatprep.subr.mxu0 0.0
      %2839 = vmatpush2.msra.mxu0 0.0
      %2840 = vmatprep.subr.mxu0 0.0
      %2841 = vmatpush2.msra.mxu0 0.0
      %2842 = vmatprep.subr.mxu0 0.0
      %2843 = vmatpush2.msra.mxu0 0.0
      %2844 = vmatprep.subr.mxu0 0.0
      %2845 = vmatpush2.msra.mxu0 0.0
      %2846 = vmatprep.subr.mxu0 0.0
      %2847 = vmatpush2.msra.mxu0 0.0
      %2848 = vmatprep.subr.mxu0 0.0
      %2849 = vmatpush2.msra.mxu0 0.0
      %2850 = vmatprep.subr.mxu0 0.0
      %2851 = vmatpush2.msra.mxu0 0.0
      %2852 = vmatprep.subr.mxu0 0.0
      %2853 = vmatpush2.msra.mxu0 0.0
      %2854 = vmatprep.subr.mxu0 0.0
      %2855 = vmatpush2.msra.mxu0 0.0
      %2856 = vmatprep.subr.mxu0 0.0
      %2857 = vmatpush2.msra.mxu0 0.0
      %2858 = vmatprep.mubr.f32.mxu0 0.0
      %2859 = vmatmul.mubr.f32.gmra.mxu0 %v1438
      %v2860 = vpop.f32.mrf.mxu0
      %v2861 = vadd.f32 %v2163, %v2860
      %v2862 = vpop.f32.mrf.mxu0
      %2863 = vdwg.mxu0
      %2864 = vmatprep.subr.mxu0 0.0
      %2865 = vmatpush1.msra.mxu0 0.0
      %2866 = vmatprep.subr.mxu0 0.0
      %2867 = vmatpush1.msra.mxu0 0.0
      %2868 = vmatprep.subr.mxu0 0.0
      %2869 = vmatpush1.msra.mxu0 0.0
      %2870 = vmatprep.subr.mxu0 0.0
      %2871 = vmatpush1.msra.mxu0 0.0
      %2872 = vmatprep.subr.mxu0 0.0
      %2873 = vmatpush1.msra.mxu0 0.0
      %2874 = vmatprep.subr.mxu0 0.0
      %2875 = vmatpush1.msra.mxu0 0.0
      %2876 = vmatprep.subr.mxu0 0.0
      %2877 = vmatpush1.msra.mxu0 0.0
      %2878 = vmatprep.subr.mxu0 0.0
      %2879 = vmatpush1.msra.mxu0 0.0
      %2880 = vmatprep.subr.mxu0 0.0
      %2881 = vmatpush1.msra.mxu0 0.0
      %2882 = vmatprep.subr.mxu0 0.0
      %2883 = vmatpush1.msra.mxu0 0.0
      %2884 = vmatprep.subr.mxu0 0.0
      %2885 = vmatpush1.msra.mxu0 0.0
      %2886 = vmatprep.subr.mxu0 0.0
      %2887 = vmatpush1.msra.mxu0 0.0
      %2888 = vmatprep.subr.mxu0 0.0
      %2889 = vmatpush1.msra.mxu0 0.0
      %2890 = vmatprep.subr.mxu0 0.0
      %2891 = vmatpush1.msra.mxu0 0.0
      %2892 = vmatprep.subr.mxu0 0.0
      %2893 = vmatpush1.msra.mxu0 0.0
      %2894 = vmatprep.subr.mxu0 0.0
      %2895 = vmatpush1.msra.mxu0 %v2131
      %2896 = vmatprep.subr.mxu0 0.0
      %2897 = vmatpush2.msra.mxu0 0.0
      %2898 = vmatprep.subr.mxu0 0.0
      %2899 = vmatpush2.msra.mxu0 0.0
      %2900 = vmatprep.subr.mxu0 0.0
      %2901 = vmatpush2.msra.mxu0 0.0
      %2902 = vmatprep.subr.mxu0 0.0
      %2903 = vmatpush2.msra.mxu0 0.0
      %2904 = vmatprep.subr.mxu0 0.0
      %2905 = vmatpush2.msra.mxu0 0.0
      %2906 = vmatprep.subr.mxu0 0.0
      %2907 = vmatpush2.msra.mxu0 0.0
      %2908 = vmatprep.subr.mxu0 0.0
      %2909 = vmatpush2.msra.mxu0 0.0
      %2910 = vmatprep.subr.mxu0 0.0
      %2911 = vmatpush2.msra.mxu0 0.0
      %2912 = vmatprep.subr.mxu0 0.0
      %2913 = vmatpush2.msra.mxu0 0.0
      %2914 = vmatprep.subr.mxu0 0.0
      %2915 = vmatpush2.msra.mxu0 0.0
      %2916 = vmatprep.subr.mxu0 0.0
      %2917 = vmatpush2.msra.mxu0 0.0
      %2918 = vmatprep.subr.mxu0 0.0
      %2919 = vmatpush2.msra.mxu0 0.0
      %2920 = vmatprep.subr.mxu0 0.0
      %2921 = vmatpush2.msra.mxu0 0.0
      %2922 = vmatprep.subr.mxu0 0.0
      %2923 = vmatpush2.msra.mxu0 0.0
      %2924 = vmatprep.subr.mxu0 0.0
      %2925 = vmatpush2.msra.mxu0 0.0
      %2926 = vmatprep.subr.mxu0 0.0
      %2927 = vmatpush2.msra.mxu0 0.0
      %2928 = vmatprep.mubr.f32.mxu0 0.0
      %2929 = vmatmul.mubr.f32.gmra.mxu0 %v1511
      %v2930 = vpop.f32.mrf.mxu0
      %v2931 = vadd.f32 %v2163, %v2930
      %v2932 = vpop.f32.mrf.mxu0
      %2933 = vdwg.mxu0
      %2934 = vmatprep.subr.mxu0 0.0
      %2935 = vmatpush1.msra.mxu0 0.0
      %2936 = vmatprep.subr.mxu0 0.0
      %2937 = vmatpush1.msra.mxu0 0.0
      %2938 = vmatprep.subr.mxu0 0.0
      %2939 = vmatpush1.msra.mxu0 0.0
      %2940 = vmatprep.subr.mxu0 0.0
      %2941 = vmatpush1.msra.mxu0 0.0
      %2942 = vmatprep.subr.mxu0 0.0
      %2943 = vmatpush1.msra.mxu0 0.0
      %2944 = vmatprep.subr.mxu0 0.0
      %2945 = vmatpush1.msra.mxu0 0.0
      %2946 = vmatprep.subr.mxu0 0.0
      %2947 = vmatpush1.msra.mxu0 0.0
      %2948 = vmatprep.subr.mxu0 0.0
      %2949 = vmatpush1.msra.mxu0 0.0
      %2950 = vmatprep.subr.mxu0 0.0
      %2951 = vmatpush1.msra.mxu0 0.0
      %2952 = vmatprep.subr.mxu0 0.0
      %2953 = vmatpush1.msra.mxu0 0.0
      %2954 = vmatprep.subr.mxu0 0.0
      %2955 = vmatpush1.msra.mxu0 0.0
      %2956 = vmatprep.subr.mxu0 0.0
      %2957 = vmatpush1.msra.mxu0 0.0
      %2958 = vmatprep.subr.mxu0 0.0
      %2959 = vmatpush1.msra.mxu0 0.0
      %2960 = vmatprep.subr.mxu0 0.0
      %2961 = vmatpush1.msra.mxu0 0.0
      %2962 = vmatprep.subr.mxu0 0.0
      %2963 = vmatpush1.msra.mxu0 0.0
      %2964 = vmatprep.subr.mxu0 0.0
      %2965 = vmatpush1.msra.mxu0 %v2136
      %2966 = vmatprep.subr.mxu0 0.0
      %2967 = vmatpush2.msra.mxu0 0.0
      %2968 = vmatprep.subr.mxu0 0.0
      %2969 = vmatpush2.msra.mxu0 0.0
      %2970 = vmatprep.subr.mxu0 0.0
      %2971 = vmatpush2.msra.mxu0 0.0
      %2972 = vmatprep.subr.mxu0 0.0
      %2973 = vmatpush2.msra.mxu0 0.0
      %2974 = vmatprep.subr.mxu0 0.0
      %2975 = vmatpush2.msra.mxu0 0.0
      %2976 = vmatprep.subr.mxu0 0.0
      %2977 = vmatpush2.msra.mxu0 0.0
      %2978 = vmatprep.subr.mxu0 0.0
      %2979 = vmatpush2.msra.mxu0 0.0
      %2980 = vmatprep.subr.mxu0 0.0
      %2981 = vmatpush2.msra.mxu0 0.0
      %2982 = vmatprep.subr.mxu0 0.0
      %2983 = vmatpush2.msra.mxu0 0.0
      %2984 = vmatprep.subr.mxu0 0.0
      %2985 = vmatpush2.msra.mxu0 0.0
      %2986 = vmatprep.subr.mxu0 0.0
      %2987 = vmatpush2.msra.mxu0 0.0
      %2988 = vmatprep.subr.mxu0 0.0
      %2989 = vmatpush2.msra.mxu0 0.0
      %2990 = vmatprep.subr.mxu0 0.0
      %2991 = vmatpush2.msra.mxu0 0.0
      %2992 = vmatprep.subr.mxu0 0.0
      %2993 = vmatpush2.msra.mxu0 0.0
      %2994 = vmatprep.subr.mxu0 0.0
      %2995 = vmatpush2.msra.mxu0 0.0
      %2996 = vmatprep.subr.mxu0 0.0
      %2997 = vmatpush2.msra.mxu0 0.0
      %2998 = vmatprep.mubr.f32.mxu0 0.0
      %2999 = vmatmul.mubr.f32.gmra.mxu0 %v1584
      %v3000 = vpop.f32.mrf.mxu0
      %v3001 = vadd.f32 %v2163, %v3000
      %v3002 = vpop.f32.mrf.mxu0
      %3003 = vdwg.mxu0
      %3004 = vmatprep.subr.mxu0 0.0
      %3005 = vmatpush1.msra.mxu0 0.0
      %3006 = vmatprep.subr.mxu0 0.0
      %3007 = vmatpush1.msra.mxu0 0.0
      %3008 = vmatprep.subr.mxu0 0.0
      %3009 = vmatpush1.msra.mxu0 0.0
      %3010 = vmatprep.subr.mxu0 0.0
      %3011 = vmatpush1.msra.mxu0 0.0
      %3012 = vmatprep.subr.mxu0 0.0
      %3013 = vmatpush1.msra.mxu0 0.0
      %3014 = vmatprep.subr.mxu0 0.0
      %3015 = vmatpush1.msra.mxu0 0.0
      %3016 = vmatprep.subr.mxu0 0.0
      %3017 = vmatpush1.msra.mxu0 0.0
      %3018 = vmatprep.subr.mxu0 0.0
      %3019 = vmatpush1.msra.mxu0 0.0
      %3020 = vmatprep.subr.mxu0 0.0
      %3021 = vmatpush1.msra.mxu0 0.0
      %3022 = vmatprep.subr.mxu0 0.0
      %3023 = vmatpush1.msra.mxu0 0.0
      %3024 = vmatprep.subr.mxu0 0.0
      %3025 = vmatpush1.msra.mxu0 0.0
      %3026 = vmatprep.subr.mxu0 0.0
      %3027 = vmatpush1.msra.mxu0 0.0
      %3028 = vmatprep.subr.mxu0 0.0
      %3029 = vmatpush1.msra.mxu0 0.0
      %3030 = vmatprep.subr.mxu0 0.0
      %3031 = vmatpush1.msra.mxu0 0.0
      %3032 = vmatprep.subr.mxu0 0.0
      %3033 = vmatpush1.msra.mxu0 0.0
      %3034 = vmatprep.subr.mxu0 0.0
      %3035 = vmatpush1.msra.mxu0 %v2141
      %3036 = vmatprep.subr.mxu0 0.0
      %3037 = vmatpush2.msra.mxu0 0.0
      %3038 = vmatprep.subr.mxu0 0.0
      %3039 = vmatpush2.msra.mxu0 0.0
      %3040 = vmatprep.subr.mxu0 0.0
      %3041 = vmatpush2.msra.mxu0 0.0
      %3042 = vmatprep.subr.mxu0 0.0
      %3043 = vmatpush2.msra.mxu0 0.0
      %3044 = vmatprep.subr.mxu0 0.0
      %3045 = vmatpush2.msra.mxu0 0.0
      %3046 = vmatprep.subr.mxu0 0.0
      %3047 = vmatpush2.msra.mxu0 0.0
      %3048 = vmatprep.subr.mxu0 0.0
      %3049 = vmatpush2.msra.mxu0 0.0
      %3050 = vmatprep.subr.mxu0 0.0
      %3051 = vmatpush2.msra.mxu0 0.0
      %3052 = vmatprep.subr.mxu0 0.0
      %3053 = vmatpush2.msra.mxu0 0.0
      %3054 = vmatprep.subr.mxu0 0.0
      %3055 = vmatpush2.msra.mxu0 0.0
      %3056 = vmatprep.subr.mxu0 0.0
      %3057 = vmatpush2.msra.mxu0 0.0
      %3058 = vmatprep.subr.mxu0 0.0
      %3059 = vmatpush2.msra.mxu0 0.0
      %3060 = vmatprep.subr.mxu0 0.0
      %3061 = vmatpush2.msra.mxu0 0.0
      %3062 = vmatprep.subr.mxu0 0.0
      %3063 = vmatpush2.msra.mxu0 0.0
      %3064 = vmatprep.subr.mxu0 0.0
      %3065 = vmatpush2.msra.mxu0 0.0
      %3066 = vmatprep.subr.mxu0 0.0
      %3067 = vmatpush2.msra.mxu0 0.0
      %3068 = vmatprep.mubr.f32.mxu0 0.0
      %3069 = vmatmul.mubr.f32.gmra.mxu0 %v1657
      %v3070 = vpop.f32.mrf.mxu0
      %v3071 = vadd.f32 %v2163, %v3070
      %v3072 = vpop.f32.mrf.mxu0
      %3073 = vdwg.mxu0
      %3074 = vmatprep.subr.mxu0 0.0
      %3075 = vmatpush1.msra.mxu0 0.0
      %3076 = vmatprep.subr.mxu0 0.0
      %3077 = vmatpush1.msra.mxu0 0.0
      %3078 = vmatprep.subr.mxu0 0.0
      %3079 = vmatpush1.msra.mxu0 0.0
      %3080 = vmatprep.subr.mxu0 0.0
      %3081 = vmatpush1.msra.mxu0 0.0
      %3082 = vmatprep.subr.mxu0 0.0
      %3083 = vmatpush1.msra.mxu0 0.0
      %3084 = vmatprep.subr.mxu0 0.0
      %3085 = vmatpush1.msra.mxu0 0.0
      %3086 = vmatprep.subr.mxu0 0.0
      %3087 = vmatpush1.msra.mxu0 0.0
      %3088 = vmatprep.subr.mxu0 0.0
      %3089 = vmatpush1.msra.mxu0 0.0
      %3090 = vmatprep.subr.mxu0 0.0
      %3091 = vmatpush1.msra.mxu0 0.0
      %3092 = vmatprep.subr.mxu0 0.0
      %3093 = vmatpush1.msra.mxu0 0.0
      %3094 = vmatprep.subr.mxu0 0.0
      %3095 = vmatpush1.msra.mxu0 0.0
      %3096 = vmatprep.subr.mxu0 0.0
      %3097 = vmatpush1.msra.mxu0 0.0
      %3098 = vmatprep.subr.mxu0 0.0
      %3099 = vmatpush1.msra.mxu0 0.0
      %3100 = vmatprep.subr.mxu0 0.0
      %3101 = vmatpush1.msra.mxu0 0.0
      %3102 = vmatprep.subr.mxu0 0.0
      %3103 = vmatpush1.msra.mxu0 0.0
      %3104 = vmatprep.subr.mxu0 0.0
      %3105 = vmatpush1.msra.mxu0 %v2146
      %3106 = vmatprep.subr.mxu0 0.0
      %3107 = vmatpush2.msra.mxu0 0.0
      %3108 = vmatprep.subr.mxu0 0.0
      %3109 = vmatpush2.msra.mxu0 0.0
      %3110 = vmatprep.subr.mxu0 0.0
      %3111 = vmatpush2.msra.mxu0 0.0
      %3112 = vmatprep.subr.mxu0 0.0
      %3113 = vmatpush2.msra.mxu0 0.0
      %3114 = vmatprep.subr.mxu0 0.0
      %3115 = vmatpush2.msra.mxu0 0.0
      %3116 = vmatprep.subr.mxu0 0.0
      %3117 = vmatpush2.msra.mxu0 0.0
      %3118 = vmatprep.subr.mxu0 0.0
      %3119 = vmatpush2.msra.mxu0 0.0
      %3120 = vmatprep.subr.mxu0 0.0
      %3121 = vmatpush2.msra.mxu0 0.0
      %3122 = vmatprep.subr.mxu0 0.0
      %3123 = vmatpush2.msra.mxu0 0.0
      %3124 = vmatprep.subr.mxu0 0.0
      %3125 = vmatpush2.msra.mxu0 0.0
      %3126 = vmatprep.subr.mxu0 0.0
      %3127 = vmatpush2.msra.mxu0 0.0
      %3128 = vmatprep.subr.mxu0 0.0
      %3129 = vmatpush2.msra.mxu0 0.0
      %3130 = vmatprep.subr.mxu0 0.0
      %3131 = vmatpush2.msra.mxu0 0.0
      %3132 = vmatprep.subr.mxu0 0.0
      %3133 = vmatpush2.msra.mxu0 0.0
      %3134 = vmatprep.subr.mxu0 0.0
      %3135 = vmatpush2.msra.mxu0 0.0
      %3136 = vmatprep.subr.mxu0 0.0
      %3137 = vmatpush2.msra.mxu0 0.0
      %3138 = vmatprep.mubr.f32.mxu0 0.0
      %3139 = vmatmul.mubr.f32.gmra.mxu0 %v1730
      %v3140 = vpop.f32.mrf.mxu0
      %v3141 = vadd.f32 %v2163, %v3140
      %v3142 = vpop.f32.mrf.mxu0
      %3143 = vdwg.mxu0
      %3144 = vmatprep.subr.mxu0 0.0
      %3145 = vmatpush1.msra.mxu0 0.0
      %3146 = vmatprep.subr.mxu0 0.0
      %3147 = vmatpush1.msra.mxu0 0.0
      %3148 = vmatprep.subr.mxu0 0.0
      %3149 = vmatpush1.msra.mxu0 0.0
      %3150 = vmatprep.subr.mxu0 0.0
      %3151 = vmatpush1.msra.mxu0 0.0
      %3152 = vmatprep.subr.mxu0 0.0
      %3153 = vmatpush1.msra.mxu0 0.0
      %3154 = vmatprep.subr.mxu0 0.0
      %3155 = vmatpush1.msra.mxu0 0.0
      %3156 = vmatprep.subr.mxu0 0.0
      %3157 = vmatpush1.msra.mxu0 0.0
      %3158 = vmatprep.subr.mxu0 0.0
      %3159 = vmatpush1.msra.mxu0 0.0
      %3160 = vmatprep.subr.mxu0 0.0
      %3161 = vmatpush1.msra.mxu0 0.0
      %3162 = vmatprep.subr.mxu0 0.0
      %3163 = vmatpush1.msra.mxu0 0.0
      %3164 = vmatprep.subr.mxu0 0.0
      %3165 = vmatpush1.msra.mxu0 0.0
      %3166 = vmatprep.subr.mxu0 0.0
      %3167 = vmatpush1.msra.mxu0 0.0
      %3168 = vmatprep.subr.mxu0 0.0
      %3169 = vmatpush1.msra.mxu0 0.0
      %3170 = vmatprep.subr.mxu0 0.0
      %3171 = vmatpush1.msra.mxu0 0.0
      %3172 = vmatprep.subr.mxu0 0.0
      %3173 = vmatpush1.msra.mxu0 0.0
      %3174 = vmatprep.subr.mxu0 0.0
      %3175 = vmatpush1.msra.mxu0 %v2151
      %3176 = vmatprep.subr.mxu0 0.0
      %3177 = vmatpush2.msra.mxu0 0.0
      %3178 = vmatprep.subr.mxu0 0.0
      %3179 = vmatpush2.msra.mxu0 0.0
      %3180 = vmatprep.subr.mxu0 0.0
      %3181 = vmatpush2.msra.mxu0 0.0
      %3182 = vmatprep.subr.mxu0 0.0
      %3183 = vmatpush2.msra.mxu0 0.0
      %3184 = vmatprep.subr.mxu0 0.0
      %3185 = vmatpush2.msra.mxu0 0.0
      %3186 = vmatprep.subr.mxu0 0.0
      %3187 = vmatpush2.msra.mxu0 0.0
      %3188 = vmatprep.subr.mxu0 0.0
      %3189 = vmatpush2.msra.mxu0 0.0
      %3190 = vmatprep.subr.mxu0 0.0
      %3191 = vmatpush2.msra.mxu0 0.0
      %3192 = vmatprep.subr.mxu0 0.0
      %3193 = vmatpush2.msra.mxu0 0.0
      %3194 = vmatprep.subr.mxu0 0.0
      %3195 = vmatpush2.msra.mxu0 0.0
      %3196 = vmatprep.subr.mxu0 0.0
      %3197 = vmatpush2.msra.mxu0 0.0
      %3198 = vmatprep.subr.mxu0 0.0
      %3199 = vmatpush2.msra.mxu0 0.0
      %3200 = vmatprep.subr.mxu0 0.0
      %3201 = vmatpush2.msra.mxu0 0.0
      %3202 = vmatprep.subr.mxu0 0.0
      %3203 = vmatpush2.msra.mxu0 0.0
      %3204 = vmatprep.subr.mxu0 0.0
      %3205 = vmatpush2.msra.mxu0 0.0
      %3206 = vmatprep.subr.mxu0 0.0
      %3207 = vmatpush2.msra.mxu0 0.0
      %3208 = vmatprep.mubr.f32.mxu0 0.0
      %3209 = vmatmul.mubr.f32.gmra.mxu0 %v1803
      %v3210 = vpop.f32.mrf.mxu0
      %v3211 = vadd.f32 %v2163, %v3210
      %v3212 = vpop.f32.mrf.mxu0
      %3213 = vdwg.mxu0
      %3214 = vmatprep.subr.mxu0 0.0
      %3215 = vmatpush1.msra.mxu0 0.0
      %3216 = vmatprep.subr.mxu0 0.0
      %3217 = vmatpush1.msra.mxu0 0.0
      %3218 = vmatprep.subr.mxu0 0.0
      %3219 = vmatpush1.msra.mxu0 0.0
      %3220 = vmatprep.subr.mxu0 0.0
      %3221 = vmatpush1.msra.mxu0 0.0
      %3222 = vmatprep.subr.mxu0 0.0
      %3223 = vmatpush1.msra.mxu0 0.0
      %3224 = vmatprep.subr.mxu0 0.0
      %3225 = vmatpush1.msra.mxu0 0.0
      %3226 = vmatprep.subr.mxu0 0.0
      %3227 = vmatpush1.msra.mxu0 0.0
      %3228 = vmatprep.subr.mxu0 0.0
      %3229 = vmatpush1.msra.mxu0 0.0
      %3230 = vmatprep.subr.mxu0 0.0
      %3231 = vmatpush1.msra.mxu0 0.0
      %3232 = vmatprep.subr.mxu0 0.0
      %3233 = vmatpush1.msra.mxu0 0.0
      %3234 = vmatprep.subr.mxu0 0.0
      %3235 = vmatpush1.msra.mxu0 0.0
      %3236 = vmatprep.subr.mxu0 0.0
      %3237 = vmatpush1.msra.mxu0 0.0
      %3238 = vmatprep.subr.mxu0 0.0
      %3239 = vmatpush1.msra.mxu0 0.0
      %3240 = vmatprep.subr.mxu0 0.0
      %3241 = vmatpush1.msra.mxu0 0.0
      %3242 = vmatprep.subr.mxu0 0.0
      %3243 = vmatpush1.msra.mxu0 0.0
      %3244 = vmatprep.subr.mxu0 0.0
      %3245 = vmatpush1.msra.mxu0 %v2156
      %3246 = vmatprep.subr.mxu0 0.0
      %3247 = vmatpush2.msra.mxu0 0.0
      %3248 = vmatprep.subr.mxu0 0.0
      %3249 = vmatpush2.msra.mxu0 0.0
      %3250 = vmatprep.subr.mxu0 0.0
      %3251 = vmatpush2.msra.mxu0 0.0
      %3252 = vmatprep.subr.mxu0 0.0
      %3253 = vmatpush2.msra.mxu0 0.0
      %3254 = vmatprep.subr.mxu0 0.0
      %3255 = vmatpush2.msra.mxu0 0.0
      %3256 = vmatprep.subr.mxu0 0.0
      %3257 = vmatpush2.msra.mxu0 0.0
      %3258 = vmatprep.subr.mxu0 0.0
      %3259 = vmatpush2.msra.mxu0 0.0
      %3260 = vmatprep.subr.mxu0 0.0
      %3261 = vmatpush2.msra.mxu0 0.0
      %3262 = vmatprep.subr.mxu0 0.0
      %3263 = vmatpush2.msra.mxu0 0.0
      %3264 = vmatprep.subr.mxu0 0.0
      %3265 = vmatpush2.msra.mxu0 0.0
      %3266 = vmatprep.subr.mxu0 0.0
      %3267 = vmatpush2.msra.mxu0 0.0
      %3268 = vmatprep.subr.mxu0 0.0
      %3269 = vmatpush2.msra.mxu0 0.0
      %3270 = vmatprep.subr.mxu0 0.0
      %3271 = vmatpush2.msra.mxu0 0.0
      %3272 = vmatprep.subr.mxu0 0.0
      %3273 = vmatpush2.msra.mxu0 0.0
      %3274 = vmatprep.subr.mxu0 0.0
      %3275 = vmatpush2.msra.mxu0 0.0
      %3276 = vmatprep.subr.mxu0 0.0
      %3277 = vmatpush2.msra.mxu0 0.0
      %3278 = vmatprep.mubr.f32.mxu0 0.0
      %3279 = vmatmul.mubr.f32.gmra.mxu0 %v1876
      %v3280 = vpop.f32.mrf.mxu0
      %v3281 = vadd.f32 %v2163, %v3280
      %v3282 = vpop.f32.mrf.mxu0
      %3283 = vdwg.mxu0
      %v3284 = vmax.f32 %v2231, 0.0
      %v3285 = vmax.f32 %v2301, 0.0
      %v3286 = vmax.f32 %v2371, 0.0
      %v3287 = vmax.f32 %v2441, 0.0
      %v3288 = vmax.f32 %v2511, 0.0
      %v3289 = vmax.f32 %v2581, 0.0
      %v3290 = vmax.f32 %v2651, 0.0
      %v3291 = vmax.f32 %v2721, 0.0
      %v3292 = vmax.f32 %v2791, 0.0
      %v3293 = vmax.f32 %v2861, 0.0
      %v3294 = vmax.f32 %v2931, 0.0
      %v3295 = vmax.f32 %v3001, 0.0
      %v3296 = vmax.f32 %v3071, 0.0
      %v3297 = vmax.f32 %v3141, 0.0
      %v3298 = vmax.f32 %v3211, 0.0
      %v3299 = vmax.f32 %v3281, 0.0
      %s3300 = scalar_lea.vmem %s2, 16
      %v3301 = vld [vmem:[%s3300] sm:$0xff]
      %v3302 = vld [vmem:[%s3 + $0x2] sm:$0x1]
      %v3303 = vlaneseq
      %v3304 = vshrl.u32 %v3303, 7
      %v3305 = vsub.s32 0, %v3304
      %v3306 = vrot.slane %v3302, %v3305
      %v3308 = vsel %vm292, %v3284, 0
      %v3311 = vsel %vm292, %v3285, 0
      %v3314 = vsel %vm292, %v3286, 0
      %v3317 = vsel %vm292, %v3287, 0
      %v3320 = vsel %vm292, %v3288, 0
      %v3323 = vsel %vm292, %v3289, 0
      %v3326 = vsel %vm292, %v3290, 0
      %v3329 = vsel %vm292, %v3291, 0
      %v3332 = vsel %vm292, %v3292, 0
      %v3335 = vsel %vm292, %v3293, 0
      %v3338 = vsel %vm292, %v3294, 0
      %v3341 = vsel %vm292, %v3295, 0
      %v3344 = vsel %vm292, %v3296, 0
      %v3347 = vsel %vm292, %v3297, 0
      %v3350 = vsel %vm292, %v3298, 0
      %v3353 = vsel %vm292, %v3299, 0
      %3355 = vmatprep.subr.mxu0 0.0
      %3356 = vmatpush1.msra.mxu0 0.0
      %3357 = vmatprep.subr.mxu0 0.0
      %3358 = vmatpush1.msra.mxu0 0.0
      %3359 = vmatprep.subr.mxu0 0.0
      %3360 = vmatpush1.msra.mxu0 0.0
      %3361 = vmatprep.subr.mxu0 0.0
      %3362 = vmatpush1.msra.mxu0 0.0
      %3363 = vmatprep.subr.mxu0 0.0
      %3364 = vmatpush1.msra.mxu0 0.0
      %3365 = vmatprep.subr.mxu0 0.0
      %3366 = vmatpush1.msra.mxu0 0.0
      %3367 = vmatprep.subr.mxu0 0.0
      %3368 = vmatpush1.msra.mxu0 0.0
      %3369 = vmatprep.subr.mxu0 0.0
      %3370 = vmatpush1.msra.mxu0 0.0
      %3371 = vmatprep.subr.mxu0 0.0
      %3372 = vmatpush1.msra.mxu0 0.0
      %3373 = vmatprep.subr.mxu0 0.0
      %3374 = vmatpush1.msra.mxu0 0.0
      %3375 = vmatprep.subr.mxu0 0.0
      %3376 = vmatpush1.msra.mxu0 0.0
      %3377 = vmatprep.subr.mxu0 0.0
      %3378 = vmatpush1.msra.mxu0 0.0
      %3379 = vmatprep.subr.mxu0 0.0
      %3380 = vmatpush1.msra.mxu0 0.0
      %3381 = vmatprep.subr.mxu0 0.0
      %3382 = vmatpush1.msra.mxu0 0.0
      %3383 = vmatprep.subr.mxu0 0.0
      %3384 = vmatpush1.msra.mxu0 0.0
      %3385 = vmatprep.subr.mxu0 0.0
      %3386 = vmatpush1.msra.mxu0 %v3301
      %3387 = vmatprep.subr.mxu0 0.0
      %3388 = vmatpush2.msra.mxu0 0.0
      %3389 = vmatprep.subr.mxu0 0.0
      %3390 = vmatpush2.msra.mxu0 0.0
      %3391 = vmatprep.subr.mxu0 0.0
      %3392 = vmatpush2.msra.mxu0 0.0
      %3393 = vmatprep.subr.mxu0 0.0
      %3394 = vmatpush2.msra.mxu0 0.0
      %3395 = vmatprep.subr.mxu0 0.0
      %3396 = vmatpush2.msra.mxu0 0.0
      %3397 = vmatprep.subr.mxu0 0.0
      %3398 = vmatpush2.msra.mxu0 0.0
      %3399 = vmatprep.subr.mxu0 0.0
      %3400 = vmatpush2.msra.mxu0 0.0
      %3401 = vmatprep.subr.mxu0 0.0
      %3402 = vmatpush2.msra.mxu0 0.0
      %3403 = vmatprep.subr.mxu0 0.0
      %3404 = vmatpush2.msra.mxu0 0.0
      %3405 = vmatprep.subr.mxu0 0.0
      %3406 = vmatpush2.msra.mxu0 0.0
      %3407 = vmatprep.subr.mxu0 0.0
      %3408 = vmatpush2.msra.mxu0 0.0
      %3409 = vmatprep.subr.mxu0 0.0
      %3410 = vmatpush2.msra.mxu0 0.0
      %3411 = vmatprep.subr.mxu0 0.0
      %3412 = vmatpush2.msra.mxu0 0.0
      %3413 = vmatprep.subr.mxu0 0.0
      %3414 = vmatpush2.msra.mxu0 0.0
      %3415 = vmatprep.subr.mxu0 0.0
      %3416 = vmatpush2.msra.mxu0 0.0
      %3417 = vmatprep.subr.mxu0 0.0
      %3418 = vmatpush2.msra.mxu0 0.0
      %3419 = vmatprep.mubr.f32.mxu0 0.0
      %3420 = vmatmul.mubr.f32.gmra.mxu0 %v3308
      %v3421 = vpop.f32.mrf.mxu0
      %v3422 = vadd.f32 %v3306, %v3421
      %v3423 = vpop.f32.mrf.mxu0
      %3424 = vmatprep.mubr.f32.mxu0 0.0
      %3425 = vmatmul.mubr.f32.gmra.mxu0 %v3311
      %v3426 = vpop.f32.mrf.mxu0
      %v3427 = vadd.f32 %v3306, %v3426
      %v3428 = vpop.f32.mrf.mxu0
      %3429 = vmatprep.mubr.f32.mxu0 0.0
      %3430 = vmatmul.mubr.f32.gmra.mxu0 %v3314
      %v3431 = vpop.f32.mrf.mxu0
      %v3432 = vadd.f32 %v3306, %v3431
      %v3433 = vpop.f32.mrf.mxu0
      %3434 = vmatprep.mubr.f32.mxu0 0.0
      %3435 = vmatmul.mubr.f32.gmra.mxu0 %v3317
      %v3436 = vpop.f32.mrf.mxu0
      %v3437 = vadd.f32 %v3306, %v3436
      %v3438 = vpop.f32.mrf.mxu0
      %3439 = vmatprep.mubr.f32.mxu0 0.0
      %3440 = vmatmul.mubr.f32.gmra.mxu0 %v3320
      %v3441 = vpop.f32.mrf.mxu0
      %v3442 = vadd.f32 %v3306, %v3441
      %v3443 = vpop.f32.mrf.mxu0
      %3444 = vmatprep.mubr.f32.mxu0 0.0
      %3445 = vmatmul.mubr.f32.gmra.mxu0 %v3323
      %v3446 = vpop.f32.mrf.mxu0
      %v3447 = vadd.f32 %v3306, %v3446
      %v3448 = vpop.f32.mrf.mxu0
      %3449 = vmatprep.mubr.f32.mxu0 0.0
      %3450 = vmatmul.mubr.f32.gmra.mxu0 %v3326
      %v3451 = vpop.f32.mrf.mxu0
      %v3452 = vadd.f32 %v3306, %v3451
      %v3453 = vpop.f32.mrf.mxu0
      %3454 = vmatprep.mubr.f32.mxu0 0.0
      %3455 = vmatmul.mubr.f32.gmra.mxu0 %v3329
      %v3456 = vpop.f32.mrf.mxu0
      %v3457 = vadd.f32 %v3306, %v3456
      %v3458 = vpop.f32.mrf.mxu0
      %3459 = vmatprep.mubr.f32.mxu0 0.0
      %3460 = vmatmul.mubr.f32.gmra.mxu0 %v3332
      %v3461 = vpop.f32.mrf.mxu0
      %v3462 = vadd.f32 %v3306, %v3461
      %v3463 = vpop.f32.mrf.mxu0
      %3464 = vmatprep.mubr.f32.mxu0 0.0
      %3465 = vmatmul.mubr.f32.gmra.mxu0 %v3335
      %v3466 = vpop.f32.mrf.mxu0
      %v3467 = vadd.f32 %v3306, %v3466
      %v3468 = vpop.f32.mrf.mxu0
      %3469 = vmatprep.mubr.f32.mxu0 0.0
      %3470 = vmatmul.mubr.f32.gmra.mxu0 %v3338
      %v3471 = vpop.f32.mrf.mxu0
      %v3472 = vadd.f32 %v3306, %v3471
      %v3473 = vpop.f32.mrf.mxu0
      %3474 = vmatprep.mubr.f32.mxu0 0.0
      %3475 = vmatmul.mubr.f32.gmra.mxu0 %v3341
      %v3476 = vpop.f32.mrf.mxu0
      %v3477 = vadd.f32 %v3306, %v3476
      %v3478 = vpop.f32.mrf.mxu0
      %3479 = vmatprep.mubr.f32.mxu0 0.0
      %3480 = vmatmul.mubr.f32.gmra.mxu0 %v3344
      %v3481 = vpop.f32.mrf.mxu0
      %v3482 = vadd.f32 %v3306, %v3481
      %v3483 = vpop.f32.mrf.mxu0
      %3484 = vmatprep.mubr.f32.mxu0 0.0
      %3485 = vmatmul.mubr.f32.gmra.mxu0 %v3347
      %v3486 = vpop.f32.mrf.mxu0
      %v3487 = vadd.f32 %v3306, %v3486
      %v3488 = vpop.f32.mrf.mxu0
      %3489 = vmatprep.mubr.f32.mxu0 0.0
      %3490 = vmatmul.mubr.f32.gmra.mxu0 %v3350
      %v3491 = vpop.f32.mrf.mxu0
      %v3492 = vadd.f32 %v3306, %v3491
      %v3493 = vpop.f32.mrf.mxu0
      %3494 = vmatprep.mubr.f32.mxu0 0.0
      %3495 = vmatmul.mubr.f32.gmra.mxu0 %v3353
      %v3496 = vpop.f32.mrf.mxu0
      %v3497 = vadd.f32 %v3306, %v3496
      %v3498 = vpop.f32.mrf.mxu0
      %3499 = vdwg.mxu0
      %s3500 = scalar_lea.vmem %s2, 24
      %v3501 = vld [vmem:[%s3500] sm:$0xff]
      %v3502 = vld [vmem:[%s3 + $0x3] sm:$0x1]
      %v3503 = vlaneseq
      %v3504 = vshrl.u32 %v3503, 7
      %v3505 = vsub.s32 0, %v3504
      %v3506 = vrot.slane %v3502, %v3505
      %3507 = vmatprep.subr.mxu0 0.0
      %3508 = vmatpush1.msra.mxu0 0.0
      %3509 = vmatprep.subr.mxu0 0.0
      %3510 = vmatpush1.msra.mxu0 0.0
      %3511 = vmatprep.subr.mxu0 0.0
      %3512 = vmatpush1.msra.mxu0 0.0
      %3513 = vmatprep.subr.mxu0 0.0
      %3514 = vmatpush1.msra.mxu0 0.0
      %3515 = vmatprep.subr.mxu0 0.0
      %3516 = vmatpush1.msra.mxu0 0.0
      %3517 = vmatprep.subr.mxu0 0.0
      %3518 = vmatpush1.msra.mxu0 0.0
      %3519 = vmatprep.subr.mxu0 0.0
      %3520 = vmatpush1.msra.mxu0 0.0
      %3521 = vmatprep.subr.mxu0 0.0
      %3522 = vmatpush1.msra.mxu0 0.0
      %3523 = vmatprep.subr.mxu0 0.0
      %3524 = vmatpush1.msra.mxu0 0.0
      %3525 = vmatprep.subr.mxu0 0.0
      %3526 = vmatpush1.msra.mxu0 0.0
      %3527 = vmatprep.subr.mxu0 0.0
      %3528 = vmatpush1.msra.mxu0 0.0
      %3529 = vmatprep.subr.mxu0 0.0
      %3530 = vmatpush1.msra.mxu0 0.0
      %3531 = vmatprep.subr.mxu0 0.0
      %3532 = vmatpush1.msra.mxu0 0.0
      %3533 = vmatprep.subr.mxu0 0.0
      %3534 = vmatpush1.msra.mxu0 0.0
      %3535 = vmatprep.subr.mxu0 0.0
      %3536 = vmatpush1.msra.mxu0 0.0
      %3537 = vmatprep.subr.mxu0 0.0
      %3538 = vmatpush1.msra.mxu0 %v3501
      %3539 = vmatprep.subr.mxu0 0.0
      %3540 = vmatpush2.msra.mxu0 0.0
      %3541 = vmatprep.subr.mxu0 0.0
      %3542 = vmatpush2.msra.mxu0 0.0
      %3543 = vmatprep.subr.mxu0 0.0
      %3544 = vmatpush2.msra.mxu0 0.0
      %3545 = vmatprep.subr.mxu0 0.0
      %3546 = vmatpush2.msra.mxu0 0.0
      %3547 = vmatprep.subr.mxu0 0.0
      %3548 = vmatpush2.msra.mxu0 0.0
      %3549 = vmatprep.subr.mxu0 0.0
      %3550 = vmatpush2.msra.mxu0 0.0
      %3551 = vmatprep.subr.mxu0 0.0
      %3552 = vmatpush2.msra.mxu0 0.0
      %3553 = vmatprep.subr.mxu0 0.0
      %3554 = vmatpush2.msra.mxu0 0.0
      %3555 = vmatprep.subr.mxu0 0.0
      %3556 = vmatpush2.msra.mxu0 0.0
      %3557 = vmatprep.subr.mxu0 0.0
      %3558 = vmatpush2.msra.mxu0 0.0
      %3559 = vmatprep.subr.mxu0 0.0
      %3560 = vmatpush2.msra.mxu0 0.0
      %3561 = vmatprep.subr.mxu0 0.0
      %3562 = vmatpush2.msra.mxu0 0.0
      %3563 = vmatprep.subr.mxu0 0.0
      %3564 = vmatpush2.msra.mxu0 0.0
      %3565 = vmatprep.subr.mxu0 0.0
      %3566 = vmatpush2.msra.mxu0 0.0
      %3567 = vmatprep.subr.mxu0 0.0
      %3568 = vmatpush2.msra.mxu0 0.0
      %3569 = vmatprep.subr.mxu0 0.0
      %3570 = vmatpush2.msra.mxu0 0.0
      %3571 = vmatprep.mubr.f32.mxu0 0.0
      %3572 = vmatmul.mubr.f32.gmra.mxu0 %v3308
      %v3573 = vpop.f32.mrf.mxu0
      %v3574 = vadd.f32 %v3506, %v3573
      %v3575 = vpop.f32.mrf.mxu0
      %3576 = vmatprep.mubr.f32.mxu0 0.0
      %3577 = vmatmul.mubr.f32.gmra.mxu0 %v3311
      %v3578 = vpop.f32.mrf.mxu0
      %v3579 = vadd.f32 %v3506, %v3578
      %v3580 = vpop.f32.mrf.mxu0
      %3581 = vmatprep.mubr.f32.mxu0 0.0
      %3582 = vmatmul.mubr.f32.gmra.mxu0 %v3314
      %v3583 = vpop.f32.mrf.mxu0
      %v3584 = vadd.f32 %v3506, %v3583
      %v3585 = vpop.f32.mrf.mxu0
      %3586 = vmatprep.mubr.f32.mxu0 0.0
      %3587 = vmatmul.mubr.f32.gmra.mxu0 %v3317
      %v3588 = vpop.f32.mrf.mxu0
      %v3589 = vadd.f32 %v3506, %v3588
      %v3590 = vpop.f32.mrf.mxu0
      %3591 = vmatprep.mubr.f32.mxu0 0.0
      %3592 = vmatmul.mubr.f32.gmra.mxu0 %v3320
      %v3593 = vpop.f32.mrf.mxu0
      %v3594 = vadd.f32 %v3506, %v3593
      %v3595 = vpop.f32.mrf.mxu0
      %3596 = vmatprep.mubr.f32.mxu0 0.0
      %3597 = vmatmul.mubr.f32.gmra.mxu0 %v3323
      %v3598 = vpop.f32.mrf.mxu0
      %v3599 = vadd.f32 %v3506, %v3598
      %v3600 = vpop.f32.mrf.mxu0
      %3601 = vmatprep.mubr.f32.mxu0 0.0
      %3602 = vmatmul.mubr.f32.gmra.mxu0 %v3326
      %v3603 = vpop.f32.mrf.mxu0
      %v3604 = vadd.f32 %v3506, %v3603
      %v3605 = vpop.f32.mrf.mxu0
      %3606 = vmatprep.mubr.f32.mxu0 0.0
      %3607 = vmatmul.mubr.f32.gmra.mxu0 %v3329
      %v3608 = vpop.f32.mrf.mxu0
      %v3609 = vadd.f32 %v3506, %v3608
      %v3610 = vpop.f32.mrf.mxu0
      %3611 = vmatprep.mubr.f32.mxu0 0.0
      %3612 = vmatmul.mubr.f32.gmra.mxu0 %v3332
      %v3613 = vpop.f32.mrf.mxu0
      %v3614 = vadd.f32 %v3506, %v3613
      %v3615 = vpop.f32.mrf.mxu0
      %3616 = vmatprep.mubr.f32.mxu0 0.0
      %3617 = vmatmul.mubr.f32.gmra.mxu0 %v3335
      %v3618 = vpop.f32.mrf.mxu0
      %v3619 = vadd.f32 %v3506, %v3618
      %v3620 = vpop.f32.mrf.mxu0
      %3621 = vmatprep.mubr.f32.mxu0 0.0
      %3622 = vmatmul.mubr.f32.gmra.mxu0 %v3338
      %v3623 = vpop.f32.mrf.mxu0
      %v3624 = vadd.f32 %v3506, %v3623
      %v3625 = vpop.f32.mrf.mxu0
      %3626 = vmatprep.mubr.f32.mxu0 0.0
      %3627 = vmatmul.mubr.f32.gmra.mxu0 %v3341
      %v3628 = vpop.f32.mrf.mxu0
      %v3629 = vadd.f32 %v3506, %v3628
      %v3630 = vpop.f32.mrf.mxu0
      %3631 = vmatprep.mubr.f32.mxu0 0.0
      %3632 = vmatmul.mubr.f32.gmra.mxu0 %v3344
      %v3633 = vpop.f32.mrf.mxu0
      %v3634 = vadd.f32 %v3506, %v3633
      %v3635 = vpop.f32.mrf.mxu0
      %3636 = vmatprep.mubr.f32.mxu0 0.0
      %3637 = vmatmul.mubr.f32.gmra.mxu0 %v3347
      %v3638 = vpop.f32.mrf.mxu0
      %v3639 = vadd.f32 %v3506, %v3638
      %v3640 = vpop.f32.mrf.mxu0
      %3641 = vmatprep.mubr.f32.mxu0 0.0
      %3642 = vmatmul.mubr.f32.gmra.mxu0 %v3350
      %v3643 = vpop.f32.mrf.mxu0
      %v3644 = vadd.f32 %v3506, %v3643
      %v3645 = vpop.f32.mrf.mxu0
      %3646 = vmatprep.mubr.f32.mxu0 0.0
      %3647 = vmatmul.mubr.f32.gmra.mxu0 %v3353
      %v3648 = vpop.f32.mrf.mxu0
      %v3649 = vadd.f32 %v3506, %v3648
      %v3650 = vpop.f32.mrf.mxu0
      %3651 = vdwg.mxu0
      %s3652 = scalar_lea.vmem %s2, 32
      %v3653 = vld [vmem:[%s3652] sm:$0xff]
      %v3654 = vld [vmem:[%s3 + $0x4] sm:$0x1]
      %v3655 = vlaneseq
      %v3656 = vshrl.u32 %v3655, 7
      %v3657 = vsub.s32 0, %v3656
      %v3658 = vrot.slane %v3654, %v3657
      %3659 = vmatprep.subr.mxu0 0.0
      %3660 = vmatpush1.msra.mxu0 0.0
      %3661 = vmatprep.subr.mxu0 0.0
      %3662 = vmatpush1.msra.mxu0 0.0
      %3663 = vmatprep.subr.mxu0 0.0
      %3664 = vmatpush1.msra.mxu0 0.0
      %3665 = vmatprep.subr.mxu0 0.0
      %3666 = vmatpush1.msra.mxu0 0.0
      %3667 = vmatprep.subr.mxu0 0.0
      %3668 = vmatpush1.msra.mxu0 0.0
      %3669 = vmatprep.subr.mxu0 0.0
      %3670 = vmatpush1.msra.mxu0 0.0
      %3671 = vmatprep.subr.mxu0 0.0
      %3672 = vmatpush1.msra.mxu0 0.0
      %3673 = vmatprep.subr.mxu0 0.0
      %3674 = vmatpush1.msra.mxu0 0.0
      %3675 = vmatprep.subr.mxu0 0.0
      %3676 = vmatpush1.msra.mxu0 0.0
      %3677 = vmatprep.subr.mxu0 0.0
      %3678 = vmatpush1.msra.mxu0 0.0
      %3679 = vmatprep.subr.mxu0 0.0
      %3680 = vmatpush1.msra.mxu0 0.0
      %3681 = vmatprep.subr.mxu0 0.0
      %3682 = vmatpush1.msra.mxu0 0.0
      %3683 = vmatprep.subr.mxu0 0.0
      %3684 = vmatpush1.msra.mxu0 0.0
      %3685 = vmatprep.subr.mxu0 0.0
      %3686 = vmatpush1.msra.mxu0 0.0
      %3687 = vmatprep.subr.mxu0 0.0
      %3688 = vmatpush1.msra.mxu0 0.0
      %3689 = vmatprep.subr.mxu0 0.0
      %3690 = vmatpush1.msra.mxu0 %v3653
      %3691 = vmatprep.subr.mxu0 0.0
      %3692 = vmatpush2.msra.mxu0 0.0
      %3693 = vmatprep.subr.mxu0 0.0
      %3694 = vmatpush2.msra.mxu0 0.0
      %3695 = vmatprep.subr.mxu0 0.0
      %3696 = vmatpush2.msra.mxu0 0.0
      %3697 = vmatprep.subr.mxu0 0.0
      %3698 = vmatpush2.msra.mxu0 0.0
      %3699 = vmatprep.subr.mxu0 0.0
      %3700 = vmatpush2.msra.mxu0 0.0
      %3701 = vmatprep.subr.mxu0 0.0
      %3702 = vmatpush2.msra.mxu0 0.0
      %3703 = vmatprep.subr.mxu0 0.0
      %3704 = vmatpush2.msra.mxu0 0.0
      %3705 = vmatprep.subr.mxu0 0.0
      %3706 = vmatpush2.msra.mxu0 0.0
      %3707 = vmatprep.subr.mxu0 0.0
      %3708 = vmatpush2.msra.mxu0 0.0
      %3709 = vmatprep.subr.mxu0 0.0
      %3710 = vmatpush2.msra.mxu0 0.0
      %3711 = vmatprep.subr.mxu0 0.0
      %3712 = vmatpush2.msra.mxu0 0.0
      %3713 = vmatprep.subr.mxu0 0.0
      %3714 = vmatpush2.msra.mxu0 0.0
      %3715 = vmatprep.subr.mxu0 0.0
      %3716 = vmatpush2.msra.mxu0 0.0
      %3717 = vmatprep.subr.mxu0 0.0
      %3718 = vmatpush2.msra.mxu0 0.0
      %3719 = vmatprep.subr.mxu0 0.0
      %3720 = vmatpush2.msra.mxu0 0.0
      %3721 = vmatprep.subr.mxu0 0.0
      %3722 = vmatpush2.msra.mxu0 0.0
      %3723 = vmatprep.mubr.f32.mxu0 0.0
      %3724 = vmatmul.mubr.f32.gmra.mxu0 %v3308
      %v3725 = vpop.f32.mrf.mxu0
      %v3726 = vadd.f32 %v3658, %v3725
      %v3727 = vpop.f32.mrf.mxu0
      %3728 = vmatprep.mubr.f32.mxu0 0.0
      %3729 = vmatmul.mubr.f32.gmra.mxu0 %v3311
      %v3730 = vpop.f32.mrf.mxu0
      %v3731 = vadd.f32 %v3658, %v3730
      %v3732 = vpop.f32.mrf.mxu0
      %3733 = vmatprep.mubr.f32.mxu0 0.0
      %3734 = vmatmul.mubr.f32.gmra.mxu0 %v3314
      %v3735 = vpop.f32.mrf.mxu0
      %v3736 = vadd.f32 %v3658, %v3735
      %v3737 = vpop.f32.mrf.mxu0
      %3738 = vmatprep.mubr.f32.mxu0 0.0
      %3739 = vmatmul.mubr.f32.gmra.mxu0 %v3317
      %v3740 = vpop.f32.mrf.mxu0
      %v3741 = vadd.f32 %v3658, %v3740
      %v3742 = vpop.f32.mrf.mxu0
      %3743 = vmatprep.mubr.f32.mxu0 0.0
      %3744 = vmatmul.mubr.f32.gmra.mxu0 %v3320
      %v3745 = vpop.f32.mrf.mxu0
      %v3746 = vadd.f32 %v3658, %v3745
      %v3747 = vpop.f32.mrf.mxu0
      %3748 = vmatprep.mubr.f32.mxu0 0.0
      %3749 = vmatmul.mubr.f32.gmra.mxu0 %v3323
      %v3750 = vpop.f32.mrf.mxu0
      %v3751 = vadd.f32 %v3658, %v3750
      %v3752 = vpop.f32.mrf.mxu0
      %3753 = vmatprep.mubr.f32.mxu0 0.0
      %3754 = vmatmul.mubr.f32.gmra.mxu0 %v3326
      %v3755 = vpop.f32.mrf.mxu0
      %v3756 = vadd.f32 %v3658, %v3755
      %v3757 = vpop.f32.mrf.mxu0
      %3758 = vmatprep.mubr.f32.mxu0 0.0
      %3759 = vmatmul.mubr.f32.gmra.mxu0 %v3329
      %v3760 = vpop.f32.mrf.mxu0
      %v3761 = vadd.f32 %v3658, %v3760
      %v3762 = vpop.f32.mrf.mxu0
      %3763 = vmatprep.mubr.f32.mxu0 0.0
      %3764 = vmatmul.mubr.f32.gmra.mxu0 %v3332
      %v3765 = vpop.f32.mrf.mxu0
      %v3766 = vadd.f32 %v3658, %v3765
      %v3767 = vpop.f32.mrf.mxu0
      %3768 = vmatprep.mubr.f32.mxu0 0.0
      %3769 = vmatmul.mubr.f32.gmra.mxu0 %v3335
      %v3770 = vpop.f32.mrf.mxu0
      %v3771 = vadd.f32 %v3658, %v3770
      %v3772 = vpop.f32.mrf.mxu0
      %3773 = vmatprep.mubr.f32.mxu0 0.0
      %3774 = vmatmul.mubr.f32.gmra.mxu0 %v3338
      %v3775 = vpop.f32.mrf.mxu0
      %v3776 = vadd.f32 %v3658, %v3775
      %v3777 = vpop.f32.mrf.mxu0
      %3778 = vmatprep.mubr.f32.mxu0 0.0
      %3779 = vmatmul.mubr.f32.gmra.mxu0 %v3341
      %v3780 = vpop.f32.mrf.mxu0
      %v3781 = vadd.f32 %v3658, %v3780
      %v3782 = vpop.f32.mrf.mxu0
      %3783 = vmatprep.mubr.f32.mxu0 0.0
      %3784 = vmatmul.mubr.f32.gmra.mxu0 %v3344
      %v3785 = vpop.f32.mrf.mxu0
      %v3786 = vadd.f32 %v3658, %v3785
      %v3787 = vpop.f32.mrf.mxu0
      %3788 = vmatprep.mubr.f32.mxu0 0.0
      %3789 = vmatmul.mubr.f32.gmra.mxu0 %v3347
      %v3790 = vpop.f32.mrf.mxu0
      %v3791 = vadd.f32 %v3658, %v3790
      %v3792 = vpop.f32.mrf.mxu0
      %3793 = vmatprep.mubr.f32.mxu0 0.0
      %3794 = vmatmul.mubr.f32.gmra.mxu0 %v3350
      %v3795 = vpop.f32.mrf.mxu0
      %v3796 = vadd.f32 %v3658, %v3795
      %v3797 = vpop.f32.mrf.mxu0
      %3798 = vmatprep.mubr.f32.mxu0 0.0
      %3799 = vmatmul.mubr.f32.gmra.mxu0 %v3353
      %v3800 = vpop.f32.mrf.mxu0
      %v3801 = vadd.f32 %v3658, %v3800
      %v3802 = vpop.f32.mrf.mxu0
      %3803 = vdwg.mxu0
      %v3804 = vxor.u32 %v3422, 2147483648
      %v3805 = vxor.u32 %v3427, 2147483648
      %v3806 = vxor.u32 %v3432, 2147483648
      %v3807 = vxor.u32 %v3437, 2147483648
      %v3808 = vxor.u32 %v3442, 2147483648
      %v3809 = vxor.u32 %v3447, 2147483648
      %v3810 = vxor.u32 %v3452, 2147483648
      %v3811 = vxor.u32 %v3457, 2147483648
      %v3812 = vxor.u32 %v3462, 2147483648
      %v3813 = vxor.u32 %v3467, 2147483648
      %v3814 = vxor.u32 %v3472, 2147483648
      %v3815 = vxor.u32 %v3477, 2147483648
      %v3816 = vxor.u32 %v3482, 2147483648
      %v3817 = vxor.u32 %v3487, 2147483648
      %v3818 = vxor.u32 %v3492, 2147483648
      %v3819 = vxor.u32 %v3497, 2147483648
      %v3820 = vmul.f32 %v3804, 1.442695
      %v3821 = vpow.pop %v3820
      %v3822 = vmul.f32 %v3805, 1.442695
      %v3823 = vpow.pop %v3822
      %v3824 = vmul.f32 %v3806, 1.442695
      %v3825 = vpow.pop %v3824
      %v3826 = vmul.f32 %v3807, 1.442695
      %v3827 = vpow.pop %v3826
      %v3828 = vmul.f32 %v3808, 1.442695
      %v3829 = vpow.pop %v3828
      %v3830 = vmul.f32 %v3809, 1.442695
      %v3831 = vpow.pop %v3830
      %v3832 = vmul.f32 %v3810, 1.442695
      %v3833 = vpow.pop %v3832
      %v3834 = vmul.f32 %v3811, 1.442695
      %v3835 = vpow.pop %v3834
      %v3836 = vmul.f32 %v3812, 1.442695
      %v3837 = vpow.pop %v3836
      %v3838 = vmul.f32 %v3813, 1.442695
      %v3839 = vpow.pop %v3838
      %v3840 = vmul.f32 %v3814, 1.442695
      %v3841 = vpow.pop %v3840
      %v3842 = vmul.f32 %v3815, 1.442695
      %v3843 = vpow.pop %v3842
      %v3844 = vmul.f32 %v3816, 1.442695
      %v3845 = vpow.pop %v3844
      %v3846 = vmul.f32 %v3817, 1.442695
      %v3847 = vpow.pop %v3846
      %v3848 = vmul.f32 %v3818, 1.442695
      %v3849 = vpow.pop %v3848
      %v3850 = vmul.f32 %v3819, 1.442695
      %v3851 = vpow.pop %v3850
      %v3852 = vadd.f32 %v3821, 1.0
      %v3853 = vadd.f32 %v3823, 1.0
      %v3854 = vadd.f32 %v3825, 1.0
      %v3855 = vadd.f32 %v3827, 1.0
      %v3856 = vadd.f32 %v3829, 1.0
      %v3857 = vadd.f32 %v3831, 1.0
      %v3858 = vadd.f32 %v3833, 1.0
      %v3859 = vadd.f32 %v3835, 1.0
      %v3860 = vadd.f32 %v3837, 1.0
      %v3861 = vadd.f32 %v3839, 1.0
      %v3862 = vadd.f32 %v3841, 1.0
      %v3863 = vadd.f32 %v3843, 1.0
      %v3864 = vadd.f32 %v3845, 1.0
      %v3865 = vadd.f32 %v3847, 1.0
      %v3866 = vadd.f32 %v3849, 1.0
      %v3867 = vadd.f32 %v3851, 1.0
      %v3868 = vrcp.pop %v3852
      %v3869 = vmul.f32 1.0, %v3868
      %v3870 = vrcp.pop %v3853
      %v3871 = vmul.f32 1.0, %v3870
      %v3872 = vrcp.pop %v3854
      %v3873 = vmul.f32 1.0, %v3872
      %v3874 = vrcp.pop %v3855
      %v3875 = vmul.f32 1.0, %v3874
      %v3876 = vrcp.pop %v3856
      %v3877 = vmul.f32 1.0, %v3876
      %v3878 = vrcp.pop %v3857
      %v3879 = vmul.f32 1.0, %v3878
      %v3880 = vrcp.pop %v3858
      %v3881 = vmul.f32 1.0, %v3880
      %v3882 = vrcp.pop %v3859
      %v3883 = vmul.f32 1.0, %v3882
      %v3884 = vrcp.pop %v3860
      %v3885 = vmul.f32 1.0, %v3884
      %v3886 = vrcp.pop %v3861
      %v3887 = vmul.f32 1.0, %v3886
      %v3888 = vrcp.pop %v3862
      %v3889 = vmul.f32 1.0, %v3888
      %v3890 = vrcp.pop %v3863
      %v3891 = vmul.f32 1.0, %v3890
      %v3892 = vrcp.pop %v3864
      %v3893 = vmul.f32 1.0, %v3892
      %v3894 = vrcp.pop %v3865
      %v3895 = vmul.f32 1.0, %v3894
      %v3896 = vrcp.pop %v3866
      %v3897 = vmul.f32 1.0, %v3896
      %v3898 = vrcp.pop %v3867
      %v3899 = vmul.f32 1.0, %v3898
      %v3900 = vtanh.pop %v3574
      %v3901 = vtanh.pop %v3579
      %v3902 = vtanh.pop %v3584
      %v3903 = vtanh.pop %v3589
      %v3904 = vtanh.pop %v3594
      %v3905 = vtanh.pop %v3599
      %v3906 = vtanh.pop %v3604
      %v3907 = vtanh.pop %v3609
      %v3908 = vtanh.pop %v3614
      %v3909 = vtanh.pop %v3619
      %v3910 = vtanh.pop %v3624
      %v3911 = vtanh.pop %v3629
      %v3912 = vtanh.pop %v3634
      %v3913 = vtanh.pop %v3639
      %v3914 = vtanh.pop %v3644
      %v3915 = vtanh.pop %v3649
      %v3916 = vmul.f32 %v3869, %v3900
      %v3917 = vmul.f32 %v3871, %v3901
      %v3918 = vmul.f32 %v3873, %v3902
      %v3919 = vmul.f32 %v3875, %v3903
      %v3920 = vmul.f32 %v3877, %v3904
      %v3921 = vmul.f32 %v3879, %v3905
      %v3922 = vmul.f32 %v3881, %v3906
      %v3923 = vmul.f32 %v3883, %v3907
      %v3924 = vmul.f32 %v3885, %v3908
      %v3925 = vmul.f32 %v3887, %v3909
      %v3926 = vmul.f32 %v3889, %v3910
      %v3927 = vmul.f32 %v3891, %v3911
      %v3928 = vmul.f32 %v3893, %v3912
      %v3929 = vmul.f32 %v3895, %v3913
      %v3930 = vmul.f32 %v3897, %v3914
      %v3931 = vmul.f32 %v3899, %v3915
      %v3932 = vld [vmem:[%s3 + $0xb] sm:$0x1]
      %v3933 = vlaneseq
      %v3934 = vshrl.u32 %v3933, 7
      %v3935 = vsub.s32 0, %v3934
      %v3936 = vrot.slane %v3932, %v3935
      %v3937 = vmul.f32 %v3936, %v3916
      %v3938 = vmul.f32 %v3936, %v3917
      %v3939 = vmul.f32 %v3936, %v3918
      %v3940 = vmul.f32 %v3936, %v3919
      %v3941 = vmul.f32 %v3936, %v3920
      %v3942 = vmul.f32 %v3936, %v3921
      %v3943 = vmul.f32 %v3936, %v3922
      %v3944 = vmul.f32 %v3936, %v3923
      %v3945 = vmul.f32 %v3936, %v3924
      %v3946 = vmul.f32 %v3936, %v3925
      %v3947 = vmul.f32 %v3936, %v3926
      %v3948 = vmul.f32 %v3936, %v3927
      %v3949 = vmul.f32 %v3936, %v3928
      %v3950 = vmul.f32 %v3936, %v3929
      %v3951 = vmul.f32 %v3936, %v3930
      %v3952 = vmul.f32 %v3936, %v3931
      %v3953 = vadd.f32 %v3726, %v3937
      %v3954 = vadd.f32 %v3731, %v3938
      %v3955 = vadd.f32 %v3736, %v3939
      %v3956 = vadd.f32 %v3741, %v3940
      %v3957 = vadd.f32 %v3746, %v3941
      %v3958 = vadd.f32 %v3751, %v3942
      %v3959 = vadd.f32 %v3756, %v3943
      %v3960 = vadd.f32 %v3761, %v3944
      %v3961 = vadd.f32 %v3766, %v3945
      %v3962 = vadd.f32 %v3771, %v3946
      %v3963 = vadd.f32 %v3776, %v3947
      %v3964 = vadd.f32 %v3781, %v3948
      %v3965 = vadd.f32 %v3786, %v3949
      %v3966 = vadd.f32 %v3791, %v3950
      %v3967 = vadd.f32 %v3796, %v3951
      %v3968 = vadd.f32 %v3801, %v3952
      %v3969 = vxor.u32 %v3953, 2147483648
      %v3970 = vxor.u32 %v3954, 2147483648
      %v3971 = vxor.u32 %v3955, 2147483648
      %v3972 = vxor.u32 %v3956, 2147483648
      %v3973 = vxor.u32 %v3957, 2147483648
      %v3974 = vxor.u32 %v3958, 2147483648
      %v3975 = vxor.u32 %v3959, 2147483648
      %v3976 = vxor.u32 %v3960, 2147483648
      %v3977 = vxor.u32 %v3961, 2147483648
      %v3978 = vxor.u32 %v3962, 2147483648
      %v3979 = vxor.u32 %v3963, 2147483648
      %v3980 = vxor.u32 %v3964, 2147483648
      %v3981 = vxor.u32 %v3965, 2147483648
      %v3982 = vxor.u32 %v3966, 2147483648
      %v3983 = vxor.u32 %v3967, 2147483648
      %v3984 = vxor.u32 %v3968, 2147483648
      %v3985 = vmul.f32 %v3969, 1.442695
      %v3986 = vpow.pop %v3985
      %v3987 = vmul.f32 %v3970, 1.442695
      %v3988 = vpow.pop %v3987
      %v3989 = vmul.f32 %v3971, 1.442695
      %v3990 = vpow.pop %v3989
      %v3991 = vmul.f32 %v3972, 1.442695
      %v3992 = vpow.pop %v3991
      %v3993 = vmul.f32 %v3973, 1.442695
      %v3994 = vpow.pop %v3993
      %v3995 = vmul.f32 %v3974, 1.442695
      %v3996 = vpow.pop %v3995
      %v3997 = vmul.f32 %v3975, 1.442695
      %v3998 = vpow.pop %v3997
      %v3999 = vmul.f32 %v3976, 1.442695
      %v4000 = vpow.pop %v3999
      %v4001 = vmul.f32 %v3977, 1.442695
      %v4002 = vpow.pop %v4001
      %v4003 = vmul.f32 %v3978, 1.442695
      %v4004 = vpow.pop %v4003
      %v4005 = vmul.f32 %v3979, 1.442695
      %v4006 = vpow.pop %v4005
      %v4007 = vmul.f32 %v3980, 1.442695
      %v4008 = vpow.pop %v4007
      %v4009 = vmul.f32 %v3981, 1.442695
      %v4010 = vpow.pop %v4009
      %v4011 = vmul.f32 %v3982, 1.442695
      %v4012 = vpow.pop %v4011
      %v4013 = vmul.f32 %v3983, 1.442695
      %v4014 = vpow.pop %v4013
      %v4015 = vmul.f32 %v3984, 1.442695
      %v4016 = vpow.pop %v4015
      %v4017 = vadd.f32 %v3986, 1.0
      %v4018 = vadd.f32 %v3988, 1.0
      %v4019 = vadd.f32 %v3990, 1.0
      %v4020 = vadd.f32 %v3992, 1.0
      %v4021 = vadd.f32 %v3994, 1.0
      %v4022 = vadd.f32 %v3996, 1.0
      %v4023 = vadd.f32 %v3998, 1.0
      %v4024 = vadd.f32 %v4000, 1.0
      %v4025 = vadd.f32 %v4002, 1.0
      %v4026 = vadd.f32 %v4004, 1.0
      %v4027 = vadd.f32 %v4006, 1.0
      %v4028 = vadd.f32 %v4008, 1.0
      %v4029 = vadd.f32 %v4010, 1.0
      %v4030 = vadd.f32 %v4012, 1.0
      %v4031 = vadd.f32 %v4014, 1.0
      %v4032 = vadd.f32 %v4016, 1.0
      %v4033 = vrcp.pop %v4017
      %v4034 = vmul.f32 1.0, %v4033
      %v4035 = vrcp.pop %v4018
      %v4036 = vmul.f32 1.0, %v4035
      %v4037 = vrcp.pop %v4019
      %v4038 = vmul.f32 1.0, %v4037
      %v4039 = vrcp.pop %v4020
      %v4040 = vmul.f32 1.0, %v4039
      %v4041 = vrcp.pop %v4021
      %v4042 = vmul.f32 1.0, %v4041
      %v4043 = vrcp.pop %v4022
      %v4044 = vmul.f32 1.0, %v4043
      %v4045 = vrcp.pop %v4023
      %v4046 = vmul.f32 1.0, %v4045
      %v4047 = vrcp.pop %v4024
      %v4048 = vmul.f32 1.0, %v4047
      %v4049 = vrcp.pop %v4025
      %v4050 = vmul.f32 1.0, %v4049
      %v4051 = vrcp.pop %v4026
      %v4052 = vmul.f32 1.0, %v4051
      %v4053 = vrcp.pop %v4027
      %v4054 = vmul.f32 1.0, %v4053
      %v4055 = vrcp.pop %v4028
      %v4056 = vmul.f32 1.0, %v4055
      %v4057 = vrcp.pop %v4029
      %v4058 = vmul.f32 1.0, %v4057
      %v4059 = vrcp.pop %v4030
      %v4060 = vmul.f32 1.0, %v4059
      %v4061 = vrcp.pop %v4031
      %v4062 = vmul.f32 1.0, %v4061
      %v4063 = vrcp.pop %v4032
      %v4064 = vmul.f32 1.0, %v4063
      %v4065 = vtanh.pop %v3916
      %v4066 = vtanh.pop %v3917
      %v4067 = vtanh.pop %v3918
      %v4068 = vtanh.pop %v3919
      %v4069 = vtanh.pop %v3920
      %v4070 = vtanh.pop %v3921
      %v4071 = vtanh.pop %v3922
      %v4072 = vtanh.pop %v3923
      %v4073 = vtanh.pop %v3924
      %v4074 = vtanh.pop %v3925
      %v4075 = vtanh.pop %v3926
      %v4076 = vtanh.pop %v3927
      %v4077 = vtanh.pop %v3928
      %v4078 = vtanh.pop %v3929
      %v4079 = vtanh.pop %v3930
      %v4080 = vtanh.pop %v3931
      %v4081 = vmul.f32 %v4034, %v4065
      %v4082 = vmul.f32 %v4036, %v4066
      %v4083 = vmul.f32 %v4038, %v4067
      %v4084 = vmul.f32 %v4040, %v4068
      %v4085 = vmul.f32 %v4042, %v4069
      %v4086 = vmul.f32 %v4044, %v4070
      %v4087 = vmul.f32 %v4046, %v4071
      %v4088 = vmul.f32 %v4048, %v4072
      %v4089 = vmul.f32 %v4050, %v4073
      %v4090 = vmul.f32 %v4052, %v4074
      %v4091 = vmul.f32 %v4054, %v4075
      %v4092 = vmul.f32 %v4056, %v4076
      %v4093 = vmul.f32 %v4058, %v4077
      %v4094 = vmul.f32 %v4060, %v4078
      %v4095 = vmul.f32 %v4062, %v4079
      %v4096 = vmul.f32 %v4064, %v4080
      %s4097 = scalar_lea.vmem %s2, 40
      %v4098 = vld [vmem:[%s4097] sm:$0xff]
      %v4099 = vld [vmem:[%s3 + $0x5] sm:$0x1]
      %v4100 = vlaneseq
      %v4101 = vshrl.u32 %v4100, 7
      %v4102 = vsub.s32 0, %v4101
      %v4103 = vrot.slane %v4099, %v4102
      %v4105 = vsel %vm292, %v4081, 0
      %v4108 = vsel %vm292, %v4082, 0
      %v4111 = vsel %vm292, %v4083, 0
      %v4114 = vsel %vm292, %v4084, 0
      %v4117 = vsel %vm292, %v4085, 0
      %v4120 = vsel %vm292, %v4086, 0
      %v4123 = vsel %vm292, %v4087, 0
      %v4126 = vsel %vm292, %v4088, 0
      %v4129 = vsel %vm292, %v4089, 0
      %v4132 = vsel %vm292, %v4090, 0
      %v4135 = vsel %vm292, %v4091, 0
      %v4138 = vsel %vm292, %v4092, 0
      %v4141 = vsel %vm292, %v4093, 0
      %v4144 = vsel %vm292, %v4094, 0
      %v4147 = vsel %vm292, %v4095, 0
      %v4150 = vsel %vm292, %v4096, 0
      %4152 = vmatprep.subr.mxu0 0.0
      %4153 = vmatpush1.msra.mxu0 0.0
      %4154 = vmatprep.subr.mxu0 0.0
      %4155 = vmatpush1.msra.mxu0 0.0
      %4156 = vmatprep.subr.mxu0 0.0
      %4157 = vmatpush1.msra.mxu0 0.0
      %4158 = vmatprep.subr.mxu0 0.0
      %4159 = vmatpush1.msra.mxu0 0.0
      %4160 = vmatprep.subr.mxu0 0.0
      %4161 = vmatpush1.msra.mxu0 0.0
      %4162 = vmatprep.subr.mxu0 0.0
      %4163 = vmatpush1.msra.mxu0 0.0
      %4164 = vmatprep.subr.mxu0 0.0
      %4165 = vmatpush1.msra.mxu0 0.0
      %4166 = vmatprep.subr.mxu0 0.0
      %4167 = vmatpush1.msra.mxu0 0.0
      %4168 = vmatprep.subr.mxu0 0.0
      %4169 = vmatpush1.msra.mxu0 0.0
      %4170 = vmatprep.subr.mxu0 0.0
      %4171 = vmatpush1.msra.mxu0 0.0
      %4172 = vmatprep.subr.mxu0 0.0
      %4173 = vmatpush1.msra.mxu0 0.0
      %4174 = vmatprep.subr.mxu0 0.0
      %4175 = vmatpush1.msra.mxu0 0.0
      %4176 = vmatprep.subr.mxu0 0.0
      %4177 = vmatpush1.msra.mxu0 0.0
      %4178 = vmatprep.subr.mxu0 0.0
      %4179 = vmatpush1.msra.mxu0 0.0
      %4180 = vmatprep.subr.mxu0 0.0
      %4181 = vmatpush1.msra.mxu0 0.0
      %4182 = vmatprep.subr.mxu0 0.0
      %4183 = vmatpush1.msra.mxu0 %v4098
      %4184 = vmatprep.subr.mxu0 0.0
      %4185 = vmatpush2.msra.mxu0 0.0
      %4186 = vmatprep.subr.mxu0 0.0
      %4187 = vmatpush2.msra.mxu0 0.0
      %4188 = vmatprep.subr.mxu0 0.0
      %4189 = vmatpush2.msra.mxu0 0.0
      %4190 = vmatprep.subr.mxu0 0.0
      %4191 = vmatpush2.msra.mxu0 0.0
      %4192 = vmatprep.subr.mxu0 0.0
      %4193 = vmatpush2.msra.mxu0 0.0
      %4194 = vmatprep.subr.mxu0 0.0
      %4195 = vmatpush2.msra.mxu0 0.0
      %4196 = vmatprep.subr.mxu0 0.0
      %4197 = vmatpush2.msra.mxu0 0.0
      %4198 = vmatprep.subr.mxu0 0.0
      %4199 = vmatpush2.msra.mxu0 0.0
      %4200 = vmatprep.subr.mxu0 0.0
      %4201 = vmatpush2.msra.mxu0 0.0
      %4202 = vmatprep.subr.mxu0 0.0
      %4203 = vmatpush2.msra.mxu0 0.0
      %4204 = vmatprep.subr.mxu0 0.0
      %4205 = vmatpush2.msra.mxu0 0.0
      %4206 = vmatprep.subr.mxu0 0.0
      %4207 = vmatpush2.msra.mxu0 0.0
      %4208 = vmatprep.subr.mxu0 0.0
      %4209 = vmatpush2.msra.mxu0 0.0
      %4210 = vmatprep.subr.mxu0 0.0
      %4211 = vmatpush2.msra.mxu0 0.0
      %4212 = vmatprep.subr.mxu0 0.0
      %4213 = vmatpush2.msra.mxu0 0.0
      %4214 = vmatprep.subr.mxu0 0.0
      %4215 = vmatpush2.msra.mxu0 0.0
      %4216 = vmatprep.mubr.f32.mxu0 0.0
      %4217 = vmatmul.mubr.f32.gmra.mxu0 %v4105
      %v4218 = vpop.f32.mrf.mxu0
      %v4219 = vadd.f32 %v4103, %v4218
      %v4220 = vpop.f32.mrf.mxu0
      %4221 = vmatprep.mubr.f32.mxu0 0.0
      %4222 = vmatmul.mubr.f32.gmra.mxu0 %v4108
      %v4223 = vpop.f32.mrf.mxu0
      %v4224 = vadd.f32 %v4103, %v4223
      %v4225 = vpop.f32.mrf.mxu0
      %4226 = vmatprep.mubr.f32.mxu0 0.0
      %4227 = vmatmul.mubr.f32.gmra.mxu0 %v4111
      %v4228 = vpop.f32.mrf.mxu0
      %v4229 = vadd.f32 %v4103, %v4228
      %v4230 = vpop.f32.mrf.mxu0
      %4231 = vmatprep.mubr.f32.mxu0 0.0
      %4232 = vmatmul.mubr.f32.gmra.mxu0 %v4114
      %v4233 = vpop.f32.mrf.mxu0
      %v4234 = vadd.f32 %v4103, %v4233
      %v4235 = vpop.f32.mrf.mxu0
      %4236 = vmatprep.mubr.f32.mxu0 0.0
      %4237 = vmatmul.mubr.f32.gmra.mxu0 %v4117
      %v4238 = vpop.f32.mrf.mxu0
      %v4239 = vadd.f32 %v4103, %v4238
      %v4240 = vpop.f32.mrf.mxu0
      %4241 = vmatprep.mubr.f32.mxu0 0.0
      %4242 = vmatmul.mubr.f32.gmra.mxu0 %v4120
      %v4243 = vpop.f32.mrf.mxu0
      %v4244 = vadd.f32 %v4103, %v4243
      %v4245 = vpop.f32.mrf.mxu0
      %4246 = vmatprep.mubr.f32.mxu0 0.0
      %4247 = vmatmul.mubr.f32.gmra.mxu0 %v4123
      %v4248 = vpop.f32.mrf.mxu0
      %v4249 = vadd.f32 %v4103, %v4248
      %v4250 = vpop.f32.mrf.mxu0
      %4251 = vmatprep.mubr.f32.mxu0 0.0
      %4252 = vmatmul.mubr.f32.gmra.mxu0 %v4126
      %v4253 = vpop.f32.mrf.mxu0
      %v4254 = vadd.f32 %v4103, %v4253
      %v4255 = vpop.f32.mrf.mxu0
      %4256 = vmatprep.mubr.f32.mxu0 0.0
      %4257 = vmatmul.mubr.f32.gmra.mxu0 %v4129
      %v4258 = vpop.f32.mrf.mxu0
      %v4259 = vadd.f32 %v4103, %v4258
      %v4260 = vpop.f32.mrf.mxu0
      %4261 = vmatprep.mubr.f32.mxu0 0.0
      %4262 = vmatmul.mubr.f32.gmra.mxu0 %v4132
      %v4263 = vpop.f32.mrf.mxu0
      %v4264 = vadd.f32 %v4103, %v4263
      %v4265 = vpop.f32.mrf.mxu0
      %4266 = vmatprep.mubr.f32.mxu0 0.0
      %4267 = vmatmul.mubr.f32.gmra.mxu0 %v4135
      %v4268 = vpop.f32.mrf.mxu0
      %v4269 = vadd.f32 %v4103, %v4268
      %v4270 = vpop.f32.mrf.mxu0
      %4271 = vmatprep.mubr.f32.mxu0 0.0
      %4272 = vmatmul.mubr.f32.gmra.mxu0 %v4138
      %v4273 = vpop.f32.mrf.mxu0
      %v4274 = vadd.f32 %v4103, %v4273
      %v4275 = vpop.f32.mrf.mxu0
      %4276 = vmatprep.mubr.f32.mxu0 0.0
      %4277 = vmatmul.mubr.f32.gmra.mxu0 %v4141
      %v4278 = vpop.f32.mrf.mxu0
      %v4279 = vadd.f32 %v4103, %v4278
      %v4280 = vpop.f32.mrf.mxu0
      %4281 = vmatprep.mubr.f32.mxu0 0.0
      %4282 = vmatmul.mubr.f32.gmra.mxu0 %v4144
      %v4283 = vpop.f32.mrf.mxu0
      %v4284 = vadd.f32 %v4103, %v4283
      %v4285 = vpop.f32.mrf.mxu0
      %4286 = vmatprep.mubr.f32.mxu0 0.0
      %4287 = vmatmul.mubr.f32.gmra.mxu0 %v4147
      %v4288 = vpop.f32.mrf.mxu0
      %v4289 = vadd.f32 %v4103, %v4288
      %v4290 = vpop.f32.mrf.mxu0
      %4291 = vmatprep.mubr.f32.mxu0 0.0
      %4292 = vmatmul.mubr.f32.gmra.mxu0 %v4150
      %v4293 = vpop.f32.mrf.mxu0
      %v4294 = vadd.f32 %v4103, %v4293
      %v4295 = vpop.f32.mrf.mxu0
      %4296 = vdwg.mxu0
      %s4297 = scalar_lea.vmem %s2, 48
      %v4298 = vld [vmem:[%s4297] sm:$0xff]
      %v4299 = vld [vmem:[%s3 + $0x6] sm:$0x1]
      %v4300 = vlaneseq
      %v4301 = vshrl.u32 %v4300, 7
      %v4302 = vsub.s32 0, %v4301
      %v4303 = vrot.slane %v4299, %v4302
      %4304 = vmatprep.subr.mxu0 0.0
      %4305 = vmatpush1.msra.mxu0 0.0
      %4306 = vmatprep.subr.mxu0 0.0
      %4307 = vmatpush1.msra.mxu0 0.0
      %4308 = vmatprep.subr.mxu0 0.0
      %4309 = vmatpush1.msra.mxu0 0.0
      %4310 = vmatprep.subr.mxu0 0.0
      %4311 = vmatpush1.msra.mxu0 0.0
      %4312 = vmatprep.subr.mxu0 0.0
      %4313 = vmatpush1.msra.mxu0 0.0
      %4314 = vmatprep.subr.mxu0 0.0
      %4315 = vmatpush1.msra.mxu0 0.0
      %4316 = vmatprep.subr.mxu0 0.0
      %4317 = vmatpush1.msra.mxu0 0.0
      %4318 = vmatprep.subr.mxu0 0.0
      %4319 = vmatpush1.msra.mxu0 0.0
      %4320 = vmatprep.subr.mxu0 0.0
      %4321 = vmatpush1.msra.mxu0 0.0
      %4322 = vmatprep.subr.mxu0 0.0
      %4323 = vmatpush1.msra.mxu0 0.0
      %4324 = vmatprep.subr.mxu0 0.0
      %4325 = vmatpush1.msra.mxu0 0.0
      %4326 = vmatprep.subr.mxu0 0.0
      %4327 = vmatpush1.msra.mxu0 0.0
      %4328 = vmatprep.subr.mxu0 0.0
      %4329 = vmatpush1.msra.mxu0 0.0
      %4330 = vmatprep.subr.mxu0 0.0
      %4331 = vmatpush1.msra.mxu0 0.0
      %4332 = vmatprep.subr.mxu0 0.0
      %4333 = vmatpush1.msra.mxu0 0.0
      %4334 = vmatprep.subr.mxu0 0.0
      %4335 = vmatpush1.msra.mxu0 %v4298
      %4336 = vmatprep.subr.mxu0 0.0
      %4337 = vmatpush2.msra.mxu0 0.0
      %4338 = vmatprep.subr.mxu0 0.0
      %4339 = vmatpush2.msra.mxu0 0.0
      %4340 = vmatprep.subr.mxu0 0.0
      %4341 = vmatpush2.msra.mxu0 0.0
      %4342 = vmatprep.subr.mxu0 0.0
      %4343 = vmatpush2.msra.mxu0 0.0
      %4344 = vmatprep.subr.mxu0 0.0
      %4345 = vmatpush2.msra.mxu0 0.0
      %4346 = vmatprep.subr.mxu0 0.0
      %4347 = vmatpush2.msra.mxu0 0.0
      %4348 = vmatprep.subr.mxu0 0.0
      %4349 = vmatpush2.msra.mxu0 0.0
      %4350 = vmatprep.subr.mxu0 0.0
      %4351 = vmatpush2.msra.mxu0 0.0
      %4352 = vmatprep.subr.mxu0 0.0
      %4353 = vmatpush2.msra.mxu0 0.0
      %4354 = vmatprep.subr.mxu0 0.0
      %4355 = vmatpush2.msra.mxu0 0.0
      %4356 = vmatprep.subr.mxu0 0.0
      %4357 = vmatpush2.msra.mxu0 0.0
      %4358 = vmatprep.subr.mxu0 0.0
      %4359 = vmatpush2.msra.mxu0 0.0
      %4360 = vmatprep.subr.mxu0 0.0
      %4361 = vmatpush2.msra.mxu0 0.0
      %4362 = vmatprep.subr.mxu0 0.0
      %4363 = vmatpush2.msra.mxu0 0.0
      %4364 = vmatprep.subr.mxu0 0.0
      %4365 = vmatpush2.msra.mxu0 0.0
      %4366 = vmatprep.subr.mxu0 0.0
      %4367 = vmatpush2.msra.mxu0 0.0
      %4368 = vmatprep.mubr.f32.mxu0 0.0
      %4369 = vmatmul.mubr.f32.gmra.mxu0 %v4105
      %v4370 = vpop.f32.mrf.mxu0
      %v4371 = vadd.f32 %v4303, %v4370
      %v4372 = vpop.f32.mrf.mxu0
      %4373 = vmatprep.mubr.f32.mxu0 0.0
      %4374 = vmatmul.mubr.f32.gmra.mxu0 %v4108
      %v4375 = vpop.f32.mrf.mxu0
      %v4376 = vadd.f32 %v4303, %v4375
      %v4377 = vpop.f32.mrf.mxu0
      %4378 = vmatprep.mubr.f32.mxu0 0.0
      %4379 = vmatmul.mubr.f32.gmra.mxu0 %v4111
      %v4380 = vpop.f32.mrf.mxu0
      %v4381 = vadd.f32 %v4303, %v4380
      %v4382 = vpop.f32.mrf.mxu0
      %4383 = vmatprep.mubr.f32.mxu0 0.0
      %4384 = vmatmul.mubr.f32.gmra.mxu0 %v4114
      %v4385 = vpop.f32.mrf.mxu0
      %v4386 = vadd.f32 %v4303, %v4385
      %v4387 = vpop.f32.mrf.mxu0
      %4388 = vmatprep.mubr.f32.mxu0 0.0
      %4389 = vmatmul.mubr.f32.gmra.mxu0 %v4117
      %v4390 = vpop.f32.mrf.mxu0
      %v4391 = vadd.f32 %v4303, %v4390
      %v4392 = vpop.f32.mrf.mxu0
      %4393 = vmatprep.mubr.f32.mxu0 0.0
      %4394 = vmatmul.mubr.f32.gmra.mxu0 %v4120
      %v4395 = vpop.f32.mrf.mxu0
      %v4396 = vadd.f32 %v4303, %v4395
      %v4397 = vpop.f32.mrf.mxu0
      %4398 = vmatprep.mubr.f32.mxu0 0.0
      %4399 = vmatmul.mubr.f32.gmra.mxu0 %v4123
      %v4400 = vpop.f32.mrf.mxu0
      %v4401 = vadd.f32 %v4303, %v4400
      %v4402 = vpop.f32.mrf.mxu0
      %4403 = vmatprep.mubr.f32.mxu0 0.0
      %4404 = vmatmul.mubr.f32.gmra.mxu0 %v4126
      %v4405 = vpop.f32.mrf.mxu0
      %v4406 = vadd.f32 %v4303, %v4405
      %v4407 = vpop.f32.mrf.mxu0
      %4408 = vmatprep.mubr.f32.mxu0 0.0
      %4409 = vmatmul.mubr.f32.gmra.mxu0 %v4129
      %v4410 = vpop.f32.mrf.mxu0
      %v4411 = vadd.f32 %v4303, %v4410
      %v4412 = vpop.f32.mrf.mxu0
      %4413 = vmatprep.mubr.f32.mxu0 0.0
      %4414 = vmatmul.mubr.f32.gmra.mxu0 %v4132
      %v4415 = vpop.f32.mrf.mxu0
      %v4416 = vadd.f32 %v4303, %v4415
      %v4417 = vpop.f32.mrf.mxu0
      %4418 = vmatprep.mubr.f32.mxu0 0.0
      %4419 = vmatmul.mubr.f32.gmra.mxu0 %v4135
      %v4420 = vpop.f32.mrf.mxu0
      %v4421 = vadd.f32 %v4303, %v4420
      %v4422 = vpop.f32.mrf.mxu0
      %4423 = vmatprep.mubr.f32.mxu0 0.0
      %4424 = vmatmul.mubr.f32.gmra.mxu0 %v4138
      %v4425 = vpop.f32.mrf.mxu0
      %v4426 = vadd.f32 %v4303, %v4425
      %v4427 = vpop.f32.mrf.mxu0
      %4428 = vmatprep.mubr.f32.mxu0 0.0
      %4429 = vmatmul.mubr.f32.gmra.mxu0 %v4141
      %v4430 = vpop.f32.mrf.mxu0
      %v4431 = vadd.f32 %v4303, %v4430
      %v4432 = vpop.f32.mrf.mxu0
      %4433 = vmatprep.mubr.f32.mxu0 0.0
      %4434 = vmatmul.mubr.f32.gmra.mxu0 %v4144
      %v4435 = vpop.f32.mrf.mxu0
      %v4436 = vadd.f32 %v4303, %v4435
      %v4437 = vpop.f32.mrf.mxu0
      %4438 = vmatprep.mubr.f32.mxu0 0.0
      %4439 = vmatmul.mubr.f32.gmra.mxu0 %v4147
      %v4440 = vpop.f32.mrf.mxu0
      %v4441 = vadd.f32 %v4303, %v4440
      %v4442 = vpop.f32.mrf.mxu0
      %4443 = vmatprep.mubr.f32.mxu0 0.0
      %4444 = vmatmul.mubr.f32.gmra.mxu0 %v4150
      %v4445 = vpop.f32.mrf.mxu0
      %v4446 = vadd.f32 %v4303, %v4445
      %v4447 = vpop.f32.mrf.mxu0
      %4448 = vdwg.mxu0
      %s4449 = scalar_lea.vmem %s2, 56
      %v4450 = vld [vmem:[%s4449] sm:$0xff]
      %v4451 = vld [vmem:[%s3 + $0x7] sm:$0x1]
      %v4452 = vlaneseq
      %v4453 = vshrl.u32 %v4452, 7
      %v4454 = vsub.s32 0, %v4453
      %v4455 = vrot.slane %v4451, %v4454
      %4456 = vmatprep.subr.mxu0 0.0
      %4457 = vmatpush1.msra.mxu0 0.0
      %4458 = vmatprep.subr.mxu0 0.0
      %4459 = vmatpush1.msra.mxu0 0.0
      %4460 = vmatprep.subr.mxu0 0.0
      %4461 = vmatpush1.msra.mxu0 0.0
      %4462 = vmatprep.subr.mxu0 0.0
      %4463 = vmatpush1.msra.mxu0 0.0
      %4464 = vmatprep.subr.mxu0 0.0
      %4465 = vmatpush1.msra.mxu0 0.0
      %4466 = vmatprep.subr.mxu0 0.0
      %4467 = vmatpush1.msra.mxu0 0.0
      %4468 = vmatprep.subr.mxu0 0.0
      %4469 = vmatpush1.msra.mxu0 0.0
      %4470 = vmatprep.subr.mxu0 0.0
      %4471 = vmatpush1.msra.mxu0 0.0
      %4472 = vmatprep.subr.mxu0 0.0
      %4473 = vmatpush1.msra.mxu0 0.0
      %4474 = vmatprep.subr.mxu0 0.0
      %4475 = vmatpush1.msra.mxu0 0.0
      %4476 = vmatprep.subr.mxu0 0.0
      %4477 = vmatpush1.msra.mxu0 0.0
      %4478 = vmatprep.subr.mxu0 0.0
      %4479 = vmatpush1.msra.mxu0 0.0
      %4480 = vmatprep.subr.mxu0 0.0
      %4481 = vmatpush1.msra.mxu0 0.0
      %4482 = vmatprep.subr.mxu0 0.0
      %4483 = vmatpush1.msra.mxu0 0.0
      %4484 = vmatprep.subr.mxu0 0.0
      %4485 = vmatpush1.msra.mxu0 0.0
      %4486 = vmatprep.subr.mxu0 0.0
      %4487 = vmatpush1.msra.mxu0 %v4450
      %4488 = vmatprep.subr.mxu0 0.0
      %4489 = vmatpush2.msra.mxu0 0.0
      %4490 = vmatprep.subr.mxu0 0.0
      %4491 = vmatpush2.msra.mxu0 0.0
      %4492 = vmatprep.subr.mxu0 0.0
      %4493 = vmatpush2.msra.mxu0 0.0
      %4494 = vmatprep.subr.mxu0 0.0
      %4495 = vmatpush2.msra.mxu0 0.0
      %4496 = vmatprep.subr.mxu0 0.0
      %4497 = vmatpush2.msra.mxu0 0.0
      %4498 = vmatprep.subr.mxu0 0.0
      %4499 = vmatpush2.msra.mxu0 0.0
      %4500 = vmatprep.subr.mxu0 0.0
      %4501 = vmatpush2.msra.mxu0 0.0
      %4502 = vmatprep.subr.mxu0 0.0
      %4503 = vmatpush2.msra.mxu0 0.0
      %4504 = vmatprep.subr.mxu0 0.0
      %4505 = vmatpush2.msra.mxu0 0.0
      %4506 = vmatprep.subr.mxu0 0.0
      %4507 = vmatpush2.msra.mxu0 0.0
      %4508 = vmatprep.subr.mxu0 0.0
      %4509 = vmatpush2.msra.mxu0 0.0
      %4510 = vmatprep.subr.mxu0 0.0
      %4511 = vmatpush2.msra.mxu0 0.0
      %4512 = vmatprep.subr.mxu0 0.0
      %4513 = vmatpush2.msra.mxu0 0.0
      %4514 = vmatprep.subr.mxu0 0.0
      %4515 = vmatpush2.msra.mxu0 0.0
      %4516 = vmatprep.subr.mxu0 0.0
      %4517 = vmatpush2.msra.mxu0 0.0
      %4518 = vmatprep.subr.mxu0 0.0
      %4519 = vmatpush2.msra.mxu0 0.0
      %4520 = vmatprep.mubr.f32.mxu0 0.0
      %4521 = vmatmul.mubr.f32.gmra.mxu0 %v4105
      %v4522 = vpop.f32.mrf.mxu0
      %v4523 = vadd.f32 %v4455, %v4522
      %v4524 = vpop.f32.mrf.mxu0
      %4525 = vmatprep.mubr.f32.mxu0 0.0
      %4526 = vmatmul.mubr.f32.gmra.mxu0 %v4108
      %v4527 = vpop.f32.mrf.mxu0
      %v4528 = vadd.f32 %v4455, %v4527
      %v4529 = vpop.f32.mrf.mxu0
      %4530 = vmatprep.mubr.f32.mxu0 0.0
      %4531 = vmatmul.mubr.f32.gmra.mxu0 %v4111
      %v4532 = vpop.f32.mrf.mxu0
      %v4533 = vadd.f32 %v4455, %v4532
      %v4534 = vpop.f32.mrf.mxu0
      %4535 = vmatprep.mubr.f32.mxu0 0.0
      %4536 = vmatmul.mubr.f32.gmra.mxu0 %v4114
      %v4537 = vpop.f32.mrf.mxu0
      %v4538 = vadd.f32 %v4455, %v4537
      %v4539 = vpop.f32.mrf.mxu0
      %4540 = vmatprep.mubr.f32.mxu0 0.0
      %4541 = vmatmul.mubr.f32.gmra.mxu0 %v4117
      %v4542 = vpop.f32.mrf.mxu0
      %v4543 = vadd.f32 %v4455, %v4542
      %v4544 = vpop.f32.mrf.mxu0
      %4545 = vmatprep.mubr.f32.mxu0 0.0
      %4546 = vmatmul.mubr.f32.gmra.mxu0 %v4120
      %v4547 = vpop.f32.mrf.mxu0
      %v4548 = vadd.f32 %v4455, %v4547
      %v4549 = vpop.f32.mrf.mxu0
      %4550 = vmatprep.mubr.f32.mxu0 0.0
      %4551 = vmatmul.mubr.f32.gmra.mxu0 %v4123
      %v4552 = vpop.f32.mrf.mxu0
      %v4553 = vadd.f32 %v4455, %v4552
      %v4554 = vpop.f32.mrf.mxu0
      %4555 = vmatprep.mubr.f32.mxu0 0.0
      %4556 = vmatmul.mubr.f32.gmra.mxu0 %v4126
      %v4557 = vpop.f32.mrf.mxu0
      %v4558 = vadd.f32 %v4455, %v4557
      %v4559 = vpop.f32.mrf.mxu0
      %4560 = vmatprep.mubr.f32.mxu0 0.0
      %4561 = vmatmul.mubr.f32.gmra.mxu0 %v4129
      %v4562 = vpop.f32.mrf.mxu0
      %v4563 = vadd.f32 %v4455, %v4562
      %v4564 = vpop.f32.mrf.mxu0
      %4565 = vmatprep.mubr.f32.mxu0 0.0
      %4566 = vmatmul.mubr.f32.gmra.mxu0 %v4132
      %v4567 = vpop.f32.mrf.mxu0
      %v4568 = vadd.f32 %v4455, %v4567
      %v4569 = vpop.f32.mrf.mxu0
      %4570 = vmatprep.mubr.f32.mxu0 0.0
      %4571 = vmatmul.mubr.f32.gmra.mxu0 %v4135
      %v4572 = vpop.f32.mrf.mxu0
      %v4573 = vadd.f32 %v4455, %v4572
      %v4574 = vpop.f32.mrf.mxu0
      %4575 = vmatprep.mubr.f32.mxu0 0.0
      %4576 = vmatmul.mubr.f32.gmra.mxu0 %v4138
      %v4577 = vpop.f32.mrf.mxu0
      %v4578 = vadd.f32 %v4455, %v4577
      %v4579 = vpop.f32.mrf.mxu0
      %4580 = vmatprep.mubr.f32.mxu0 0.0
      %4581 = vmatmul.mubr.f32.gmra.mxu0 %v4141
      %v4582 = vpop.f32.mrf.mxu0
      %v4583 = vadd.f32 %v4455, %v4582
      %v4584 = vpop.f32.mrf.mxu0
      %4585 = vmatprep.mubr.f32.mxu0 0.0
      %4586 = vmatmul.mubr.f32.gmra.mxu0 %v4144
      %v4587 = vpop.f32.mrf.mxu0
      %v4588 = vadd.f32 %v4455, %v4587
      %v4589 = vpop.f32.mrf.mxu0
      %4590 = vmatprep.mubr.f32.mxu0 0.0
      %4591 = vmatmul.mubr.f32.gmra.mxu0 %v4147
      %v4592 = vpop.f32.mrf.mxu0
      %v4593 = vadd.f32 %v4455, %v4592
      %v4594 = vpop.f32.mrf.mxu0
      %4595 = vmatprep.mubr.f32.mxu0 0.0
      %4596 = vmatmul.mubr.f32.gmra.mxu0 %v4150
      %v4597 = vpop.f32.mrf.mxu0
      %v4598 = vadd.f32 %v4455, %v4597
      %v4599 = vpop.f32.mrf.mxu0
      %4600 = vdwg.mxu0
      %v4601 = vxor.u32 %v4219, 2147483648
      %v4602 = vxor.u32 %v4224, 2147483648
      %v4603 = vxor.u32 %v4229, 2147483648
      %v4604 = vxor.u32 %v4234, 2147483648
      %v4605 = vxor.u32 %v4239, 2147483648
      %v4606 = vxor.u32 %v4244, 2147483648
      %v4607 = vxor.u32 %v4249, 2147483648
      %v4608 = vxor.u32 %v4254, 2147483648
      %v4609 = vxor.u32 %v4259, 2147483648
      %v4610 = vxor.u32 %v4264, 2147483648
      %v4611 = vxor.u32 %v4269, 2147483648
      %v4612 = vxor.u32 %v4274, 2147483648
      %v4613 = vxor.u32 %v4279, 2147483648
      %v4614 = vxor.u32 %v4284, 2147483648
      %v4615 = vxor.u32 %v4289, 2147483648
      %v4616 = vxor.u32 %v4294, 2147483648
      %v4617 = vmul.f32 %v4601, 1.442695
      %v4618 = vpow.pop %v4617
      %v4619 = vmul.f32 %v4602, 1.442695
      %v4620 = vpow.pop %v4619
      %v4621 = vmul.f32 %v4603, 1.442695
      %v4622 = vpow.pop %v4621
      %v4623 = vmul.f32 %v4604, 1.442695
      %v4624 = vpow.pop %v4623
      %v4625 = vmul.f32 %v4605, 1.442695
      %v4626 = vpow.pop %v4625
      %v4627 = vmul.f32 %v4606, 1.442695
      %v4628 = vpow.pop %v4627
      %v4629 = vmul.f32 %v4607, 1.442695
      %v4630 = vpow.pop %v4629
      %v4631 = vmul.f32 %v4608, 1.442695
      %v4632 = vpow.pop %v4631
      %v4633 = vmul.f32 %v4609, 1.442695
      %v4634 = vpow.pop %v4633
      %v4635 = vmul.f32 %v4610, 1.442695
      %v4636 = vpow.pop %v4635
      %v4637 = vmul.f32 %v4611, 1.442695
      %v4638 = vpow.pop %v4637
      %v4639 = vmul.f32 %v4612, 1.442695
      %v4640 = vpow.pop %v4639
      %v4641 = vmul.f32 %v4613, 1.442695
      %v4642 = vpow.pop %v4641
      %v4643 = vmul.f32 %v4614, 1.442695
      %v4644 = vpow.pop %v4643
      %v4645 = vmul.f32 %v4615, 1.442695
      %v4646 = vpow.pop %v4645
      %v4647 = vmul.f32 %v4616, 1.442695
      %v4648 = vpow.pop %v4647
      %v4649 = vadd.f32 %v4618, 1.0
      %v4650 = vadd.f32 %v4620, 1.0
      %v4651 = vadd.f32 %v4622, 1.0
      %v4652 = vadd.f32 %v4624, 1.0
      %v4653 = vadd.f32 %v4626, 1.0
      %v4654 = vadd.f32 %v4628, 1.0
      %v4655 = vadd.f32 %v4630, 1.0
      %v4656 = vadd.f32 %v4632, 1.0
      %v4657 = vadd.f32 %v4634, 1.0
      %v4658 = vadd.f32 %v4636, 1.0
      %v4659 = vadd.f32 %v4638, 1.0
      %v4660 = vadd.f32 %v4640, 1.0
      %v4661 = vadd.f32 %v4642, 1.0
      %v4662 = vadd.f32 %v4644, 1.0
      %v4663 = vadd.f32 %v4646, 1.0
      %v4664 = vadd.f32 %v4648, 1.0
      %v4665 = vrcp.pop %v4649
      %v4666 = vmul.f32 1.0, %v4665
      %v4667 = vrcp.pop %v4650
      %v4668 = vmul.f32 1.0, %v4667
      %v4669 = vrcp.pop %v4651
      %v4670 = vmul.f32 1.0, %v4669
      %v4671 = vrcp.pop %v4652
      %v4672 = vmul.f32 1.0, %v4671
      %v4673 = vrcp.pop %v4653
      %v4674 = vmul.f32 1.0, %v4673
      %v4675 = vrcp.pop %v4654
      %v4676 = vmul.f32 1.0, %v4675
      %v4677 = vrcp.pop %v4655
      %v4678 = vmul.f32 1.0, %v4677
      %v4679 = vrcp.pop %v4656
      %v4680 = vmul.f32 1.0, %v4679
      %v4681 = vrcp.pop %v4657
      %v4682 = vmul.f32 1.0, %v4681
      %v4683 = vrcp.pop %v4658
      %v4684 = vmul.f32 1.0, %v4683
      %v4685 = vrcp.pop %v4659
      %v4686 = vmul.f32 1.0, %v4685
      %v4687 = vrcp.pop %v4660
      %v4688 = vmul.f32 1.0, %v4687
      %v4689 = vrcp.pop %v4661
      %v4690 = vmul.f32 1.0, %v4689
      %v4691 = vrcp.pop %v4662
      %v4692 = vmul.f32 1.0, %v4691
      %v4693 = vrcp.pop %v4663
      %v4694 = vmul.f32 1.0, %v4693
      %v4695 = vrcp.pop %v4664
      %v4696 = vmul.f32 1.0, %v4695
      %v4697 = vtanh.pop %v4371
      %v4698 = vtanh.pop %v4376
      %v4699 = vtanh.pop %v4381
      %v4700 = vtanh.pop %v4386
      %v4701 = vtanh.pop %v4391
      %v4702 = vtanh.pop %v4396
      %v4703 = vtanh.pop %v4401
      %v4704 = vtanh.pop %v4406
      %v4705 = vtanh.pop %v4411
      %v4706 = vtanh.pop %v4416
      %v4707 = vtanh.pop %v4421
      %v4708 = vtanh.pop %v4426
      %v4709 = vtanh.pop %v4431
      %v4710 = vtanh.pop %v4436
      %v4711 = vtanh.pop %v4441
      %v4712 = vtanh.pop %v4446
      %v4713 = vmul.f32 %v4666, %v4697
      %v4714 = vmul.f32 %v4668, %v4698
      %v4715 = vmul.f32 %v4670, %v4699
      %v4716 = vmul.f32 %v4672, %v4700
      %v4717 = vmul.f32 %v4674, %v4701
      %v4718 = vmul.f32 %v4676, %v4702
      %v4719 = vmul.f32 %v4678, %v4703
      %v4720 = vmul.f32 %v4680, %v4704
      %v4721 = vmul.f32 %v4682, %v4705
      %v4722 = vmul.f32 %v4684, %v4706
      %v4723 = vmul.f32 %v4686, %v4707
      %v4724 = vmul.f32 %v4688, %v4708
      %v4725 = vmul.f32 %v4690, %v4709
      %v4726 = vmul.f32 %v4692, %v4710
      %v4727 = vmul.f32 %v4694, %v4711
      %v4728 = vmul.f32 %v4696, %v4712
      %v4729 = vld [vmem:[%s3 + $0xc] sm:$0x1]
      %v4730 = vlaneseq
      %v4731 = vshrl.u32 %v4730, 7
      %v4732 = vsub.s32 0, %v4731
      %v4733 = vrot.slane %v4729, %v4732
      %v4734 = vmul.f32 %v4733, %v4713
      %v4735 = vmul.f32 %v4733, %v4714
      %v4736 = vmul.f32 %v4733, %v4715
      %v4737 = vmul.f32 %v4733, %v4716
      %v4738 = vmul.f32 %v4733, %v4717
      %v4739 = vmul.f32 %v4733, %v4718
      %v4740 = vmul.f32 %v4733, %v4719
      %v4741 = vmul.f32 %v4733, %v4720
      %v4742 = vmul.f32 %v4733, %v4721
      %v4743 = vmul.f32 %v4733, %v4722
      %v4744 = vmul.f32 %v4733, %v4723
      %v4745 = vmul.f32 %v4733, %v4724
      %v4746 = vmul.f32 %v4733, %v4725
      %v4747 = vmul.f32 %v4733, %v4726
      %v4748 = vmul.f32 %v4733, %v4727
      %v4749 = vmul.f32 %v4733, %v4728
      %v4750 = vadd.f32 %v4523, %v4734
      %v4751 = vadd.f32 %v4528, %v4735
      %v4752 = vadd.f32 %v4533, %v4736
      %v4753 = vadd.f32 %v4538, %v4737
      %v4754 = vadd.f32 %v4543, %v4738
      %v4755 = vadd.f32 %v4548, %v4739
      %v4756 = vadd.f32 %v4553, %v4740
      %v4757 = vadd.f32 %v4558, %v4741
      %v4758 = vadd.f32 %v4563, %v4742
      %v4759 = vadd.f32 %v4568, %v4743
      %v4760 = vadd.f32 %v4573, %v4744
      %v4761 = vadd.f32 %v4578, %v4745
      %v4762 = vadd.f32 %v4583, %v4746
      %v4763 = vadd.f32 %v4588, %v4747
      %v4764 = vadd.f32 %v4593, %v4748
      %v4765 = vadd.f32 %v4598, %v4749
      %v4766 = vxor.u32 %v4750, 2147483648
      %v4767 = vxor.u32 %v4751, 2147483648
      %v4768 = vxor.u32 %v4752, 2147483648
      %v4769 = vxor.u32 %v4753, 2147483648
      %v4770 = vxor.u32 %v4754, 2147483648
      %v4771 = vxor.u32 %v4755, 2147483648
      %v4772 = vxor.u32 %v4756, 2147483648
      %v4773 = vxor.u32 %v4757, 2147483648
      %v4774 = vxor.u32 %v4758, 2147483648
      %v4775 = vxor.u32 %v4759, 2147483648
      %v4776 = vxor.u32 %v4760, 2147483648
      %v4777 = vxor.u32 %v4761, 2147483648
      %v4778 = vxor.u32 %v4762, 2147483648
      %v4779 = vxor.u32 %v4763, 2147483648
      %v4780 = vxor.u32 %v4764, 2147483648
      %v4781 = vxor.u32 %v4765, 2147483648
      %v4782 = vmul.f32 %v4766, 1.442695
      %v4783 = vpow.pop %v4782
      %v4784 = vmul.f32 %v4767, 1.442695
      %v4785 = vpow.pop %v4784
      %v4786 = vmul.f32 %v4768, 1.442695
      %v4787 = vpow.pop %v4786
      %v4788 = vmul.f32 %v4769, 1.442695
      %v4789 = vpow.pop %v4788
      %v4790 = vmul.f32 %v4770, 1.442695
      %v4791 = vpow.pop %v4790
      %v4792 = vmul.f32 %v4771, 1.442695
      %v4793 = vpow.pop %v4792
      %v4794 = vmul.f32 %v4772, 1.442695
      %v4795 = vpow.pop %v4794
      %v4796 = vmul.f32 %v4773, 1.442695
      %v4797 = vpow.pop %v4796
      %v4798 = vmul.f32 %v4774, 1.442695
      %v4799 = vpow.pop %v4798
      %v4800 = vmul.f32 %v4775, 1.442695
      %v4801 = vpow.pop %v4800
      %v4802 = vmul.f32 %v4776, 1.442695
      %v4803 = vpow.pop %v4802
      %v4804 = vmul.f32 %v4777, 1.442695
      %v4805 = vpow.pop %v4804
      %v4806 = vmul.f32 %v4778, 1.442695
      %v4807 = vpow.pop %v4806
      %v4808 = vmul.f32 %v4779, 1.442695
      %v4809 = vpow.pop %v4808
      %v4810 = vmul.f32 %v4780, 1.442695
      %v4811 = vpow.pop %v4810
      %v4812 = vmul.f32 %v4781, 1.442695
      %v4813 = vpow.pop %v4812
      %v4814 = vadd.f32 %v4783, 1.0
      %v4815 = vadd.f32 %v4785, 1.0
      %v4816 = vadd.f32 %v4787, 1.0
      %v4817 = vadd.f32 %v4789, 1.0
      %v4818 = vadd.f32 %v4791, 1.0
      %v4819 = vadd.f32 %v4793, 1.0
      %v4820 = vadd.f32 %v4795, 1.0
      %v4821 = vadd.f32 %v4797, 1.0
      %v4822 = vadd.f32 %v4799, 1.0
      %v4823 = vadd.f32 %v4801, 1.0
      %v4824 = vadd.f32 %v4803, 1.0
      %v4825 = vadd.f32 %v4805, 1.0
      %v4826 = vadd.f32 %v4807, 1.0
      %v4827 = vadd.f32 %v4809, 1.0
      %v4828 = vadd.f32 %v4811, 1.0
      %v4829 = vadd.f32 %v4813, 1.0
      %v4830 = vrcp.pop %v4814
      %v4831 = vmul.f32 1.0, %v4830
      %v4832 = vrcp.pop %v4815
      %v4833 = vmul.f32 1.0, %v4832
      %v4834 = vrcp.pop %v4816
      %v4835 = vmul.f32 1.0, %v4834
      %v4836 = vrcp.pop %v4817
      %v4837 = vmul.f32 1.0, %v4836
      %v4838 = vrcp.pop %v4818
      %v4839 = vmul.f32 1.0, %v4838
      %v4840 = vrcp.pop %v4819
      %v4841 = vmul.f32 1.0, %v4840
      %v4842 = vrcp.pop %v4820
      %v4843 = vmul.f32 1.0, %v4842
      %v4844 = vrcp.pop %v4821
      %v4845 = vmul.f32 1.0, %v4844
      %v4846 = vrcp.pop %v4822
      %v4847 = vmul.f32 1.0, %v4846
      %v4848 = vrcp.pop %v4823
      %v4849 = vmul.f32 1.0, %v4848
      %v4850 = vrcp.pop %v4824
      %v4851 = vmul.f32 1.0, %v4850
      %v4852 = vrcp.pop %v4825
      %v4853 = vmul.f32 1.0, %v4852
      %v4854 = vrcp.pop %v4826
      %v4855 = vmul.f32 1.0, %v4854
      %v4856 = vrcp.pop %v4827
      %v4857 = vmul.f32 1.0, %v4856
      %v4858 = vrcp.pop %v4828
      %v4859 = vmul.f32 1.0, %v4858
      %v4860 = vrcp.pop %v4829
      %v4861 = vmul.f32 1.0, %v4860
      %v4862 = vtanh.pop %v4713
      %v4863 = vtanh.pop %v4714
      %v4864 = vtanh.pop %v4715
      %v4865 = vtanh.pop %v4716
      %v4866 = vtanh.pop %v4717
      %v4867 = vtanh.pop %v4718
      %v4868 = vtanh.pop %v4719
      %v4869 = vtanh.pop %v4720
      %v4870 = vtanh.pop %v4721
      %v4871 = vtanh.pop %v4722
      %v4872 = vtanh.pop %v4723
      %v4873 = vtanh.pop %v4724
      %v4874 = vtanh.pop %v4725
      %v4875 = vtanh.pop %v4726
      %v4876 = vtanh.pop %v4727
      %v4877 = vtanh.pop %v4728
      %v4878 = vmul.f32 %v4831, %v4862
      %v4879 = vmul.f32 %v4833, %v4863
      %v4880 = vmul.f32 %v4835, %v4864
      %v4881 = vmul.f32 %v4837, %v4865
      %v4882 = vmul.f32 %v4839, %v4866
      %v4883 = vmul.f32 %v4841, %v4867
      %v4884 = vmul.f32 %v4843, %v4868
      %v4885 = vmul.f32 %v4845, %v4869
      %v4886 = vmul.f32 %v4847, %v4870
      %v4887 = vmul.f32 %v4849, %v4871
      %v4888 = vmul.f32 %v4851, %v4872
      %v4889 = vmul.f32 %v4853, %v4873
      %v4890 = vmul.f32 %v4855, %v4874
      %v4891 = vmul.f32 %v4857, %v4875
      %v4892 = vmul.f32 %v4859, %v4876
      %v4893 = vmul.f32 %v4861, %v4877
      %s4894 = scalar_lea.vmem %s2, 64
      %v4895 = vld [vmem:[%s4894] sm:$0xff]
      %v4896 = vld [vmem:[%s3 + $0x8] sm:$0x1]
      %v4897 = vlaneseq
      %v4898 = vshrl.u32 %v4897, 7
      %v4899 = vsub.s32 0, %v4898
      %v4900 = vrot.slane %v4896, %v4899
      %v4902 = vsel %vm292, %v4878, 0
      %v4905 = vsel %vm292, %v4879, 0
      %v4908 = vsel %vm292, %v4880, 0
      %v4911 = vsel %vm292, %v4881, 0
      %v4914 = vsel %vm292, %v4882, 0
      %v4917 = vsel %vm292, %v4883, 0
      %v4920 = vsel %vm292, %v4884, 0
      %v4923 = vsel %vm292, %v4885, 0
      %v4926 = vsel %vm292, %v4886, 0
      %v4929 = vsel %vm292, %v4887, 0
      %v4932 = vsel %vm292, %v4888, 0
      %v4935 = vsel %vm292, %v4889, 0
      %v4938 = vsel %vm292, %v4890, 0
      %v4941 = vsel %vm292, %v4891, 0
      %v4944 = vsel %vm292, %v4892, 0
      %v4947 = vsel %vm292, %v4893, 0
      %4949 = vmatprep.subr.mxu0 0.0
      %4950 = vmatpush1.msra.mxu0 0.0
      %4951 = vmatprep.subr.mxu0 0.0
      %4952 = vmatpush1.msra.mxu0 0.0
      %4953 = vmatprep.subr.mxu0 0.0
      %4954 = vmatpush1.msra.mxu0 0.0
      %4955 = vmatprep.subr.mxu0 0.0
      %4956 = vmatpush1.msra.mxu0 0.0
      %4957 = vmatprep.subr.mxu0 0.0
      %4958 = vmatpush1.msra.mxu0 0.0
      %4959 = vmatprep.subr.mxu0 0.0
      %4960 = vmatpush1.msra.mxu0 0.0
      %4961 = vmatprep.subr.mxu0 0.0
      %4962 = vmatpush1.msra.mxu0 0.0
      %4963 = vmatprep.subr.mxu0 0.0
      %4964 = vmatpush1.msra.mxu0 0.0
      %4965 = vmatprep.subr.mxu0 0.0
      %4966 = vmatpush1.msra.mxu0 0.0
      %4967 = vmatprep.subr.mxu0 0.0
      %4968 = vmatpush1.msra.mxu0 0.0
      %4969 = vmatprep.subr.mxu0 0.0
      %4970 = vmatpush1.msra.mxu0 0.0
      %4971 = vmatprep.subr.mxu0 0.0
      %4972 = vmatpush1.msra.mxu0 0.0
      %4973 = vmatprep.subr.mxu0 0.0
      %4974 = vmatpush1.msra.mxu0 0.0
      %4975 = vmatprep.subr.mxu0 0.0
      %4976 = vmatpush1.msra.mxu0 0.0
      %4977 = vmatprep.subr.mxu0 0.0
      %4978 = vmatpush1.msra.mxu0 0.0
      %4979 = vmatprep.subr.mxu0 0.0
      %4980 = vmatpush1.msra.mxu0 %v4895
      %4981 = vmatprep.subr.mxu0 0.0
      %4982 = vmatpush2.msra.mxu0 0.0
      %4983 = vmatprep.subr.mxu0 0.0
      %4984 = vmatpush2.msra.mxu0 0.0
      %4985 = vmatprep.subr.mxu0 0.0
      %4986 = vmatpush2.msra.mxu0 0.0
      %4987 = vmatprep.subr.mxu0 0.0
      %4988 = vmatpush2.msra.mxu0 0.0
      %4989 = vmatprep.subr.mxu0 0.0
      %4990 = vmatpush2.msra.mxu0 0.0
      %4991 = vmatprep.subr.mxu0 0.0
      %4992 = vmatpush2.msra.mxu0 0.0
      %4993 = vmatprep.subr.mxu0 0.0
      %4994 = vmatpush2.msra.mxu0 0.0
      %4995 = vmatprep.subr.mxu0 0.0
      %4996 = vmatpush2.msra.mxu0 0.0
      %4997 = vmatprep.subr.mxu0 0.0
      %4998 = vmatpush2.msra.mxu0 0.0
      %4999 = vmatprep.subr.mxu0 0.0
      %5000 = vmatpush2.msra.mxu0 0.0
      %5001 = vmatprep.subr.mxu0 0.0
      %5002 = vmatpush2.msra.mxu0 0.0
      %5003 = vmatprep.subr.mxu0 0.0
      %5004 = vmatpush2.msra.mxu0 0.0
      %5005 = vmatprep.subr.mxu0 0.0
      %5006 = vmatpush2.msra.mxu0 0.0
      %5007 = vmatprep.subr.mxu0 0.0
      %5008 = vmatpush2.msra.mxu0 0.0
      %5009 = vmatprep.subr.mxu0 0.0
      %5010 = vmatpush2.msra.mxu0 0.0
      %5011 = vmatprep.subr.mxu0 0.0
      %5012 = vmatpush2.msra.mxu0 0.0
      %5013 = vmatprep.mubr.f32.mxu0 0.0
      %5014 = vmatmul.mubr.f32.gmra.mxu0 %v4902
      %v5015 = vpop.f32.mrf.mxu0
      %v5016 = vadd.f32 %v4900, %v5015
      %v5017 = vpop.f32.mrf.mxu0
      %5018 = vmatprep.mubr.f32.mxu0 0.0
      %5019 = vmatmul.mubr.f32.gmra.mxu0 %v4905
      %v5020 = vpop.f32.mrf.mxu0
      %v5021 = vadd.f32 %v4900, %v5020
      %v5022 = vpop.f32.mrf.mxu0
      %5023 = vmatprep.mubr.f32.mxu0 0.0
      %5024 = vmatmul.mubr.f32.gmra.mxu0 %v4908
      %v5025 = vpop.f32.mrf.mxu0
      %v5026 = vadd.f32 %v4900, %v5025
      %v5027 = vpop.f32.mrf.mxu0
      %5028 = vmatprep.mubr.f32.mxu0 0.0
      %5029 = vmatmul.mubr.f32.gmra.mxu0 %v4911
      %v5030 = vpop.f32.mrf.mxu0
      %v5031 = vadd.f32 %v4900, %v5030
      %v5032 = vpop.f32.mrf.mxu0
      %5033 = vmatprep.mubr.f32.mxu0 0.0
      %5034 = vmatmul.mubr.f32.gmra.mxu0 %v4914
      %v5035 = vpop.f32.mrf.mxu0
      %v5036 = vadd.f32 %v4900, %v5035
      %v5037 = vpop.f32.mrf.mxu0
      %5038 = vmatprep.mubr.f32.mxu0 0.0
      %5039 = vmatmul.mubr.f32.gmra.mxu0 %v4917
      %v5040 = vpop.f32.mrf.mxu0
      %v5041 = vadd.f32 %v4900, %v5040
      %v5042 = vpop.f32.mrf.mxu0
      %5043 = vmatprep.mubr.f32.mxu0 0.0
      %5044 = vmatmul.mubr.f32.gmra.mxu0 %v4920
      %v5045 = vpop.f32.mrf.mxu0
      %v5046 = vadd.f32 %v4900, %v5045
      %v5047 = vpop.f32.mrf.mxu0
      %5048 = vmatprep.mubr.f32.mxu0 0.0
      %5049 = vmatmul.mubr.f32.gmra.mxu0 %v4923
      %v5050 = vpop.f32.mrf.mxu0
      %v5051 = vadd.f32 %v4900, %v5050
      %v5052 = vpop.f32.mrf.mxu0
      %5053 = vmatprep.mubr.f32.mxu0 0.0
      %5054 = vmatmul.mubr.f32.gmra.mxu0 %v4926
      %v5055 = vpop.f32.mrf.mxu0
      %v5056 = vadd.f32 %v4900, %v5055
      %v5057 = vpop.f32.mrf.mxu0
      %5058 = vmatprep.mubr.f32.mxu0 0.0
      %5059 = vmatmul.mubr.f32.gmra.mxu0 %v4929
      %v5060 = vpop.f32.mrf.mxu0
      %v5061 = vadd.f32 %v4900, %v5060
      %v5062 = vpop.f32.mrf.mxu0
      %5063 = vmatprep.mubr.f32.mxu0 0.0
      %5064 = vmatmul.mubr.f32.gmra.mxu0 %v4932
      %v5065 = vpop.f32.mrf.mxu0
      %v5066 = vadd.f32 %v4900, %v5065
      %v5067 = vpop.f32.mrf.mxu0
      %5068 = vmatprep.mubr.f32.mxu0 0.0
      %5069 = vmatmul.mubr.f32.gmra.mxu0 %v4935
      %v5070 = vpop.f32.mrf.mxu0
      %v5071 = vadd.f32 %v4900, %v5070
      %v5072 = vpop.f32.mrf.mxu0
      %5073 = vmatprep.mubr.f32.mxu0 0.0
      %5074 = vmatmul.mubr.f32.gmra.mxu0 %v4938
      %v5075 = vpop.f32.mrf.mxu0
      %v5076 = vadd.f32 %v4900, %v5075
      %v5077 = vpop.f32.mrf.mxu0
      %5078 = vmatprep.mubr.f32.mxu0 0.0
      %5079 = vmatmul.mubr.f32.gmra.mxu0 %v4941
      %v5080 = vpop.f32.mrf.mxu0
      %v5081 = vadd.f32 %v4900, %v5080
      %v5082 = vpop.f32.mrf.mxu0
      %5083 = vmatprep.mubr.f32.mxu0 0.0
      %5084 = vmatmul.mubr.f32.gmra.mxu0 %v4944
      %v5085 = vpop.f32.mrf.mxu0
      %v5086 = vadd.f32 %v4900, %v5085
      %v5087 = vpop.f32.mrf.mxu0
      %5088 = vmatprep.mubr.f32.mxu0 0.0
      %5089 = vmatmul.mubr.f32.gmra.mxu0 %v4947
      %v5090 = vpop.f32.mrf.mxu0
      %v5091 = vadd.f32 %v4900, %v5090
      %v5092 = vpop.f32.mrf.mxu0
      %5093 = vdwg.mxu0
      %s5094 = scalar_lea.vmem %s2, 72
      %v5095 = vld [vmem:[%s5094] sm:$0xff]
      %v5096 = vld [vmem:[%s3 + $0x9] sm:$0x1]
      %v5097 = vlaneseq
      %v5098 = vshrl.u32 %v5097, 7
      %v5099 = vsub.s32 0, %v5098
      %v5100 = vrot.slane %v5096, %v5099
      %5101 = vmatprep.subr.mxu0 0.0
      %5102 = vmatpush1.msra.mxu0 0.0
      %5103 = vmatprep.subr.mxu0 0.0
      %5104 = vmatpush1.msra.mxu0 0.0
      %5105 = vmatprep.subr.mxu0 0.0
      %5106 = vmatpush1.msra.mxu0 0.0
      %5107 = vmatprep.subr.mxu0 0.0
      %5108 = vmatpush1.msra.mxu0 0.0
      %5109 = vmatprep.subr.mxu0 0.0
      %5110 = vmatpush1.msra.mxu0 0.0
      %5111 = vmatprep.subr.mxu0 0.0
      %5112 = vmatpush1.msra.mxu0 0.0
      %5113 = vmatprep.subr.mxu0 0.0
      %5114 = vmatpush1.msra.mxu0 0.0
      %5115 = vmatprep.subr.mxu0 0.0
      %5116 = vmatpush1.msra.mxu0 0.0
      %5117 = vmatprep.subr.mxu0 0.0
      %5118 = vmatpush1.msra.mxu0 0.0
      %5119 = vmatprep.subr.mxu0 0.0
      %5120 = vmatpush1.msra.mxu0 0.0
      %5121 = vmatprep.subr.mxu0 0.0
      %5122 = vmatpush1.msra.mxu0 0.0
      %5123 = vmatprep.subr.mxu0 0.0
      %5124 = vmatpush1.msra.mxu0 0.0
      %5125 = vmatprep.subr.mxu0 0.0
      %5126 = vmatpush1.msra.mxu0 0.0
      %5127 = vmatprep.subr.mxu0 0.0
      %5128 = vmatpush1.msra.mxu0 0.0
      %5129 = vmatprep.subr.mxu0 0.0
      %5130 = vmatpush1.msra.mxu0 0.0
      %5131 = vmatprep.subr.mxu0 0.0
      %5132 = vmatpush1.msra.mxu0 %v5095
      %5133 = vmatprep.subr.mxu0 0.0
      %5134 = vmatpush2.msra.mxu0 0.0
      %5135 = vmatprep.subr.mxu0 0.0
      %5136 = vmatpush2.msra.mxu0 0.0
      %5137 = vmatprep.subr.mxu0 0.0
      %5138 = vmatpush2.msra.mxu0 0.0
      %5139 = vmatprep.subr.mxu0 0.0
      %5140 = vmatpush2.msra.mxu0 0.0
      %5141 = vmatprep.subr.mxu0 0.0
      %5142 = vmatpush2.msra.mxu0 0.0
      %5143 = vmatprep.subr.mxu0 0.0
      %5144 = vmatpush2.msra.mxu0 0.0
      %5145 = vmatprep.subr.mxu0 0.0
      %5146 = vmatpush2.msra.mxu0 0.0
      %5147 = vmatprep.subr.mxu0 0.0
      %5148 = vmatpush2.msra.mxu0 0.0
      %5149 = vmatprep.subr.mxu0 0.0
      %5150 = vmatpush2.msra.mxu0 0.0
      %5151 = vmatprep.subr.mxu0 0.0
      %5152 = vmatpush2.msra.mxu0 0.0
      %5153 = vmatprep.subr.mxu0 0.0
      %5154 = vmatpush2.msra.mxu0 0.0
      %5155 = vmatprep.subr.mxu0 0.0
      %5156 = vmatpush2.msra.mxu0 0.0
      %5157 = vmatprep.subr.mxu0 0.0
      %5158 = vmatpush2.msra.mxu0 0.0
      %5159 = vmatprep.subr.mxu0 0.0
      %5160 = vmatpush2.msra.mxu0 0.0
      %5161 = vmatprep.subr.mxu0 0.0
      %5162 = vmatpush2.msra.mxu0 0.0
      %5163 = vmatprep.subr.mxu0 0.0
      %5164 = vmatpush2.msra.mxu0 0.0
      %5165 = vmatprep.mubr.f32.mxu0 0.0
      %5166 = vmatmul.mubr.f32.gmra.mxu0 %v4902
      %v5167 = vpop.f32.mrf.mxu0
      %v5168 = vadd.f32 %v5100, %v5167
      %v5169 = vpop.f32.mrf.mxu0
      %5170 = vmatprep.mubr.f32.mxu0 0.0
      %5171 = vmatmul.mubr.f32.gmra.mxu0 %v4905
      %v5172 = vpop.f32.mrf.mxu0
      %v5173 = vadd.f32 %v5100, %v5172
      %v5174 = vpop.f32.mrf.mxu0
      %5175 = vmatprep.mubr.f32.mxu0 0.0
      %5176 = vmatmul.mubr.f32.gmra.mxu0 %v4908
      %v5177 = vpop.f32.mrf.mxu0
      %v5178 = vadd.f32 %v5100, %v5177
      %v5179 = vpop.f32.mrf.mxu0
      %5180 = vmatprep.mubr.f32.mxu0 0.0
      %5181 = vmatmul.mubr.f32.gmra.mxu0 %v4911
      %v5182 = vpop.f32.mrf.mxu0
      %v5183 = vadd.f32 %v5100, %v5182
      %v5184 = vpop.f32.mrf.mxu0
      %5185 = vmatprep.mubr.f32.mxu0 0.0
      %5186 = vmatmul.mubr.f32.gmra.mxu0 %v4914
      %v5187 = vpop.f32.mrf.mxu0
      %v5188 = vadd.f32 %v5100, %v5187
      %v5189 = vpop.f32.mrf.mxu0
      %5190 = vmatprep.mubr.f32.mxu0 0.0
      %5191 = vmatmul.mubr.f32.gmra.mxu0 %v4917
      %v5192 = vpop.f32.mrf.mxu0
      %v5193 = vadd.f32 %v5100, %v5192
      %v5194 = vpop.f32.mrf.mxu0
      %5195 = vmatprep.mubr.f32.mxu0 0.0
      %5196 = vmatmul.mubr.f32.gmra.mxu0 %v4920
      %v5197 = vpop.f32.mrf.mxu0
      %v5198 = vadd.f32 %v5100, %v5197
      %v5199 = vpop.f32.mrf.mxu0
      %5200 = vmatprep.mubr.f32.mxu0 0.0
      %5201 = vmatmul.mubr.f32.gmra.mxu0 %v4923
      %v5202 = vpop.f32.mrf.mxu0
      %v5203 = vadd.f32 %v5100, %v5202
      %v5204 = vpop.f32.mrf.mxu0
      %5205 = vmatprep.mubr.f32.mxu0 0.0
      %5206 = vmatmul.mubr.f32.gmra.mxu0 %v4926
      %v5207 = vpop.f32.mrf.mxu0
      %v5208 = vadd.f32 %v5100, %v5207
      %v5209 = vpop.f32.mrf.mxu0
      %5210 = vmatprep.mubr.f32.mxu0 0.0
      %5211 = vmatmul.mubr.f32.gmra.mxu0 %v4929
      %v5212 = vpop.f32.mrf.mxu0
      %v5213 = vadd.f32 %v5100, %v5212
      %v5214 = vpop.f32.mrf.mxu0
      %5215 = vmatprep.mubr.f32.mxu0 0.0
      %5216 = vmatmul.mubr.f32.gmra.mxu0 %v4932
      %v5217 = vpop.f32.mrf.mxu0
      %v5218 = vadd.f32 %v5100, %v5217
      %v5219 = vpop.f32.mrf.mxu0
      %5220 = vmatprep.mubr.f32.mxu0 0.0
      %5221 = vmatmul.mubr.f32.gmra.mxu0 %v4935
      %v5222 = vpop.f32.mrf.mxu0
      %v5223 = vadd.f32 %v5100, %v5222
      %v5224 = vpop.f32.mrf.mxu0
      %5225 = vmatprep.mubr.f32.mxu0 0.0
      %5226 = vmatmul.mubr.f32.gmra.mxu0 %v4938
      %v5227 = vpop.f32.mrf.mxu0
      %v5228 = vadd.f32 %v5100, %v5227
      %v5229 = vpop.f32.mrf.mxu0
      %5230 = vmatprep.mubr.f32.mxu0 0.0
      %5231 = vmatmul.mubr.f32.gmra.mxu0 %v4941
      %v5232 = vpop.f32.mrf.mxu0
      %v5233 = vadd.f32 %v5100, %v5232
      %v5234 = vpop.f32.mrf.mxu0
      %5235 = vmatprep.mubr.f32.mxu0 0.0
      %5236 = vmatmul.mubr.f32.gmra.mxu0 %v4944
      %v5237 = vpop.f32.mrf.mxu0
      %v5238 = vadd.f32 %v5100, %v5237
      %v5239 = vpop.f32.mrf.mxu0
      %5240 = vmatprep.mubr.f32.mxu0 0.0
      %5241 = vmatmul.mubr.f32.gmra.mxu0 %v4947
      %v5242 = vpop.f32.mrf.mxu0
      %v5243 = vadd.f32 %v5100, %v5242
      %v5244 = vpop.f32.mrf.mxu0
      %5245 = vdwg.mxu0
      %s5246 = scalar_lea.vmem %s2, 80
      %v5247 = vld [vmem:[%s5246] sm:$0xff]
      %v5248 = vld [vmem:[%s3 + $0xa] sm:$0x1]
      %v5249 = vlaneseq
      %v5250 = vshrl.u32 %v5249, 7
      %v5251 = vsub.s32 0, %v5250
      %v5252 = vrot.slane %v5248, %v5251
      %5253 = vmatprep.subr.mxu0 0.0
      %5254 = vmatpush1.msra.mxu0 0.0
      %5255 = vmatprep.subr.mxu0 0.0
      %5256 = vmatpush1.msra.mxu0 0.0
      %5257 = vmatprep.subr.mxu0 0.0
      %5258 = vmatpush1.msra.mxu0 0.0
      %5259 = vmatprep.subr.mxu0 0.0
      %5260 = vmatpush1.msra.mxu0 0.0
      %5261 = vmatprep.subr.mxu0 0.0
      %5262 = vmatpush1.msra.mxu0 0.0
      %5263 = vmatprep.subr.mxu0 0.0
      %5264 = vmatpush1.msra.mxu0 0.0
      %5265 = vmatprep.subr.mxu0 0.0
      %5266 = vmatpush1.msra.mxu0 0.0
      %5267 = vmatprep.subr.mxu0 0.0
      %5268 = vmatpush1.msra.mxu0 0.0
      %5269 = vmatprep.subr.mxu0 0.0
      %5270 = vmatpush1.msra.mxu0 0.0
      %5271 = vmatprep.subr.mxu0 0.0
      %5272 = vmatpush1.msra.mxu0 0.0
      %5273 = vmatprep.subr.mxu0 0.0
      %5274 = vmatpush1.msra.mxu0 0.0
      %5275 = vmatprep.subr.mxu0 0.0
      %5276 = vmatpush1.msra.mxu0 0.0
      %5277 = vmatprep.subr.mxu0 0.0
      %5278 = vmatpush1.msra.mxu0 0.0
      %5279 = vmatprep.subr.mxu0 0.0
      %5280 = vmatpush1.msra.mxu0 0.0
      %5281 = vmatprep.subr.mxu0 0.0
      %5282 = vmatpush1.msra.mxu0 0.0
      %5283 = vmatprep.subr.mxu0 0.0
      %5284 = vmatpush1.msra.mxu0 %v5247
      %5285 = vmatprep.subr.mxu0 0.0
      %5286 = vmatpush2.msra.mxu0 0.0
      %5287 = vmatprep.subr.mxu0 0.0
      %5288 = vmatpush2.msra.mxu0 0.0
      %5289 = vmatprep.subr.mxu0 0.0
      %5290 = vmatpush2.msra.mxu0 0.0
      %5291 = vmatprep.subr.mxu0 0.0
      %5292 = vmatpush2.msra.mxu0 0.0
      %5293 = vmatprep.subr.mxu0 0.0
      %5294 = vmatpush2.msra.mxu0 0.0
      %5295 = vmatprep.subr.mxu0 0.0
      %5296 = vmatpush2.msra.mxu0 0.0
      %5297 = vmatprep.subr.mxu0 0.0
      %5298 = vmatpush2.msra.mxu0 0.0
      %5299 = vmatprep.subr.mxu0 0.0
      %5300 = vmatpush2.msra.mxu0 0.0
      %5301 = vmatprep.subr.mxu0 0.0
      %5302 = vmatpush2.msra.mxu0 0.0
      %5303 = vmatprep.subr.mxu0 0.0
      %5304 = vmatpush2.msra.mxu0 0.0
      %5305 = vmatprep.subr.mxu0 0.0
      %5306 = vmatpush2.msra.mxu0 0.0
      %5307 = vmatprep.subr.mxu0 0.0
      %5308 = vmatpush2.msra.mxu0 0.0
      %5309 = vmatprep.subr.mxu0 0.0
      %5310 = vmatpush2.msra.mxu0 0.0
      %5311 = vmatprep.subr.mxu0 0.0
      %5312 = vmatpush2.msra.mxu0 0.0
      %5313 = vmatprep.subr.mxu0 0.0
      %5314 = vmatpush2.msra.mxu0 0.0
      %5315 = vmatprep.subr.mxu0 0.0
      %5316 = vmatpush2.msra.mxu0 0.0
      %5317 = vmatprep.mubr.f32.mxu0 0.0
      %5318 = vmatmul.mubr.f32.gmra.mxu0 %v4902
      %v5319 = vpop.f32.mrf.mxu0
      %v5320 = vadd.f32 %v5252, %v5319
      %v5321 = vpop.f32.mrf.mxu0
      %5322 = vmatprep.mubr.f32.mxu0 0.0
      %5323 = vmatmul.mubr.f32.gmra.mxu0 %v4905
      %v5324 = vpop.f32.mrf.mxu0
      %v5325 = vadd.f32 %v5252, %v5324
      %v5326 = vpop.f32.mrf.mxu0
      %5327 = vmatprep.mubr.f32.mxu0 0.0
      %5328 = vmatmul.mubr.f32.gmra.mxu0 %v4908
      %v5329 = vpop.f32.mrf.mxu0
      %v5330 = vadd.f32 %v5252, %v5329
      %v5331 = vpop.f32.mrf.mxu0
      %5332 = vmatprep.mubr.f32.mxu0 0.0
      %5333 = vmatmul.mubr.f32.gmra.mxu0 %v4911
      %v5334 = vpop.f32.mrf.mxu0
      %v5335 = vadd.f32 %v5252, %v5334
      %v5336 = vpop.f32.mrf.mxu0
      %5337 = vmatprep.mubr.f32.mxu0 0.0
      %5338 = vmatmul.mubr.f32.gmra.mxu0 %v4914
      %v5339 = vpop.f32.mrf.mxu0
      %v5340 = vadd.f32 %v5252, %v5339
      %v5341 = vpop.f32.mrf.mxu0
      %5342 = vmatprep.mubr.f32.mxu0 0.0
      %5343 = vmatmul.mubr.f32.gmra.mxu0 %v4917
      %v5344 = vpop.f32.mrf.mxu0
      %v5345 = vadd.f32 %v5252, %v5344
      %v5346 = vpop.f32.mrf.mxu0
      %5347 = vmatprep.mubr.f32.mxu0 0.0
      %5348 = vmatmul.mubr.f32.gmra.mxu0 %v4920
      %v5349 = vpop.f32.mrf.mxu0
      %v5350 = vadd.f32 %v5252, %v5349
      %v5351 = vpop.f32.mrf.mxu0
      %5352 = vmatprep.mubr.f32.mxu0 0.0
      %5353 = vmatmul.mubr.f32.gmra.mxu0 %v4923
      %v5354 = vpop.f32.mrf.mxu0
      %v5355 = vadd.f32 %v5252, %v5354
      %v5356 = vpop.f32.mrf.mxu0
      %5357 = vmatprep.mubr.f32.mxu0 0.0
      %5358 = vmatmul.mubr.f32.gmra.mxu0 %v4926
      %v5359 = vpop.f32.mrf.mxu0
      %v5360 = vadd.f32 %v5252, %v5359
      %v5361 = vpop.f32.mrf.mxu0
      %5362 = vmatprep.mubr.f32.mxu0 0.0
      %5363 = vmatmul.mubr.f32.gmra.mxu0 %v4929
      %v5364 = vpop.f32.mrf.mxu0
      %v5365 = vadd.f32 %v5252, %v5364
      %v5366 = vpop.f32.mrf.mxu0
      %5367 = vmatprep.mubr.f32.mxu0 0.0
      %5368 = vmatmul.mubr.f32.gmra.mxu0 %v4932
      %v5369 = vpop.f32.mrf.mxu0
      %v5370 = vadd.f32 %v5252, %v5369
      %v5371 = vpop.f32.mrf.mxu0
      %5372 = vmatprep.mubr.f32.mxu0 0.0
      %5373 = vmatmul.mubr.f32.gmra.mxu0 %v4935
      %v5374 = vpop.f32.mrf.mxu0
      %v5375 = vadd.f32 %v5252, %v5374
      %v5376 = vpop.f32.mrf.mxu0
      %5377 = vmatprep.mubr.f32.mxu0 0.0
      %5378 = vmatmul.mubr.f32.gmra.mxu0 %v4938
      %v5379 = vpop.f32.mrf.mxu0
      %v5380 = vadd.f32 %v5252, %v5379
      %v5381 = vpop.f32.mrf.mxu0
      %5382 = vmatprep.mubr.f32.mxu0 0.0
      %5383 = vmatmul.mubr.f32.gmra.mxu0 %v4941
      %v5384 = vpop.f32.mrf.mxu0
      %v5385 = vadd.f32 %v5252, %v5384
      %v5386 = vpop.f32.mrf.mxu0
      %5387 = vmatprep.mubr.f32.mxu0 0.0
      %5388 = vmatmul.mubr.f32.gmra.mxu0 %v4944
      %v5389 = vpop.f32.mrf.mxu0
      %v5390 = vadd.f32 %v5252, %v5389
      %v5391 = vpop.f32.mrf.mxu0
      %5392 = vmatprep.mubr.f32.mxu0 0.0
      %5393 = vmatmul.mubr.f32.gmra.mxu0 %v4947
      %v5394 = vpop.f32.mrf.mxu0
      %v5395 = vadd.f32 %v5252, %v5394
      %v5396 = vpop.f32.mrf.mxu0
      %5397 = vdwg.mxu0
      %v5398 = vxor.u32 %v5016, 2147483648
      %v5399 = vxor.u32 %v5021, 2147483648
      %v5400 = vxor.u32 %v5026, 2147483648
      %v5401 = vxor.u32 %v5031, 2147483648
      %v5402 = vxor.u32 %v5036, 2147483648
      %v5403 = vxor.u32 %v5041, 2147483648
      %v5404 = vxor.u32 %v5046, 2147483648
      %v5405 = vxor.u32 %v5051, 2147483648
      %v5406 = vxor.u32 %v5056, 2147483648
      %v5407 = vxor.u32 %v5061, 2147483648
      %v5408 = vxor.u32 %v5066, 2147483648
      %v5409 = vxor.u32 %v5071, 2147483648
      %v5410 = vxor.u32 %v5076, 2147483648
      %v5411 = vxor.u32 %v5081, 2147483648
      %v5412 = vxor.u32 %v5086, 2147483648
      %v5413 = vxor.u32 %v5091, 2147483648
      %v5414 = vmul.f32 %v5398, 1.442695
      %v5415 = vpow.pop %v5414
      %v5416 = vmul.f32 %v5399, 1.442695
      %v5417 = vpow.pop %v5416
      %v5418 = vmul.f32 %v5400, 1.442695
      %v5419 = vpow.pop %v5418
      %v5420 = vmul.f32 %v5401, 1.442695
      %v5421 = vpow.pop %v5420
      %v5422 = vmul.f32 %v5402, 1.442695
      %v5423 = vpow.pop %v5422
      %v5424 = vmul.f32 %v5403, 1.442695
      %v5425 = vpow.pop %v5424
      %v5426 = vmul.f32 %v5404, 1.442695
      %v5427 = vpow.pop %v5426
      %v5428 = vmul.f32 %v5405, 1.442695
      %v5429 = vpow.pop %v5428
      %v5430 = vmul.f32 %v5406, 1.442695
      %v5431 = vpow.pop %v5430
      %v5432 = vmul.f32 %v5407, 1.442695
      %v5433 = vpow.pop %v5432
      %v5434 = vmul.f32 %v5408, 1.442695
      %v5435 = vpow.pop %v5434
      %v5436 = vmul.f32 %v5409, 1.442695
      %v5437 = vpow.pop %v5436
      %v5438 = vmul.f32 %v5410, 1.442695
      %v5439 = vpow.pop %v5438
      %v5440 = vmul.f32 %v5411, 1.442695
      %v5441 = vpow.pop %v5440
      %v5442 = vmul.f32 %v5412, 1.442695
      %v5443 = vpow.pop %v5442
      %v5444 = vmul.f32 %v5413, 1.442695
      %v5445 = vpow.pop %v5444
      %v5446 = vadd.f32 %v5415, 1.0
      %v5447 = vadd.f32 %v5417, 1.0
      %v5448 = vadd.f32 %v5419, 1.0
      %v5449 = vadd.f32 %v5421, 1.0
      %v5450 = vadd.f32 %v5423, 1.0
      %v5451 = vadd.f32 %v5425, 1.0
      %v5452 = vadd.f32 %v5427, 1.0
      %v5453 = vadd.f32 %v5429, 1.0
      %v5454 = vadd.f32 %v5431, 1.0
      %v5455 = vadd.f32 %v5433, 1.0
      %v5456 = vadd.f32 %v5435, 1.0
      %v5457 = vadd.f32 %v5437, 1.0
      %v5458 = vadd.f32 %v5439, 1.0
      %v5459 = vadd.f32 %v5441, 1.0
      %v5460 = vadd.f32 %v5443, 1.0
      %v5461 = vadd.f32 %v5445, 1.0
      %v5462 = vrcp.pop %v5446
      %v5463 = vmul.f32 1.0, %v5462
      %v5464 = vrcp.pop %v5447
      %v5465 = vmul.f32 1.0, %v5464
      %v5466 = vrcp.pop %v5448
      %v5467 = vmul.f32 1.0, %v5466
      %v5468 = vrcp.pop %v5449
      %v5469 = vmul.f32 1.0, %v5468
      %v5470 = vrcp.pop %v5450
      %v5471 = vmul.f32 1.0, %v5470
      %v5472 = vrcp.pop %v5451
      %v5473 = vmul.f32 1.0, %v5472
      %v5474 = vrcp.pop %v5452
      %v5475 = vmul.f32 1.0, %v5474
      %v5476 = vrcp.pop %v5453
      %v5477 = vmul.f32 1.0, %v5476
      %v5478 = vrcp.pop %v5454
      %v5479 = vmul.f32 1.0, %v5478
      %v5480 = vrcp.pop %v5455
      %v5481 = vmul.f32 1.0, %v5480
      %v5482 = vrcp.pop %v5456
      %v5483 = vmul.f32 1.0, %v5482
      %v5484 = vrcp.pop %v5457
      %v5485 = vmul.f32 1.0, %v5484
      %v5486 = vrcp.pop %v5458
      %v5487 = vmul.f32 1.0, %v5486
      %v5488 = vrcp.pop %v5459
      %v5489 = vmul.f32 1.0, %v5488
      %v5490 = vrcp.pop %v5460
      %v5491 = vmul.f32 1.0, %v5490
      %v5492 = vrcp.pop %v5461
      %v5493 = vmul.f32 1.0, %v5492
      %v5494 = vtanh.pop %v5168
      %v5495 = vtanh.pop %v5173
      %v5496 = vtanh.pop %v5178
      %v5497 = vtanh.pop %v5183
      %v5498 = vtanh.pop %v5188
      %v5499 = vtanh.pop %v5193
      %v5500 = vtanh.pop %v5198
      %v5501 = vtanh.pop %v5203
      %v5502 = vtanh.pop %v5208
      %v5503 = vtanh.pop %v5213
      %v5504 = vtanh.pop %v5218
      %v5505 = vtanh.pop %v5223
      %v5506 = vtanh.pop %v5228
      %v5507 = vtanh.pop %v5233
      %v5508 = vtanh.pop %v5238
      %v5509 = vtanh.pop %v5243
      %v5510 = vmul.f32 %v5463, %v5494
      %v5511 = vmul.f32 %v5465, %v5495
      %v5512 = vmul.f32 %v5467, %v5496
      %v5513 = vmul.f32 %v5469, %v5497
      %v5514 = vmul.f32 %v5471, %v5498
      %v5515 = vmul.f32 %v5473, %v5499
      %v5516 = vmul.f32 %v5475, %v5500
      %v5517 = vmul.f32 %v5477, %v5501
      %v5518 = vmul.f32 %v5479, %v5502
      %v5519 = vmul.f32 %v5481, %v5503
      %v5520 = vmul.f32 %v5483, %v5504
      %v5521 = vmul.f32 %v5485, %v5505
      %v5522 = vmul.f32 %v5487, %v5506
      %v5523 = vmul.f32 %v5489, %v5507
      %v5524 = vmul.f32 %v5491, %v5508
      %v5525 = vmul.f32 %v5493, %v5509
      %v5526 = vld [vmem:[%s3 + $0xd] sm:$0x1]
      %v5527 = vlaneseq
      %v5528 = vshrl.u32 %v5527, 7
      %v5529 = vsub.s32 0, %v5528
      %v5530 = vrot.slane %v5526, %v5529
      %v5531 = vmul.f32 %v5530, %v5510
      %v5532 = vmul.f32 %v5530, %v5511
      %v5533 = vmul.f32 %v5530, %v5512
      %v5534 = vmul.f32 %v5530, %v5513
      %v5535 = vmul.f32 %v5530, %v5514
      %v5536 = vmul.f32 %v5530, %v5515
      %v5537 = vmul.f32 %v5530, %v5516
      %v5538 = vmul.f32 %v5530, %v5517
      %v5539 = vmul.f32 %v5530, %v5518
      %v5540 = vmul.f32 %v5530, %v5519
      %v5541 = vmul.f32 %v5530, %v5520
      %v5542 = vmul.f32 %v5530, %v5521
      %v5543 = vmul.f32 %v5530, %v5522
      %v5544 = vmul.f32 %v5530, %v5523
      %v5545 = vmul.f32 %v5530, %v5524
      %v5546 = vmul.f32 %v5530, %v5525
      %v5547 = vadd.f32 %v5320, %v5531
      %v5548 = vadd.f32 %v5325, %v5532
      %v5549 = vadd.f32 %v5330, %v5533
      %v5550 = vadd.f32 %v5335, %v5534
      %v5551 = vadd.f32 %v5340, %v5535
      %v5552 = vadd.f32 %v5345, %v5536
      %v5553 = vadd.f32 %v5350, %v5537
      %v5554 = vadd.f32 %v5355, %v5538
      %v5555 = vadd.f32 %v5360, %v5539
      %v5556 = vadd.f32 %v5365, %v5540
      %v5557 = vadd.f32 %v5370, %v5541
      %v5558 = vadd.f32 %v5375, %v5542
      %v5559 = vadd.f32 %v5380, %v5543
      %v5560 = vadd.f32 %v5385, %v5544
      %v5561 = vadd.f32 %v5390, %v5545
      %v5562 = vadd.f32 %v5395, %v5546
      %v5563 = vxor.u32 %v5547, 2147483648
      %v5564 = vxor.u32 %v5548, 2147483648
      %v5565 = vxor.u32 %v5549, 2147483648
      %v5566 = vxor.u32 %v5550, 2147483648
      %v5567 = vxor.u32 %v5551, 2147483648
      %v5568 = vxor.u32 %v5552, 2147483648
      %v5569 = vxor.u32 %v5553, 2147483648
      %v5570 = vxor.u32 %v5554, 2147483648
      %v5571 = vxor.u32 %v5555, 2147483648
      %v5572 = vxor.u32 %v5556, 2147483648
      %v5573 = vxor.u32 %v5557, 2147483648
      %v5574 = vxor.u32 %v5558, 2147483648
      %v5575 = vxor.u32 %v5559, 2147483648
      %v5576 = vxor.u32 %v5560, 2147483648
      %v5577 = vxor.u32 %v5561, 2147483648
      %v5578 = vxor.u32 %v5562, 2147483648
      %v5579 = vmul.f32 %v5563, 1.442695
      %v5580 = vpow.pop %v5579
      %v5581 = vmul.f32 %v5564, 1.442695
      %v5582 = vpow.pop %v5581
      %v5583 = vmul.f32 %v5565, 1.442695
      %v5584 = vpow.pop %v5583
      %v5585 = vmul.f32 %v5566, 1.442695
      %v5586 = vpow.pop %v5585
      %v5587 = vmul.f32 %v5567, 1.442695
      %v5588 = vpow.pop %v5587
      %v5589 = vmul.f32 %v5568, 1.442695
      %v5590 = vpow.pop %v5589
      %v5591 = vmul.f32 %v5569, 1.442695
      %v5592 = vpow.pop %v5591
      %v5593 = vmul.f32 %v5570, 1.442695
      %v5594 = vpow.pop %v5593
      %v5595 = vmul.f32 %v5571, 1.442695
      %v5596 = vpow.pop %v5595
      %v5597 = vmul.f32 %v5572, 1.442695
      %v5598 = vpow.pop %v5597
      %v5599 = vmul.f32 %v5573, 1.442695
      %v5600 = vpow.pop %v5599
      %v5601 = vmul.f32 %v5574, 1.442695
      %v5602 = vpow.pop %v5601
      %v5603 = vmul.f32 %v5575, 1.442695
      %v5604 = vpow.pop %v5603
      %v5605 = vmul.f32 %v5576, 1.442695
      %v5606 = vpow.pop %v5605
      %v5607 = vmul.f32 %v5577, 1.442695
      %v5608 = vpow.pop %v5607
      %v5609 = vmul.f32 %v5578, 1.442695
      %v5610 = vpow.pop %v5609
      %v5611 = vadd.f32 %v5580, 1.0
      %v5612 = vadd.f32 %v5582, 1.0
      %v5613 = vadd.f32 %v5584, 1.0
      %v5614 = vadd.f32 %v5586, 1.0
      %v5615 = vadd.f32 %v5588, 1.0
      %v5616 = vadd.f32 %v5590, 1.0
      %v5617 = vadd.f32 %v5592, 1.0
      %v5618 = vadd.f32 %v5594, 1.0
      %v5619 = vadd.f32 %v5596, 1.0
      %v5620 = vadd.f32 %v5598, 1.0
      %v5621 = vadd.f32 %v5600, 1.0
      %v5622 = vadd.f32 %v5602, 1.0
      %v5623 = vadd.f32 %v5604, 1.0
      %v5624 = vadd.f32 %v5606, 1.0
      %v5625 = vadd.f32 %v5608, 1.0
      %v5626 = vadd.f32 %v5610, 1.0
      %v5627 = vrcp.pop %v5611
      %v5628 = vmul.f32 1.0, %v5627
      %v5629 = vrcp.pop %v5612
      %v5630 = vmul.f32 1.0, %v5629
      %v5631 = vrcp.pop %v5613
      %v5632 = vmul.f32 1.0, %v5631
      %v5633 = vrcp.pop %v5614
      %v5634 = vmul.f32 1.0, %v5633
      %v5635 = vrcp.pop %v5615
      %v5636 = vmul.f32 1.0, %v5635
      %v5637 = vrcp.pop %v5616
      %v5638 = vmul.f32 1.0, %v5637
      %v5639 = vrcp.pop %v5617
      %v5640 = vmul.f32 1.0, %v5639
      %v5641 = vrcp.pop %v5618
      %v5642 = vmul.f32 1.0, %v5641
      %v5643 = vrcp.pop %v5619
      %v5644 = vmul.f32 1.0, %v5643
      %v5645 = vrcp.pop %v5620
      %v5646 = vmul.f32 1.0, %v5645
      %v5647 = vrcp.pop %v5621
      %v5648 = vmul.f32 1.0, %v5647
      %v5649 = vrcp.pop %v5622
      %v5650 = vmul.f32 1.0, %v5649
      %v5651 = vrcp.pop %v5623
      %v5652 = vmul.f32 1.0, %v5651
      %v5653 = vrcp.pop %v5624
      %v5654 = vmul.f32 1.0, %v5653
      %v5655 = vrcp.pop %v5625
      %v5656 = vmul.f32 1.0, %v5655
      %v5657 = vrcp.pop %v5626
      %v5658 = vmul.f32 1.0, %v5657
      %v5659 = vtanh.pop %v5510
      %v5660 = vtanh.pop %v5511
      %v5661 = vtanh.pop %v5512
      %v5662 = vtanh.pop %v5513
      %v5663 = vtanh.pop %v5514
      %v5664 = vtanh.pop %v5515
      %v5665 = vtanh.pop %v5516
      %v5666 = vtanh.pop %v5517
      %v5667 = vtanh.pop %v5518
      %v5668 = vtanh.pop %v5519
      %v5669 = vtanh.pop %v5520
      %v5670 = vtanh.pop %v5521
      %v5671 = vtanh.pop %v5522
      %v5672 = vtanh.pop %v5523
      %v5673 = vtanh.pop %v5524
      %v5674 = vtanh.pop %v5525
      %v5675 = vmul.f32 %v5628, %v5659
      %v5676 = vmul.f32 %v5630, %v5660
      %v5677 = vmul.f32 %v5632, %v5661
      %v5678 = vmul.f32 %v5634, %v5662
      %v5679 = vmul.f32 %v5636, %v5663
      %v5680 = vmul.f32 %v5638, %v5664
      %v5681 = vmul.f32 %v5640, %v5665
      %v5682 = vmul.f32 %v5642, %v5666
      %v5683 = vmul.f32 %v5644, %v5667
      %v5684 = vmul.f32 %v5646, %v5668
      %v5685 = vmul.f32 %v5648, %v5669
      %v5686 = vmul.f32 %v5650, %v5670
      %v5687 = vmul.f32 %v5652, %v5671
      %v5688 = vmul.f32 %v5654, %v5672
      %v5689 = vmul.f32 %v5656, %v5673
      %v5690 = vmul.f32 %v5658, %v5674
      %v5691 = vmax.f32 %v5675, 0.0
      %v5692 = vmax.f32 %v5676, 0.0
      %v5693 = vmax.f32 %v5677, 0.0
      %v5694 = vmax.f32 %v5678, 0.0
      %v5695 = vmax.f32 %v5679, 0.0
      %v5696 = vmax.f32 %v5680, 0.0
      %v5697 = vmax.f32 %v5681, 0.0
      %v5698 = vmax.f32 %v5682, 0.0
      %v5699 = vmax.f32 %v5683, 0.0
      %v5700 = vmax.f32 %v5684, 0.0
      %v5701 = vmax.f32 %v5685, 0.0
      %v5702 = vmax.f32 %v5686, 0.0
      %v5703 = vmax.f32 %v5687, 0.0
      %v5704 = vmax.f32 %v5688, 0.0
      %v5705 = vmax.f32 %v5689, 0.0
      %v5706 = vmax.f32 %v5690, 0.0
      %s5707 = scalar_lea.vmem %s2, 88
      %v5708 = vld [vmem:[%s5707] sm:$0xff]
      %v5709 = vld [vmem:[%s3 + $0xe] sm:$0x1]
      %v5710 = vlaneseq
      %v5711 = vshrl.u32 %v5710, 7
      %v5712 = vsub.s32 0, %v5711
      %v5713 = vrot.slane %v5709, %v5712
      %v5715 = vsel %vm292, %v5691, 0
      %v5718 = vsel %vm292, %v5692, 0
      %v5721 = vsel %vm292, %v5693, 0
      %v5724 = vsel %vm292, %v5694, 0
      %v5727 = vsel %vm292, %v5695, 0
      %v5730 = vsel %vm292, %v5696, 0
      %v5733 = vsel %vm292, %v5697, 0
      %v5736 = vsel %vm292, %v5698, 0
      %v5739 = vsel %vm292, %v5699, 0
      %v5742 = vsel %vm292, %v5700, 0
      %v5745 = vsel %vm292, %v5701, 0
      %v5748 = vsel %vm292, %v5702, 0
      %v5751 = vsel %vm292, %v5703, 0
      %v5754 = vsel %vm292, %v5704, 0
      %v5757 = vsel %vm292, %v5705, 0
      %v5760 = vsel %vm292, %v5706, 0
      %5762 = vmatprep.subr.mxu0 0.0
      %5763 = vmatpush1.msra.mxu0 0.0
      %5764 = vmatprep.subr.mxu0 0.0
      %5765 = vmatpush1.msra.mxu0 0.0
      %5766 = vmatprep.subr.mxu0 0.0
      %5767 = vmatpush1.msra.mxu0 0.0
      %5768 = vmatprep.subr.mxu0 0.0
      %5769 = vmatpush1.msra.mxu0 0.0
      %5770 = vmatprep.subr.mxu0 0.0
      %5771 = vmatpush1.msra.mxu0 0.0
      %5772 = vmatprep.subr.mxu0 0.0
      %5773 = vmatpush1.msra.mxu0 0.0
      %5774 = vmatprep.subr.mxu0 0.0
      %5775 = vmatpush1.msra.mxu0 0.0
      %5776 = vmatprep.subr.mxu0 0.0
      %5777 = vmatpush1.msra.mxu0 0.0
      %5778 = vmatprep.subr.mxu0 0.0
      %5779 = vmatpush1.msra.mxu0 0.0
      %5780 = vmatprep.subr.mxu0 0.0
      %5781 = vmatpush1.msra.mxu0 0.0
      %5782 = vmatprep.subr.mxu0 0.0
      %5783 = vmatpush1.msra.mxu0 0.0
      %5784 = vmatprep.subr.mxu0 0.0
      %5785 = vmatpush1.msra.mxu0 0.0
      %5786 = vmatprep.subr.mxu0 0.0
      %5787 = vmatpush1.msra.mxu0 0.0
      %5788 = vmatprep.subr.mxu0 0.0
      %5789 = vmatpush1.msra.mxu0 0.0
      %5790 = vmatprep.subr.mxu0 0.0
      %5791 = vmatpush1.msra.mxu0 0.0
      %5792 = vmatprep.subr.mxu0 0.0
      %5793 = vmatpush1.msra.mxu0 %v5708
      %5794 = vmatprep.subr.mxu0 0.0
      %5795 = vmatpush2.msra.mxu0 0.0
      %5796 = vmatprep.subr.mxu0 0.0
      %5797 = vmatpush2.msra.mxu0 0.0
      %5798 = vmatprep.subr.mxu0 0.0
      %5799 = vmatpush2.msra.mxu0 0.0
      %5800 = vmatprep.subr.mxu0 0.0
      %5801 = vmatpush2.msra.mxu0 0.0
      %5802 = vmatprep.subr.mxu0 0.0
      %5803 = vmatpush2.msra.mxu0 0.0
      %5804 = vmatprep.subr.mxu0 0.0
      %5805 = vmatpush2.msra.mxu0 0.0
      %5806 = vmatprep.subr.mxu0 0.0
      %5807 = vmatpush2.msra.mxu0 0.0
      %5808 = vmatprep.subr.mxu0 0.0
      %5809 = vmatpush2.msra.mxu0 0.0
      %5810 = vmatprep.subr.mxu0 0.0
      %5811 = vmatpush2.msra.mxu0 0.0
      %5812 = vmatprep.subr.mxu0 0.0
      %5813 = vmatpush2.msra.mxu0 0.0
      %5814 = vmatprep.subr.mxu0 0.0
      %5815 = vmatpush2.msra.mxu0 0.0
      %5816 = vmatprep.subr.mxu0 0.0
      %5817 = vmatpush2.msra.mxu0 0.0
      %5818 = vmatprep.subr.mxu0 0.0
      %5819 = vmatpush2.msra.mxu0 0.0
      %5820 = vmatprep.subr.mxu0 0.0
      %5821 = vmatpush2.msra.mxu0 0.0
      %5822 = vmatprep.subr.mxu0 0.0
      %5823 = vmatpush2.msra.mxu0 0.0
      %5824 = vmatprep.subr.mxu0 0.0
      %5825 = vmatpush2.msra.mxu0 0.0
      %5826 = vmatprep.mubr.f32.mxu0 0.0
      %5827 = vmatmul.mubr.f32.gmra.mxu0 %v5715
      %v5828 = vpop.f32.mrf.mxu0
      %v5829 = vadd.f32 %v5713, %v5828
      %v5830 = vpop.f32.mrf.mxu0
      %5831 = vmatprep.mubr.f32.mxu0 0.0
      %5832 = vmatmul.mubr.f32.gmra.mxu0 %v5718
      %v5833 = vpop.f32.mrf.mxu0
      %v5834 = vadd.f32 %v5713, %v5833
      %v5835 = vpop.f32.mrf.mxu0
      %5836 = vmatprep.mubr.f32.mxu0 0.0
      %5837 = vmatmul.mubr.f32.gmra.mxu0 %v5721
      %v5838 = vpop.f32.mrf.mxu0
      %v5839 = vadd.f32 %v5713, %v5838
      %v5840 = vpop.f32.mrf.mxu0
      %5841 = vmatprep.mubr.f32.mxu0 0.0
      %5842 = vmatmul.mubr.f32.gmra.mxu0 %v5724
      %v5843 = vpop.f32.mrf.mxu0
      %v5844 = vadd.f32 %v5713, %v5843
      %v5845 = vpop.f32.mrf.mxu0
      %5846 = vmatprep.mubr.f32.mxu0 0.0
      %5847 = vmatmul.mubr.f32.gmra.mxu0 %v5727
      %v5848 = vpop.f32.mrf.mxu0
      %v5849 = vadd.f32 %v5713, %v5848
      %v5850 = vpop.f32.mrf.mxu0
      %5851 = vmatprep.mubr.f32.mxu0 0.0
      %5852 = vmatmul.mubr.f32.gmra.mxu0 %v5730
      %v5853 = vpop.f32.mrf.mxu0
      %v5854 = vadd.f32 %v5713, %v5853
      %v5855 = vpop.f32.mrf.mxu0
      %5856 = vmatprep.mubr.f32.mxu0 0.0
      %5857 = vmatmul.mubr.f32.gmra.mxu0 %v5733
      %v5858 = vpop.f32.mrf.mxu0
      %v5859 = vadd.f32 %v5713, %v5858
      %v5860 = vpop.f32.mrf.mxu0
      %5861 = vmatprep.mubr.f32.mxu0 0.0
      %5862 = vmatmul.mubr.f32.gmra.mxu0 %v5736
      %v5863 = vpop.f32.mrf.mxu0
      %v5864 = vadd.f32 %v5713, %v5863
      %v5865 = vpop.f32.mrf.mxu0
      %5866 = vmatprep.mubr.f32.mxu0 0.0
      %5867 = vmatmul.mubr.f32.gmra.mxu0 %v5739
      %v5868 = vpop.f32.mrf.mxu0
      %v5869 = vadd.f32 %v5713, %v5868
      %v5870 = vpop.f32.mrf.mxu0
      %5871 = vmatprep.mubr.f32.mxu0 0.0
      %5872 = vmatmul.mubr.f32.gmra.mxu0 %v5742
      %v5873 = vpop.f32.mrf.mxu0
      %v5874 = vadd.f32 %v5713, %v5873
      %v5875 = vpop.f32.mrf.mxu0
      %5876 = vmatprep.mubr.f32.mxu0 0.0
      %5877 = vmatmul.mubr.f32.gmra.mxu0 %v5745
      %v5878 = vpop.f32.mrf.mxu0
      %v5879 = vadd.f32 %v5713, %v5878
      %v5880 = vpop.f32.mrf.mxu0
      %5881 = vmatprep.mubr.f32.mxu0 0.0
      %5882 = vmatmul.mubr.f32.gmra.mxu0 %v5748
      %v5883 = vpop.f32.mrf.mxu0
      %v5884 = vadd.f32 %v5713, %v5883
      %v5885 = vpop.f32.mrf.mxu0
      %5886 = vmatprep.mubr.f32.mxu0 0.0
      %5887 = vmatmul.mubr.f32.gmra.mxu0 %v5751
      %v5888 = vpop.f32.mrf.mxu0
      %v5889 = vadd.f32 %v5713, %v5888
      %v5890 = vpop.f32.mrf.mxu0
      %5891 = vmatprep.mubr.f32.mxu0 0.0
      %5892 = vmatmul.mubr.f32.gmra.mxu0 %v5754
      %v5893 = vpop.f32.mrf.mxu0
      %v5894 = vadd.f32 %v5713, %v5893
      %v5895 = vpop.f32.mrf.mxu0
      %5896 = vmatprep.mubr.f32.mxu0 0.0
      %5897 = vmatmul.mubr.f32.gmra.mxu0 %v5757
      %v5898 = vpop.f32.mrf.mxu0
      %v5899 = vadd.f32 %v5713, %v5898
      %v5900 = vpop.f32.mrf.mxu0
      %5901 = vmatprep.mubr.f32.mxu0 0.0
      %5902 = vmatmul.mubr.f32.gmra.mxu0 %v5760
      %v5903 = vpop.f32.mrf.mxu0
      %v5904 = vadd.f32 %v5713, %v5903
      %v5905 = vpop.f32.mrf.mxu0
      %5906 = vdwg.mxu0
      %vm5907 = vcmask 23552
      %v5908 = vsel %vm5907, %v5829, -inf
      %5909 = vmax.xlane.f32.xlu0 %v5908
      %v5910 = vpop.xlane.xlu0 %5909
      %v5911 = vsel %vm5907, %v5834, -inf
      %5912 = vmax.xlane.f32.xlu0 %v5911
      %v5913 = vpop.xlane.xlu0 %5912
      %v5914 = vsel %vm5907, %v5839, -inf
      %5915 = vmax.xlane.f32.xlu0 %v5914
      %v5916 = vpop.xlane.xlu0 %5915
      %v5917 = vsel %vm5907, %v5844, -inf
      %5918 = vmax.xlane.f32.xlu0 %v5917
      %v5919 = vpop.xlane.xlu0 %5918
      %v5920 = vsel %vm5907, %v5849, -inf
      %5921 = vmax.xlane.f32.xlu0 %v5920
      %v5922 = vpop.xlane.xlu0 %5921
      %v5923 = vsel %vm5907, %v5854, -inf
      %5924 = vmax.xlane.f32.xlu0 %v5923
      %v5925 = vpop.xlane.xlu0 %5924
      %v5926 = vsel %vm5907, %v5859, -inf
      %5927 = vmax.xlane.f32.xlu0 %v5926
      %v5928 = vpop.xlane.xlu0 %5927
      %v5929 = vsel %vm5907, %v5864, -inf
      %5930 = vmax.xlane.f32.xlu0 %v5929
      %v5931 = vpop.xlane.xlu0 %5930
      %v5932 = vsel %vm5907, %v5869, -inf
      %5933 = vmax.xlane.f32.xlu0 %v5932
      %v5934 = vpop.xlane.xlu0 %5933
      %v5935 = vsel %vm5907, %v5874, -inf
      %5936 = vmax.xlane.f32.xlu0 %v5935
      %v5937 = vpop.xlane.xlu0 %5936
      %v5938 = vsel %vm5907, %v5879, -inf
      %5939 = vmax.xlane.f32.xlu0 %v5938
      %v5940 = vpop.xlane.xlu0 %5939
      %v5941 = vsel %vm5907, %v5884, -inf
      %5942 = vmax.xlane.f32.xlu0 %v5941
      %v5943 = vpop.xlane.xlu0 %5942
      %v5944 = vsel %vm5907, %v5889, -inf
      %5945 = vmax.xlane.f32.xlu0 %v5944
      %v5946 = vpop.xlane.xlu0 %5945
      %v5947 = vsel %vm5907, %v5894, -inf
      %5948 = vmax.xlane.f32.xlu0 %v5947
      %v5949 = vpop.xlane.xlu0 %5948
      %v5950 = vsel %vm5907, %v5899, -inf
      %5951 = vmax.xlane.f32.xlu0 %v5950
      %v5952 = vpop.xlane.xlu0 %5951
      %v5953 = vsel %vm5907, %v5904, -inf
      %5954 = vmax.xlane.f32.xlu0 %v5953
      %v5955 = vpop.xlane.xlu0 %5954
      %v5956 = vsub.f32 %v5829, %v5910
      %v5957 = vsub.f32 %v5834, %v5913
      %v5958 = vsub.f32 %v5839, %v5916
      %v5959 = vsub.f32 %v5844, %v5919
      %v5960 = vsub.f32 %v5849, %v5922
      %v5961 = vsub.f32 %v5854, %v5925
      %v5962 = vsub.f32 %v5859, %v5928
      %v5963 = vsub.f32 %v5864, %v5931
      %v5964 = vsub.f32 %v5869, %v5934
      %v5965 = vsub.f32 %v5874, %v5937
      %v5966 = vsub.f32 %v5879, %v5940
      %v5967 = vsub.f32 %v5884, %v5943
      %v5968 = vsub.f32 %v5889, %v5946
      %v5969 = vsub.f32 %v5894, %v5949
      %v5970 = vsub.f32 %v5899, %v5952
      %v5971 = vsub.f32 %v5904, %v5955
      %v5972 = vmul.f32 %v5956, 1.442695
      %v5973 = vpow.pop %v5972
      %v5974 = vmul.f32 %v5957, 1.442695
      %v5975 = vpow.pop %v5974
      %v5976 = vmul.f32 %v5958, 1.442695
      %v5977 = vpow.pop %v5976
      %v5978 = vmul.f32 %v5959, 1.442695
      %v5979 = vpow.pop %v5978
      %v5980 = vmul.f32 %v5960, 1.442695
      %v5981 = vpow.pop %v5980
      %v5982 = vmul.f32 %v5961, 1.442695
      %v5983 = vpow.pop %v5982
      %v5984 = vmul.f32 %v5962, 1.442695
      %v5985 = vpow.pop %v5984
      %v5986 = vmul.f32 %v5963, 1.442695
      %v5987 = vpow.pop %v5986
      %v5988 = vmul.f32 %v5964, 1.442695
      %v5989 = vpow.pop %v5988
      %v5990 = vmul.f32 %v5965, 1.442695
      %v5991 = vpow.pop %v5990
      %v5992 = vmul.f32 %v5966, 1.442695
      %v5993 = vpow.pop %v5992
      %v5994 = vmul.f32 %v5967, 1.442695
      %v5995 = vpow.pop %v5994
      %v5996 = vmul.f32 %v5968, 1.442695
      %v5997 = vpow.pop %v5996
      %v5998 = vmul.f32 %v5969, 1.442695
      %v5999 = vpow.pop %v5998
      %v6000 = vmul.f32 %v5970, 1.442695
      %v6001 = vpow.pop %v6000
      %v6002 = vmul.f32 %v5971, 1.442695
      %v6003 = vpow.pop %v6002
      %v6004 = vsel %vm5907, %v5973, 0.0
      %6005 = vadd.xlane.f32.xlu0 %v6004
      %v6006 = vpop.xlane.xlu0 %6005
      %v6007 = vsel %vm5907, %v5975, 0.0
      %6008 = vadd.xlane.f32.xlu0 %v6007
      %v6009 = vpop.xlane.xlu0 %6008
      %v6010 = vsel %vm5907, %v5977, 0.0
      %6011 = vadd.xlane.f32.xlu0 %v6010
      %v6012 = vpop.xlane.xlu0 %6011
      %v6013 = vsel %vm5907, %v5979, 0.0
      %6014 = vadd.xlane.f32.xlu0 %v6013
      %v6015 = vpop.xlane.xlu0 %6014
      %v6016 = vsel %vm5907, %v5981, 0.0
      %6017 = vadd.xlane.f32.xlu0 %v6016
      %v6018 = vpop.xlane.xlu0 %6017
      %v6019 = vsel %vm5907, %v5983, 0.0
      %6020 = vadd.xlane.f32.xlu0 %v6019
      %v6021 = vpop.xlane.xlu0 %6020
      %v6022 = vsel %vm5907, %v5985, 0.0
      %6023 = vadd.xlane.f32.xlu0 %v6022
      %v6024 = vpop.xlane.xlu0 %6023
      %v6025 = vsel %vm5907, %v5987, 0.0
      %6026 = vadd.xlane.f32.xlu0 %v6025
      %v6027 = vpop.xlane.xlu0 %6026
      %v6028 = vsel %vm5907, %v5989, 0.0
      %6029 = vadd.xlane.f32.xlu0 %v6028
      %v6030 = vpop.xlane.xlu0 %6029
      %v6031 = vsel %vm5907, %v5991, 0.0
      %6032 = vadd.xlane.f32.xlu0 %v6031
      %v6033 = vpop.xlane.xlu0 %6032
      %v6034 = vsel %vm5907, %v5993, 0.0
      %6035 = vadd.xlane.f32.xlu0 %v6034
      %v6036 = vpop.xlane.xlu0 %6035
      %v6037 = vsel %vm5907, %v5995, 0.0
      %6038 = vadd.xlane.f32.xlu0 %v6037
      %v6039 = vpop.xlane.xlu0 %6038
      %v6040 = vsel %vm5907, %v5997, 0.0
      %6041 = vadd.xlane.f32.xlu0 %v6040
      %v6042 = vpop.xlane.xlu0 %6041
      %v6043 = vsel %vm5907, %v5999, 0.0
      %6044 = vadd.xlane.f32.xlu0 %v6043
      %v6045 = vpop.xlane.xlu0 %6044
      %v6046 = vsel %vm5907, %v6001, 0.0
      %6047 = vadd.xlane.f32.xlu0 %v6046
      %v6048 = vpop.xlane.xlu0 %6047
      %v6049 = vsel %vm5907, %v6003, 0.0
      %6050 = vadd.xlane.f32.xlu0 %v6049
      %v6051 = vpop.xlane.xlu0 %6050
      %v6052 = vlog2.pop %v6006
      %v6053 = vmul.f32 %v6052, 0.6931472
      %v6054 = vlog2.pop %v6009
      %v6055 = vmul.f32 %v6054, 0.6931472
      %v6056 = vlog2.pop %v6012
      %v6057 = vmul.f32 %v6056, 0.6931472
      %v6058 = vlog2.pop %v6015
      %v6059 = vmul.f32 %v6058, 0.6931472
      %v6060 = vlog2.pop %v6018
      %v6061 = vmul.f32 %v6060, 0.6931472
      %v6062 = vlog2.pop %v6021
      %v6063 = vmul.f32 %v6062, 0.6931472
      %v6064 = vlog2.pop %v6024
      %v6065 = vmul.f32 %v6064, 0.6931472
      %v6066 = vlog2.pop %v6027
      %v6067 = vmul.f32 %v6066, 0.6931472
      %v6068 = vlog2.pop %v6030
      %v6069 = vmul.f32 %v6068, 0.6931472
      %v6070 = vlog2.pop %v6033
      %v6071 = vmul.f32 %v6070, 0.6931472
      %v6072 = vlog2.pop %v6036
      %v6073 = vmul.f32 %v6072, 0.6931472
      %v6074 = vlog2.pop %v6039
      %v6075 = vmul.f32 %v6074, 0.6931472
      %v6076 = vlog2.pop %v6042
      %v6077 = vmul.f32 %v6076, 0.6931472
      %v6078 = vlog2.pop %v6045
      %v6079 = vmul.f32 %v6078, 0.6931472
      %v6080 = vlog2.pop %v6048
      %v6081 = vmul.f32 %v6080, 0.6931472
      %v6082 = vlog2.pop %v6051
      %v6083 = vmul.f32 %v6082, 0.6931472
      %v6084 = vadd.f32 %v5910, %v6053
      %v6085 = vadd.f32 %v5913, %v6055
      %v6086 = vadd.f32 %v5916, %v6057
      %v6087 = vadd.f32 %v5919, %v6059
      %v6088 = vadd.f32 %v5922, %v6061
      %v6089 = vadd.f32 %v5925, %v6063
      %v6090 = vadd.f32 %v5928, %v6065
      %v6091 = vadd.f32 %v5931, %v6067
      %v6092 = vadd.f32 %v5934, %v6069
      %v6093 = vadd.f32 %v5937, %v6071
      %v6094 = vadd.f32 %v5940, %v6073
      %v6095 = vadd.f32 %v5943, %v6075
      %v6096 = vadd.f32 %v5946, %v6077
      %v6097 = vadd.f32 %v5949, %v6079
      %v6098 = vadd.f32 %v5952, %v6081
      %v6099 = vadd.f32 %v5955, %v6083
      %v6100 = vsub.f32 %v5829, %v6084
      %v6101 = vsub.f32 %v5834, %v6085
      %v6102 = vsub.f32 %v5839, %v6086
      %v6103 = vsub.f32 %v5844, %v6087
      %v6104 = vsub.f32 %v5849, %v6088
      %v6105 = vsub.f32 %v5854, %v6089
      %v6106 = vsub.f32 %v5859, %v6090
      %v6107 = vsub.f32 %v5864, %v6091
      %v6108 = vsub.f32 %v5869, %v6092
      %v6109 = vsub.f32 %v5874, %v6093
      %v6110 = vsub.f32 %v5879, %v6094
      %v6111 = vsub.f32 %v5884, %v6095
      %v6112 = vsub.f32 %v5889, %v6096
      %v6113 = vsub.f32 %v5894, %v6097
      %v6114 = vsub.f32 %v5899, %v6098
      %v6115 = vsub.f32 %v5904, %v6099
      %6116 = vst.msk [vmem:[%s221] sm:$0xff] %vm5907, %v6100
      %6117 = vst.msk [vmem:[%s221 + $0x8] sm:$0xff] %vm5907, %v6101
      %6118 = vst.msk [vmem:[%s221 + $0x10] sm:$0xff] %vm5907, %v6102
      %6119 = vst.msk [vmem:[%s221 + $0x18] sm:$0xff] %vm5907, %v6103
      %6120 = vst.msk [vmem:[%s221 + $0x20] sm:$0xff] %vm5907, %v6104
      %6121 = vst.msk [vmem:[%s221 + $0x28] sm:$0xff] %vm5907, %v6105
      %6122 = vst.msk [vmem:[%s221 + $0x30] sm:$0xff] %vm5907, %v6106
      %6123 = vst.msk [vmem:[%s221 + $0x38] sm:$0xff] %vm5907, %v6107
      %6124 = vst.msk [vmem:[%s221 + $0x40] sm:$0xff] %vm5907, %v6108
      %6125 = vst.msk [vmem:[%s221 + $0x48] sm:$0xff] %vm5907, %v6109
      %6126 = vst.msk [vmem:[%s221 + $0x50] sm:$0xff] %vm5907, %v6110
      %6127 = vst.msk [vmem:[%s221 + $0x58] sm:$0xff] %vm5907, %v6111
      %6128 = vst.msk [vmem:[%s221 + $0x60] sm:$0xff] %vm5907, %v6112
      %6129 = vst.msk [vmem:[%s221 + $0x68] sm:$0xff] %vm5907, %v6113
      %6130 = vst.msk [vmem:[%s221 + $0x70] sm:$0xff] %vm5907, %v6114
      %6131 = vst.msk [vmem:[%s221 + $0x78] sm:$0xff] %vm5907, %v6115
      %s6132 = smul.u32 16, %s15
      %p6133 = scmp.lt.s32.totalorder %s6132, 63
      %s6134 = scalar_select %p6133, %s6132, 63
      %s6135 = smul.addr %s6134, 8
      %s6136 = scalar_lea.vmem %s4, %s6135
      // Predicated region
      $region37: #{social_stgcn_forward.1} parent=35 // pred_check
        %p6137 = pneg %p127
      $region38: #{social_stgcn_forward.1} parent=35 // pred_check_branch
        %6139 = sbr.rel (%p6137) target = $region40
      $region39: #{social_stgcn_forward.1} parent=35 // pred_region
        %s6140 = smul.u32 16, %s15
      $region40: #{social_stgcn_forward.1} parent=35 // pred_fallthru
        _
    $region36: #{social_stgcn_forward.1} parent=5 // pred_fallthru
      _
    %p6141 = scmp.le.s32.totalorder 2, %s10
    // Predicated region
    $region41: #{social_stgcn_forward.1} parent=5 // pred_check
      %p6142 = pneg %p6141
    $region42: #{social_stgcn_forward.1} parent=5 // pred_check_branch
      %6144 = sbr.rel (%p6142) target = $region44
    $region43: #{social_stgcn_forward.1} parent=5 // pred_region
      %s6145 = ssub.s32 %s10, 2
      // Predicated region
      $region45: #{social_stgcn_forward.1} parent=43 // pred_check
        %p6146 = pneg %p133
      $region46: #{social_stgcn_forward.1} parent=43 // pred_check_branch
        %6148 = sbr.rel (%p6146) target = $region48
      $region47: #{social_stgcn_forward.1} parent=43 // pred_region
        %s6149 = smul.u32 16, %s16
        %p6150 = scmp.lt.s32.totalorder %s6149, 63
        %s6151 = scalar_select %p6150, %s6149, 63
        %s6152 = smul.addr %s6151, 8
        %s6153 = scalar_lea.vmem %s4, %s6152
      $region48: #{social_stgcn_forward.1} parent=43 // pred_fallthru
        _
    $region44: #{social_stgcn_forward.1} parent=5 // pred_fallthru
      _
  $region6: #{social_stgcn_forward.1} parent=0 // loop_footer
    %s14 = sadd.s32 1, %s10
  $region7: #{social_stgcn_forward.1} parent=0 // loop_footer_branch
    %9 = sbr.rel target = $region3
  $region8: #{social_stgcn_forward.1} parent=0 // loop_exit
    _

</llo_original>
